<compile_context>
chip_gen: v6e
topology: v6e:2x2x1
jax: 0.10.0
libtpu: 0.0.40
codegen_flags: <defaults>
</compile_context>

<pallas_src>
import functools

import jax
import jax.numpy as jnp
from jax import lax
from jax.experimental import pallas as pl
from jax.experimental.pallas import tpu as pltpu

EPS = 1e-5
LANE = 128
_VMEM_LIMIT = 48 * 1024 * 1024  # headroom under v7x's 64 MiB physical VMEM


def _round_up(x, m):
    return (x + m - 1) // m * m


# ---------------------------------------------------------------------------
# Pass A: conv3x3 per image row (9 accumulating MXU dots) + BN partial sums
# ---------------------------------------------------------------------------
def _conv_stats_kernel(top_ref, mid_ref, bot_ref, w_ref, conv_ref, sum_ref, sq_ref):
    n, _, wp2, c_in = top_ref.shape
    w = wp2 - 2
    c_out = w_ref.shape[-1]
    m = n * w

    acc = jnp.zeros((m, c_out), jnp.float32)
    for di, row_ref in enumerate((top_ref, mid_ref, bot_ref)):
        row = row_ref[...]                                    # (N, 1, W+2, C) bf16
        for dj in range(3):
            tap = row[:, :, dj:dj + w, :].reshape(m, c_in)     # (N*W, C) bf16
            acc = acc + lax.dot_general(
                tap, w_ref[di * 3 + dj],
                dimension_numbers=(((1,), (0,)), ((), ())),
                preferred_element_type=jnp.float32)

    # bf16 intermediate (halves the HBM round trip); stats come from the f32 acc.
    conv_ref[...] = acc.reshape(conv_ref.shape).astype(conv_ref.dtype)

    if m % 8 == 0:
        # sublane-partial sums: reduce only over the leading axis (VPU adds),
        # finish the 8-way reduction in the tiny JAX reduce outside.
        g = acc.reshape(m // 8, 8, c_out)
        s = jnp.sum(g, axis=0)
        s2 = jnp.sum(g * g, axis=0)
    else:  # robustness fallback (not hit at the test shapes)
        s = jnp.concatenate(
            [jnp.sum(acc, axis=0, keepdims=True), jnp.zeros((7, c_out), jnp.float32)],
            axis=0)
        s2 = jnp.concatenate(
            [jnp.sum(acc * acc, axis=0, keepdims=True),
             jnp.zeros((7, c_out), jnp.float32)], axis=0)
    sum_ref[...] = s.reshape(sum_ref.shape)
    sq_ref[...] = s2.reshape(sq_ref.shape)


def _conv_stats(x_sp, w9):
    """x_sp: (N, H+2, W+2, Cp) bf16 spatially padded; w9: (9, Cp, Cp) bf16."""
    N, Hp2, Wp2, C = x_sp.shape
    H, W = Hp2 - 2, Wp2 - 2
    C_out = w9.shape[-1]
    return pl.pallas_call(
        _conv_stats_kernel,
        out_shape=(
            jax.ShapeDtypeStruct((N, H, W, C_out), jnp.bfloat16),  # conv (bf16)
            jax.ShapeDtypeStruct((H, 8, C_out), jnp.float32),      # partial sums
            jax.ShapeDtypeStruct((H, 8, C_out), jnp.float32),      # partial sum-sq
        ),
        grid_spec=pltpu.PrefetchScalarGridSpec(
            num_scalar_prefetch=0,
            grid=(H,),
            in_specs=[
                # three padded rows of the SAME array -> halo-free 3x3 window
                pl.BlockSpec((N, 1, Wp2, C), lambda h: (0, h, 0, 0)),
                pl.BlockSpec((N, 1, Wp2, C), lambda h: (0, h + 1, 0, 0)),
                pl.BlockSpec((N, 1, Wp2, C), lambda h: (0, h + 2, 0, 0)),
                pl.BlockSpec((9, C, C_out), lambda h: (0, 0, 0)),   # resident weight
            ],
            out_specs=(
                pl.BlockSpec((N, 1, W, C_out), lambda h: (0, h, 0, 0)),
                pl.BlockSpec((1, 8, C_out), lambda h: (h, 0, 0)),
                pl.BlockSpec((1, 8, C_out), lambda h: (h, 0, 0)),
            ),
        ),
        compiler_params=pltpu.CompilerParams(
            dimension_semantics=("parallel",),
            vmem_limit_bytes=_VMEM_LIMIT),
    )(x_sp, x_sp, x_sp, w9)


# ---------------------------------------------------------------------------
# Pass B: folded BN scale/shift (bias included) + (1x1 conv with +I folded) + ReLU
# ---------------------------------------------------------------------------
def _finalize_kernel(conv_ref, x_ref, wds_ref, scale_ref, shift_ref, out_ref):
    n, th, w, c_in = x_ref.shape
    c_out = conv_ref.shape[-1]
    m = n * th * w

    xb = x_ref[...].reshape(m, c_in)                           # bf16
    ident = lax.dot_general(xb, wds_ref[...],                  # wds' = wds + I
                            dimension_numbers=(((1,), (0,)), ((), ())),
                            preferred_element_type=jnp.float32)
    cv = conv_ref[...].reshape(m, c_out).astype(jnp.float32)
    y = cv * scale_ref[...] + shift_ref[...] + ident           # shift' = shift + bds
    out_ref[...] = jnp.maximum(y, 0.0).reshape(out_ref.shape).astype(out_ref.dtype)


def _bn_ident_relu(conv, x, wds_pi, scale, shift, out_dtype, th):
    N, H, W, C_out = conv.shape
    C_in = x.shape[-1]
    return pl.pallas_call(
        _finalize_kernel,
        out_shape=jax.ShapeDtypeStruct((N, H, W, C_out), out_dtype),
        grid_spec=pltpu.PrefetchScalarGridSpec(
            num_scalar_prefetch=0,
            grid=(H // th,),
            in_specs=[
                pl.BlockSpec((N, th, W, C_out), lambda t: (0, t, 0, 0)),  # conv bf16
                pl.BlockSpec((N, th, W, C_in), lambda t: (0, t, 0, 0)),   # x bf16
                pl.BlockSpec((C_in, C_out), lambda t: (0, 0)),            # wds + I
                pl.BlockSpec((1, C_out), lambda t: (0, 0)),               # bn scale
                pl.BlockSpec((1, C_out), lambda t: (0, 0)),               # bn shift'
            ],
            out_specs=pl.BlockSpec((N, th, W, C_out), lambda t: (0, t, 0, 0)),
        ),
        compiler_params=pltpu.CompilerParams(
            dimension_semantics=("parallel",),
            vmem_limit_bytes=_VMEM_LIMIT),
    )(conv, x, wds_pi, scale, shift)


def _pick_th(H, N, W, C):
    """Largest divisor of H keeping the pass-B block comfortably inside VMEM."""
    budget_elems = 1 << 19   # ~0.5M elems/operand block -> a few MB double-buffered
    th = 1
    for cand in range(1, H + 1):
        if H % cand == 0 and N * cand * W * C <= budget_elems:
            th = cand
    return th


# ---------------------------------------------------------------------------
# One stage: conv3x3 -> BN(batch stats) -> + (1x1 conv + bias + x) -> ReLU
# ---------------------------------------------------------------------------
def _stage(x, w9, wds_pi, bds, gamma, beta, out_dtype):
    N, H, W, C = x.shape
    C_out = w9.shape[-1]
    R = N * H * W

    x_sp = jnp.pad(x, ((0, 0), (1, 1), (1, 1), (0, 0)))        # zero-pad only
    conv, sums, sqs = _conv_stats(x_sp, w9)

    # global BN statistics (tiny reduction, plain JAX); clamp guards E[x^2]-mean^2.
    s_tot = jnp.sum(sums, axis=(0, 1))
    sq_tot = jnp.sum(sqs, axis=(0, 1))
    mean = s_tot / R
    var = jnp.maximum(sq_tot / R - mean * mean, 0.0)
    inv = lax.rsqrt(var + EPS)
    scale = (gamma * inv).reshape(1, C_out)
    shift = (beta - mean * gamma * inv + bds).reshape(1, C_out)   # bias folded in

    th = _pick_th(H, N, W, C_out)
    return _bn_ident_relu(conv, x, wds_pi, scale, shift, out_dtype, th)


@jax.jit
def rer_basic_block_v2(x_nchw, params):
    C = x_nchw.shape[1]
    cp = params["w1"].shape[-1]                                 # padded channel count

    x = jnp.transpose(x_nchw, (0, 2, 3, 1))                     # NCHW -> NHWC
    if cp > C:
        x = jnp.pad(x, ((0, 0), (0, 0), (0, 0), (0, cp - C)))
    x = x.astype(jnp.bfloat16)

    out1 = _stage(x, params["w1"], params["wds1"], params["bds1"],
                  params["g1"], params["b1"], jnp.bfloat16)
    out2 = _stage(out1, params["w2"], params["wds2"], params["bds2"],
                  params["g2"], params["b2"], jnp.float32)

    out2 = out2[..., :C]
    return jnp.transpose(out2, (0, 3, 1, 2))                    # NHWC -> NCHW


# ---------------------------------------------------------------------------
# Parameter preparation (channel padding to 128 lanes + constant folding)
# ---------------------------------------------------------------------------
def prepare_params(raw, inplanes, planes):
    assert inplanes == planes, "downsample=None path requires inplanes == planes"
    cp = _round_up(max(inplanes, planes, 1), LANE)

    def pad_w3x3(w_hwio):
        w = jnp.zeros((3, 3, cp, cp), jnp.float32)
        w = w.at[:, :, :inplanes, :planes].set(w_hwio)
        return w.reshape(9, cp, cp).astype(jnp.bfloat16)

    def pad_1x1_plus_identity(wds):
        w = jnp.zeros((cp, cp), jnp.float32)
        w = w.at[:inplanes, :planes].set(wds)
        w = w + jnp.eye(cp, dtype=jnp.float32)        # fold the "+ x" residual
        return w.astype(jnp.bfloat16)

    def pad_vec(v):
        out = jnp.zeros((cp,), jnp.float32)           # padded gamma/beta/bias stay 0
        return out.at[:planes].set(v.reshape(-1))

    return {
        "w1": pad_w3x3(raw["w1"]), "w2": pad_w3x3(raw["w2"]),
        "wds1": pad_1x1_plus_identity(raw["wds1"]),
        "wds2": pad_1x1_plus_identity(raw["wds2"]),
        "bds1": pad_vec(raw["bds1"]), "bds2": pad_vec(raw["bds2"]),
        "g1": pad_vec(raw["g1"]), "b1": pad_vec(raw["b1"]),
        "g2": pad_vec(raw["g2"]), "b2": pad_vec(raw["b2"]),
    }


def make_params(key, inplanes, planes):
    """Raw parameters mirroring the PyTorch __init__ (downsample weight=1, bias=0;
    BatchNorm weight=1, bias=0; conv3x3 weights random, stored HWIO f32)."""
    k1, k2 = jax.random.split(key)
    return {
        "w1": 0.1 * jax.random.normal(k1, (3, 3, inplanes, planes), jnp.float32),
        "w2": 0.1 * jax.random.normal(k2, (3, 3, planes, planes), jnp.float32),
        "wds1": jnp.ones((inplanes, planes), jnp.float32),
        "bds1": jnp.zeros((planes,), jnp.float32),
        "wds2": jnp.ones((planes, planes), jnp.float32),
        "bds2": jnp.zeros((planes,), jnp.float32),
        "g1": jnp.ones((planes,), jnp.float32),
        "b1": jnp.zeros((planes,), jnp.float32),
        "g2": jnp.ones((planes,), jnp.float32),
        "b2": jnp.zeros((planes,), jnp.float32),
    }


# ---------------------------------------------------------------------------
# Pure-JAX reference with the same precision policy (for correctness check)
# ---------------------------------------------------------------------------
def _reference(x_nchw, raw):
    x = jnp.transpose(x_nchw, (0, 2, 3, 1)).astype(jnp.bfloat16)

    def stage(a, w, wds, bds, g, b, out_dtype):
        conv = lax.conv_general_dilated(
            a, w.astype(jnp.bfloat16), (1, 1), ((1, 1), (1, 1)),
            dimension_numbers=("NHWC", "HWIO", "NHWC"),
            preferred_element_type=jnp.float32)
        mean = jnp.mean(conv, axis=(0, 1, 2), keepdims=True)
        var = jnp.mean(jnp.square(conv - mean), axis=(0, 1, 2), keepdims=True)
        bn = (conv - mean) * lax.rsqrt(var + EPS) * g.reshape(1, 1, 1, -1) \
            + b.reshape(1, 1, 1, -1)
        ident = jnp.einsum("nhwc,cd->nhwd", a, wds.astype(jnp.bfloat16),
                           preferred_element_type=jnp.float32)
        ident = ident + bds.reshape(1, 1, 1, -1) + a.astype(jnp.float32)
        return jnp.maximum(bn + ident, 0.0).astype(out_dtype)

    out1 = stage(x, raw["w1"], raw["wds1"], raw["bds1"], raw["g1"], raw["b1"],
                 jnp.bfloat16)
    out2 = stage(out1, raw["w2"], raw["wds2"], raw["bds2"], raw["g2"], raw["b2"],
                 jnp.float32)
    return jnp.transpose(out2, (0, 3, 1, 2))


if __name__ == "__main__":
    key = jax.random.PRNGKey(0)
    kx, kp = jax.random.split(key)

    # downsample=None path => inplanes == planes, stride == 1
    N, C, H, W = 2, 8, 16, 16
    x = jax.random.normal(kx, (N, C, H, W), jnp.float32)
    raw = make_params(kp, C, C)
    params = prepare_params(raw, C, C)

    out = rer_basic_block_v2(x, params)
    out = jax.block_until_ready(out)

    ref = _reference(x, raw)
    assert out.shape == ref.shape == (N, C, H, W)
    max_err = float(jnp.max(jnp.abs(out - ref)))
    # Loose bound absorbs the deliberate bf16 requantization of the conv
    # intermediate and the inter-stage activation; typical observed error << bound.
    assert jnp.allclose(out, ref, rtol=2e-2, atol=2e-1), max_err

    print("KERNEL_OK")
</pallas_src>

<mosaic_0001>
module attributes {stable_mosaic.version = 11 : i64} {
  func.func @_finalize_kernel(%arg0: i32, %arg1: memref<2x16x16x128xbf16, #tpu.memory_space<vmem>>, %arg2: memref<2x16x16x128xbf16, #tpu.memory_space<vmem>>, %arg3: memref<128x128xbf16, #tpu.memory_space<vmem>>, %arg4: memref<1x128xf32, #tpu.memory_space<vmem>>, %arg5: memref<1x128xf32, #tpu.memory_space<vmem>>, %arg6: memref<2x16x16x128xf32, #tpu.memory_space<vmem>>) attributes {dimension_semantics = [#tpu.dimension_semantics<parallel>], iteration_bounds = array<i64: 1>, scalar_prefetch = 0 : i64, scratch_operands = 0 : i64, tpu.core_type = #tpu.core_type<tc>, window_params = [{transform_indices = @transform_0, window_bounds = array<i64: 2, 16, 16, 128>}, {transform_indices = @transform_1, window_bounds = array<i64: 2, 16, 16, 128>}, {pipeline_mode = #tpu.pipeline_mode<synchronous>, transform_indices = @transform_2, window_bounds = array<i64: 128, 128>}, {pipeline_mode = #tpu.pipeline_mode<synchronous>, transform_indices = @transform_3, window_bounds = array<i64: 1, 128>}, {pipeline_mode = #tpu.pipeline_mode<synchronous>, transform_indices = @transform_4, window_bounds = array<i64: 1, 128>}, {transform_indices = @transform_5, window_bounds = array<i64: 2, 16, 16, 128>}]} {
    %c0 = arith.constant 0 : index
    %c0_0 = arith.constant 0 : index
    %c0_1 = arith.constant 0 : index
    %c0_2 = arith.constant 0 : index
    %0 = vector.load %arg2[%c0, %c0_0, %c0_1, %c0_2] : memref<2x16x16x128xbf16, #tpu.memory_space<vmem>>, vector<2x16x16x128xbf16>
    %1 = vector.shape_cast %0 : vector<2x16x16x128xbf16> to vector<512x128xbf16>
    %c0_3 = arith.constant 0 : index
    %c0_4 = arith.constant 0 : index
    %2 = vector.load %arg3[%c0_3, %c0_4] : memref<128x128xbf16, #tpu.memory_space<vmem>>, vector<128x128xbf16>
    %cst = arith.constant dense<0.000000e+00> : vector<512x128xf32>
    %3 = tpu.matmul %1, %2, %cst {dimension_numbers = #tpu.dot_dimension_numbers<[1], [0], [0], [1], [0, 0, 1, 1], [], []>} : vector<512x128xbf16>, vector<128x128xbf16>, vector<512x128xf32> -> vector<512x128xf32>
    %c0_5 = arith.constant 0 : index
    %c0_6 = arith.constant 0 : index
    %c0_7 = arith.constant 0 : index
    %c0_8 = arith.constant 0 : index
    %4 = vector.load %arg1[%c0_5, %c0_6, %c0_7, %c0_8] : memref<2x16x16x128xbf16, #tpu.memory_space<vmem>>, vector<2x16x16x128xbf16>
    %5 = vector.shape_cast %4 : vector<2x16x16x128xbf16> to vector<512x128xbf16>
    %6 = arith.extf %5 : vector<512x128xbf16> to vector<512x128xf32>
    %c0_9 = arith.constant 0 : index
    %c0_10 = arith.constant 0 : index
    %7 = vector.load %arg4[%c0_9, %c0_10] : memref<1x128xf32, #tpu.memory_space<vmem>>, vector<1x128xf32>
    %8 = vector.broadcast %7 : vector<1x128xf32> to vector<512x128xf32>
    %9 = arith.mulf %6, %8 : vector<512x128xf32>
    %c0_11 = arith.constant 0 : index
    %c0_12 = arith.constant 0 : index
    %10 = vector.load %arg5[%c0_11, %c0_12] : memref<1x128xf32, #tpu.memory_space<vmem>>, vector<1x128xf32>
    %11 = vector.broadcast %10 : vector<1x128xf32> to vector<512x128xf32>
    %12 = arith.addf %9, %11 : vector<512x128xf32>
    %13 = arith.addf %12, %3 : vector<512x128xf32>
    %cst_13 = arith.constant 0.000000e+00 : f32
    %14 = vector.broadcast %cst_13 : f32 to vector<512x128xf32>
    %15 = arith.maximumf %13, %14 : vector<512x128xf32>
    %16 = vector.shape_cast %15 : vector<512x128xf32> to vector<2x16x16x128xf32>
    %c0_14 = arith.constant 0 : index
    %c0_15 = arith.constant 0 : index
    %c0_16 = arith.constant 0 : index
    %c0_17 = arith.constant 0 : index
    %17 = vector.load %arg6[%c0_14, %c0_15, %c0_16, %c0_17] : memref<2x16x16x128xf32, #tpu.memory_space<vmem>>, vector<2x16x16x128xf32>
    tpu.vector_store %arg6[%c0_14, %c0_15, %c0_16, %c0_17], %16 {strides = array<i32>} : memref<2x16x16x128xf32, #tpu.memory_space<vmem>>, vector<2x16x16x128xf32>,
    return
  }
  func.func @transform_0(%arg0: i32) -> (i32, i32, i32, i32) {
    %c0_i32 = arith.constant 0 : i32
    %c0_i32_0 = arith.constant 0 : i32
    %c0_i32_1 = arith.constant 0 : i32
    %c0_i32_2 = arith.constant 0 : i32
    return %c0_i32, %arg0, %c0_i32_0, %c0_i32_1 : i32, i32, i32, i32
  }
  func.func @transform_1(%arg0: i32) -> (i32, i32, i32, i32) {
    %c0_i32 = arith.constant 0 : i32
    %c0_i32_0 = arith.constant 0 : i32
    %c0_i32_1 = arith.constant 0 : i32
    %c0_i32_2 = arith.constant 0 : i32
    return %c0_i32, %arg0, %c0_i32_0, %c0_i32_1 : i32, i32, i32, i32
  }
  func.func @transform_2(%arg0: i32) -> (i32, i32) {
    %c0_i32 = arith.constant 0 : i32
    %c0_i32_0 = arith.constant 0 : i32
    %c0_i32_1 = arith.constant 0 : i32
    return %c0_i32, %c0_i32_0 : i32, i32
  }
  func.func @transform_3(%arg0: i32) -> (i32, i32) {
    %c0_i32 = arith.constant 0 : i32
    %c0_i32_0 = arith.constant 0 : i32
    %c0_i32_1 = arith.constant 0 : i32
    return %c0_i32, %c0_i32_0 : i32, i32
  }
  func.func @transform_4(%arg0: i32) -> (i32, i32) {
    %c0_i32 = arith.constant 0 : i32
    %c0_i32_0 = arith.constant 0 : i32
    %c0_i32_1 = arith.constant 0 : i32
    return %c0_i32, %c0_i32_0 : i32, i32
  }
  func.func @transform_5(%arg0: i32) -> (i32, i32, i32, i32) {
    %c0_i32 = arith.constant 0 : i32
    %c0_i32_0 = arith.constant 0 : i32
    %c0_i32_1 = arith.constant 0 : i32
    %c0_i32_2 = arith.constant 0 : i32
    return %c0_i32, %arg0, %c0_i32_0, %c0_i32_1 : i32, i32, i32, i32
  }
}

module attributes {stable_mosaic.version = 11 : i64} {
  func.func @_conv_stats_kernel(%arg0: i32, %arg1: memref<2x1x18x128xbf16, #tpu.memory_space<vmem>>, %arg2: memref<2x1x18x128xbf16, #tpu.memory_space<vmem>>, %arg3: memref<2x1x18x128xbf16, #tpu.memory_space<vmem>>, %arg4: memref<9x128x128xbf16, #tpu.memory_space<vmem>>, %arg5: memref<2x1x16x128xbf16, #tpu.memory_space<vmem>>, %arg6: memref<1x8x128xf32, #tpu.memory_space<vmem>>, %arg7: memref<1x8x128xf32, #tpu.memory_space<vmem>>) attributes {dimension_semantics = [#tpu.dimension_semantics<parallel>], iteration_bounds = array<i64: 16>, scalar_prefetch = 0 : i64, scratch_operands = 0 : i64, tpu.core_type = #tpu.core_type<tc>, window_params = [{transform_indices = @transform_0, window_bounds = array<i64: 2, 1, 18, 128>}, {transform_indices = @transform_1, window_bounds = array<i64: 2, 1, 18, 128>}, {transform_indices = @transform_2, window_bounds = array<i64: 2, 1, 18, 128>}, {pipeline_mode = #tpu.pipeline_mode<synchronous>, transform_indices = @transform_3, window_bounds = array<i64: 9, 128, 128>}, {transform_indices = @transform_4, window_bounds = array<i64: 2, 1, 16, 128>}, {transform_indices = @transform_5, window_bounds = array<i64: 1, 8, 128>}, {transform_indices = @transform_6, window_bounds = array<i64: 1, 8, 128>}]} {
    %cst = arith.constant 0.000000e+00 : f32
    %0 = vector.broadcast %cst : f32 to vector<32x128xf32>
    %c0 = arith.constant 0 : index
    %c0_0 = arith.constant 0 : index
    %c0_1 = arith.constant 0 : index
    %c0_2 = arith.constant 0 : index
    %1 = vector.load %arg1[%c0, %c0_0, %c0_1, %c0_2] : memref<2x1x18x128xbf16, #tpu.memory_space<vmem>>, vector<2x1x18x128xbf16>
    %2 = vector.extract_strided_slice %1 {offsets = [0, 0, 0, 0], sizes = [2, 1, 16, 128], strides = [1, 1, 1, 1]} : vector<2x1x18x128xbf16> to vector<2x1x16x128xbf16>
    %3 = vector.shape_cast %2 : vector<2x1x16x128xbf16> to vector<32x128xbf16>
    %c0_3 = arith.constant 0 : index
    %c0_4 = arith.constant 0 : index
    %c0_5 = arith.constant 0 : index
    %4 = vector.load %arg4[%c0_3, %c0_4, %c0_5] : memref<9x128x128xbf16, #tpu.memory_space<vmem>>, vector<1x128x128xbf16>
    %5 = vector.shape_cast %4 : vector<1x128x128xbf16> to vector<128x128xbf16>
    %cst_6 = arith.constant dense<0.000000e+00> : vector<32x128xf32>
    %6 = tpu.matmul %3, %5, %cst_6 {dimension_numbers = #tpu.dot_dimension_numbers<[1], [0], [0], [1], [0, 0, 1, 1], [], []>} : vector<32x128xbf16>, vector<128x128xbf16>, vector<32x128xf32> -> vector<32x128xf32>
    %7 = arith.addf %0, %6 : vector<32x128xf32>
    %8 = vector.extract_strided_slice %1 {offsets = [0, 0, 1, 0], sizes = [2, 1, 16, 128], strides = [1, 1, 1, 1]} : vector<2x1x18x128xbf16> to vector<2x1x16x128xbf16>
    %9 = vector.shape_cast %8 : vector<2x1x16x128xbf16> to vector<32x128xbf16>
    %c1 = arith.constant 1 : index
    %c0_7 = arith.constant 0 : index
    %c0_8 = arith.constant 0 : index
    %10 = vector.load %arg4[%c1, %c0_7, %c0_8] : memref<9x128x128xbf16, #tpu.memory_space<vmem>>, vector<1x128x128xbf16>
    %11 = vector.shape_cast %10 : vector<1x128x128xbf16> to vector<128x128xbf16>
    %cst_9 = arith.constant dense<0.000000e+00> : vector<32x128xf32>
    %12 = tpu.matmul %9, %11, %cst_9 {dimension_numbers = #tpu.dot_dimension_numbers<[1], [0], [0], [1], [0, 0, 1, 1], [], []>} : vector<32x128xbf16>, vector<128x128xbf16>, vector<32x128xf32> -> vector<32x128xf32>
    %13 = arith.addf %7, %12 : vector<32x128xf32>
    %14 = vector.extract_strided_slice %1 {offsets = [0, 0, 2, 0], sizes = [2, 1, 16, 128], strides = [1, 1, 1, 1]} : vector<2x1x18x128xbf16> to vector<2x1x16x128xbf16>
    %15 = vector.shape_cast %14 : vector<2x1x16x128xbf16> to vector<32x128xbf16>
    %c2 = arith.constant 2 : index
    %c0_10 = arith.constant 0 : index
    %c0_11 = arith.constant 0 : index
    %16 = vector.load %arg4[%c2, %c0_10, %c0_11] : memref<9x128x128xbf16, #tpu.memory_space<vmem>>, vector<1x128x128xbf16>
    %17 = vector.shape_cast %16 : vector<1x128x128xbf16> to vector<128x128xbf16>
    %cst_12 = arith.constant dense<0.000000e+00> : vector<32x128xf32>
    %18 = tpu.matmul %15, %17, %cst_12 {dimension_numbers = #tpu.dot_dimension_numbers<[1], [0], [0], [1], [0, 0, 1, 1], [], []>} : vector<32x128xbf16>, vector<128x128xbf16>, vector<32x128xf32> -> vector<32x128xf32>
    %19 = arith.addf %13, %18 : vector<32x128xf32>
    %c0_13 = arith.constant 0 : index
    %c0_14 = arith.constant 0 : index
    %c0_15 = arith.constant 0 : index
    %c0_16 = arith.constant 0 : index
    %20 = vector.load %arg2[%c0_13, %c0_14, %c0_15, %c0_16] : memref<2x1x18x128xbf16, #tpu.memory_space<vmem>>, vector<2x1x18x128xbf16>
    %21 = vector.extract_strided_slice %20 {offsets = [0, 0, 0, 0], sizes = [2, 1, 16, 128], strides = [1, 1, 1, 1]} : vector<2x1x18x128xbf16> to vector<2x1x16x128xbf16>
    %22 = vector.shape_cast %21 : vector<2x1x16x128xbf16> to vector<32x128xbf16>
    %c3 = arith.constant 3 : index
    %c0_17 = arith.constant 0 : index
    %c0_18 = arith.constant 0 : index
    %23 = vector.load %arg4[%c3, %c0_17, %c0_18] : memref<9x128x128xbf16, #tpu.memory_space<vmem>>, vector<1x128x128xbf16>
    %24 = vector.shape_cast %23 : vector<1x128x128xbf16> to vector<128x128xbf16>
    %cst_19 = arith.constant dense<0.000000e+00> : vector<32x128xf32>
    %25 = tpu.matmul %22, %24, %cst_19 {dimension_numbers = #tpu.dot_dimension_numbers<[1], [0], [0], [1], [0, 0, 1, 1], [], []>} : vector<32x128xbf16>, vector<128x128xbf16>, vector<32x128xf32> -> vector<32x128xf32>
    %26 = arith.addf %19, %25 : vector<32x128xf32>
    %27 = vector.extract_strided_slice %20 {offsets = [0, 0, 1, 0], sizes = [2, 1, 16, 128], strides = [1, 1, 1, 1]} : vector<2x1x18x128xbf16> to vector<2x1x16x128xbf16>
    %28 = vector.shape_cast %27 : vector<2x1x16x128xbf16> to vector<32x128xbf16>
    %c4 = arith.constant 4 : index
    %c0_20 = arith.constant 0 : index
    %c0_21 = arith.constant 0 : index
    %29 = vector.load %arg4[%c4, %c0_20, %c0_21] : memref<9x128x128xbf16, #tpu.memory_space<vmem>>, vector<1x128x128xbf16>
    %30 = vector.shape_cast %29 : vector<1x128x128xbf16> to vector<128x128xbf16>
    %cst_22 = arith.constant dense<0.000000e+00> : vector<32x128xf32>
    %31 = tpu.matmul %28, %30, %cst_22 {dimension_numbers = #tpu.dot_dimension_numbers<[1], [0], [0], [1], [0, 0, 1, 1], [], []>} : vector<32x128xbf16>, vector<128x128xbf16>, vector<32x128xf32> -> vector<32x128xf32>
    %32 = arith.addf %26, %31 : vector<32x128xf32>
    %33 = vector.extract_strided_slice %20 {offsets = [0, 0, 2, 0], sizes = [2, 1, 16, 128], strides = [1, 1, 1, 1]} : vector<2x1x18x128xbf16> to vector<2x1x16x128xbf16>
    %34 = vector.shape_cast %33 : vector<2x1x16x128xbf16> to vector<32x128xbf16>
    %c5 = arith.constant 5 : index
    %c0_23 = arith.constant 0 : index
    %c0_24 = arith.constant 0 : index
    %35 = vector.load %arg4[%c5, %c0_23, %c0_24] : memref<9x128x128xbf16, #tpu.memory_space<vmem>>, vector<1x128x128xbf16>
    %36 = vector.shape_cast %35 : vector<1x128x128xbf16> to vector<128x128xbf16>
    %cst_25 = arith.constant dense<0.000000e+00> : vector<32x128xf32>
    %37 = tpu.matmul %34, %36, %cst_25 {dimension_numbers = #tpu.dot_dimension_numbers<[1], [0], [0], [1], [0, 0, 1, 1], [], []>} : vector<32x128xbf16>, vector<128x128xbf16>, vector<32x128xf32> -> vector<32x128xf32>
    %38 = arith.addf %32, %37 : vector<32x128xf32>
    %c0_26 = arith.constant 0 : index
    %c0_27 = arith.constant 0 : index
    %c0_28 = arith.constant 0 : index
    %c0_29 = arith.constant 0 : index
    %39 = vector.load %arg3[%c0_26, %c0_27, %c0_28, %c0_29] : memref<2x1x18x128xbf16, #tpu.memory_space<vmem>>, vector<2x1x18x128xbf16>
    %40 = vector.extract_strided_slice %39 {offsets = [0, 0, 0, 0], sizes = [2, 1, 16, 128], strides = [1, 1, 1, 1]} : vector<2x1x18x128xbf16> to vector<2x1x16x128xbf16>
    %41 = vector.shape_cast %40 : vector<2x1x16x128xbf16> to vector<32x128xbf16>
    %c6 = arith.constant 6 : index
    %c0_30 = arith.constant 0 : index
    %c0_31 = arith.constant 0 : index
    %42 = vector.load %arg4[%c6, %c0_30, %c0_31] : memref<9x128x128xbf16, #tpu.memory_space<vmem>>, vector<1x128x128xbf16>
    %43 = vector.shape_cast %42 : vector<1x128x128xbf16> to vector<128x128xbf16>
    %cst_32 = arith.constant dense<0.000000e+00> : vector<32x128xf32>
    %44 = tpu.matmul %41, %43, %cst_32 {dimension_numbers = #tpu.dot_dimension_numbers<[1], [0], [0], [1], [0, 0, 1, 1], [], []>} : vector<32x128xbf16>, vector<128x128xbf16>, vector<32x128xf32> -> vector<32x128xf32>
    %45 = arith.addf %38, %44 : vector<32x128xf32>
    %46 = vector.extract_strided_slice %39 {offsets = [0, 0, 1, 0], sizes = [2, 1, 16, 128], strides = [1, 1, 1, 1]} : vector<2x1x18x128xbf16> to vector<2x1x16x128xbf16>
    %47 = vector.shape_cast %46 : vector<2x1x16x128xbf16> to vector<32x128xbf16>
    %c7 = arith.constant 7 : index
    %c0_33 = arith.constant 0 : index
    %c0_34 = arith.constant 0 : index
    %48 = vector.load %arg4[%c7, %c0_33, %c0_34] : memref<9x128x128xbf16, #tpu.memory_space<vmem>>, vector<1x128x128xbf16>
    %49 = vector.shape_cast %48 : vector<1x128x128xbf16> to vector<128x128xbf16>
    %cst_35 = arith.constant dense<0.000000e+00> : vector<32x128xf32>
    %50 = tpu.matmul %47, %49, %cst_35 {dimension_numbers = #tpu.dot_dimension_numbers<[1], [0], [0], [1], [0, 0, 1, 1], [], []>} : vector<32x128xbf16>, vector<128x128xbf16>, vector<32x128xf32> -> vector<32x128xf32>
    %51 = arith.addf %45, %50 : vector<32x128xf32>
    %52 = vector.extract_strided_slice %39 {offsets = [0, 0, 2, 0], sizes = [2, 1, 16, 128], strides = [1, 1, 1, 1]} : vector<2x1x18x128xbf16> to vector<2x1x16x128xbf16>
    %53 = vector.shape_cast %52 : vector<2x1x16x128xbf16> to vector<32x128xbf16>
    %c8 = arith.constant 8 : index
    %c0_36 = arith.constant 0 : index
    %c0_37 = arith.constant 0 : index
    %54 = vector.load %arg4[%c8, %c0_36, %c0_37] : memref<9x128x128xbf16, #tpu.memory_space<vmem>>, vector<1x128x128xbf16>
    %55 = vector.shape_cast %54 : vector<1x128x128xbf16> to vector<128x128xbf16>
    %cst_38 = arith.constant dense<0.000000e+00> : vector<32x128xf32>
    %56 = tpu.matmul %53, %55, %cst_38 {dimension_numbers = #tpu.dot_dimension_numbers<[1], [0], [0], [1], [0, 0, 1, 1], [], []>} : vector<32x128xbf16>, vector<128x128xbf16>, vector<32x128xf32> -> vector<32x128xf32>
    %57 = arith.addf %51, %56 : vector<32x128xf32>
    %58 = vector.shape_cast %57 : vector<32x128xf32> to vector<2x1x16x128xf32>
    %59 = arith.truncf %58 : vector<2x1x16x128xf32> to vector<2x1x16x128xbf16>
    %c0_39 = arith.constant 0 : index
    %c0_40 = arith.constant 0 : index
    %c0_41 = arith.constant 0 : index
    %c0_42 = arith.constant 0 : index
    %60 = vector.load %arg5[%c0_39, %c0_40, %c0_41, %c0_42] : memref<2x1x16x128xbf16, #tpu.memory_space<vmem>>, vector<2x1x16x128xbf16>
    tpu.vector_store %arg5[%c0_39, %c0_40, %c0_41, %c0_42], %59 {strides = array<i32>} : memref<2x1x16x128xbf16, #tpu.memory_space<vmem>>, vector<2x1x16x128xbf16>,
    %61 = vector.shape_cast %57 : vector<32x128xf32> to vector<4x8x128xf32>
    %cst_43 = arith.constant dense<0.000000e+00> : vector<8x128xf32>
    %62 = vector.multi_reduction <add>, %61, %cst_43 [0] : vector<4x8x128xf32> to vector<8x128xf32>
    %63 = arith.mulf %61, %61 : vector<4x8x128xf32>
    %cst_44 = arith.constant dense<0.000000e+00> : vector<8x128xf32>
    %64 = vector.multi_reduction <add>, %63, %cst_44 [0] : vector<4x8x128xf32> to vector<8x128xf32>
    %65 = vector.shape_cast %62 : vector<8x128xf32> to vector<1x8x128xf32>
    %c0_45 = arith.constant 0 : index
    %c0_46 = arith.constant 0 : index
    %c0_47 = arith.constant 0 : index
    %66 = vector.load %arg6[%c0_45, %c0_46, %c0_47] : memref<1x8x128xf32, #tpu.memory_space<vmem>>, vector<1x8x128xf32>
    tpu.vector_store %arg6[%c0_45, %c0_46, %c0_47], %65 {strides = array<i32>} : memref<1x8x128xf32, #tpu.memory_space<vmem>>, vector<1x8x128xf32>,
    %67 = vector.shape_cast %64 : vector<8x128xf32> to vector<1x8x128xf32>
    %c0_48 = arith.constant 0 : index
    %c0_49 = arith.constant 0 : index
    %c0_50 = arith.constant 0 : index
    %68 = vector.load %arg7[%c0_48, %c0_49, %c0_50] : memref<1x8x128xf32, #tpu.memory_space<vmem>>, vector<1x8x128xf32>
    tpu.vector_store %arg7[%c0_48, %c0_49, %c0_50], %67 {strides = array<i32>} : memref<1x8x128xf32, #tpu.memory_space<vmem>>, vector<1x8x128xf32>,
    return
  }
  func.func @transform_0(%arg0: i32) -> (i32, i32, i32, i32) {
    %c0_i32 = arith.constant 0 : i32
    %c0_i32_0 = arith.constant 0 : i32
    %c0_i32_1 = arith.constant 0 : i32
    %c0_i32_2 = arith.constant 0 : i32
    return %c0_i32, %arg0, %c0_i32_0, %c0_i32_1 : i32, i32, i32, i32
  }
  func.func @transform_1(%arg0: i32) -> (i32, i32, i32, i32) {
    %c1_i32 = arith.constant 1 : i32
    %0 = arith.addi %arg0, %c1_i32 : i32
    %c0_i32 = arith.constant 0 : i32
    %c0_i32_0 = arith.constant 0 : i32
    %c0_i32_1 = arith.constant 0 : i32
    %c0_i32_2 = arith.constant 0 : i32
    return %c0_i32, %0, %c0_i32_0, %c0_i32_1 : i32, i32, i32, i32
  }
  func.func @transform_2(%arg0: i32) -> (i32, i32, i32, i32) {
    %c2_i32 = arith.constant 2 : i32
    %0 = arith.addi %arg0, %c2_i32 : i32
    %c0_i32 = arith.constant 0 : i32
    %c0_i32_0 = arith.constant 0 : i32
    %c0_i32_1 = arith.constant 0 : i32
    %c0_i32_2 = arith.constant 0 : i32
    return %c0_i32, %0, %c0_i32_0, %c0_i32_1 : i32, i32, i32, i32
  }
  func.func @transform_3(%arg0: i32) -> (i32, i32, i32) {
    %c0_i32 = arith.constant 0 : i32
    %c0_i32_0 = arith.constant 0 : i32
    %c0_i32_1 = arith.constant 0 : i32
    %c0_i32_2 = arith.constant 0 : i32
    return %c0_i32, %c0_i32_0, %c0_i32_1 : i32, i32, i32
  }
  func.func @transform_4(%arg0: i32) -> (i32, i32, i32, i32) {
    %c0_i32 = arith.constant 0 : i32
    %c0_i32_0 = arith.constant 0 : i32
    %c0_i32_1 = arith.constant 0 : i32
    %c0_i32_2 = arith.constant 0 : i32
    return %c0_i32, %arg0, %c0_i32_0, %c0_i32_1 : i32, i32, i32, i32
  }
  func.func @transform_5(%arg0: i32) -> (i32, i32, i32) {
    %c0_i32 = arith.constant 0 : i32
    %c0_i32_0 = arith.constant 0 : i32
    %c0_i32_1 = arith.constant 0 : i32
    return %arg0, %c0_i32, %c0_i32_0 : i32, i32, i32
  }
  func.func @transform_6(%arg0: i32) -> (i32, i32, i32) {
    %c0_i32 = arith.constant 0 : i32
    %c0_i32_0 = arith.constant 0 : i32
    %c0_i32_1 = arith.constant 0 : i32
    return %arg0, %c0_i32, %c0_i32_0 : i32, i32, i32
  }
}

module attributes {stable_mosaic.version = 11 : i64} {
  func.func @_finalize_kernel(%arg0: i32, %arg1: memref<2x16x16x128xbf16, #tpu.memory_space<vmem>>, %arg2: memref<2x16x16x128xbf16, #tpu.memory_space<vmem>>, %arg3: memref<128x128xbf16, #tpu.memory_space<vmem>>, %arg4: memref<1x128xf32, #tpu.memory_space<vmem>>, %arg5: memref<1x128xf32, #tpu.memory_space<vmem>>, %arg6: memref<2x16x16x128xbf16, #tpu.memory_space<vmem>>) attributes {dimension_semantics = [#tpu.dimension_semantics<parallel>], iteration_bounds = array<i64: 1>, scalar_prefetch = 0 : i64, scratch_operands = 0 : i64, tpu.core_type = #tpu.core_type<tc>, window_params = [{transform_indices = @transform_0, window_bounds = array<i64: 2, 16, 16, 128>}, {transform_indices = @transform_1, window_bounds = array<i64: 2, 16, 16, 128>}, {pipeline_mode = #tpu.pipeline_mode<synchronous>, transform_indices = @transform_2, window_bounds = array<i64: 128, 128>}, {pipeline_mode = #tpu.pipeline_mode<synchronous>, transform_indices = @transform_3, window_bounds = array<i64: 1, 128>}, {pipeline_mode = #tpu.pipeline_mode<synchronous>, transform_indices = @transform_4, window_bounds = array<i64: 1, 128>}, {transform_indices = @transform_5, window_bounds = array<i64: 2, 16, 16, 128>}]} {
    %c0 = arith.constant 0 : index
    %c0_0 = arith.constant 0 : index
    %c0_1 = arith.constant 0 : index
    %c0_2 = arith.constant 0 : index
    %0 = vector.load %arg2[%c0, %c0_0, %c0_1, %c0_2] : memref<2x16x16x128xbf16, #tpu.memory_space<vmem>>, vector<2x16x16x128xbf16>
    %1 = vector.shape_cast %0 : vector<2x16x16x128xbf16> to vector<512x128xbf16>
    %c0_3 = arith.constant 0 : index
    %c0_4 = arith.constant 0 : index
    %2 = vector.load %arg3[%c0_3, %c0_4] : memref<128x128xbf16, #tpu.memory_space<vmem>>, vector<128x128xbf16>
    %cst = arith.constant dense<0.000000e+00> : vector<512x128xf32>
    %3 = tpu.matmul %1, %2, %cst {dimension_numbers = #tpu.dot_dimension_numbers<[1], [0], [0], [1], [0, 0, 1, 1], [], []>} : vector<512x128xbf16>, vector<128x128xbf16>, vector<512x128xf32> -> vector<512x128xf32>
    %c0_5 = arith.constant 0 : index
    %c0_6 = arith.constant 0 : index
    %c0_7 = arith.constant 0 : index
    %c0_8 = arith.constant 0 : index
    %4 = vector.load %arg1[%c0_5, %c0_6, %c0_7, %c0_8] : memref<2x16x16x128xbf16, #tpu.memory_space<vmem>>, vector<2x16x16x128xbf16>
    %5 = vector.shape_cast %4 : vector<2x16x16x128xbf16> to vector<512x128xbf16>
    %6 = arith.extf %5 : vector<512x128xbf16> to vector<512x128xf32>
    %c0_9 = arith.constant 0 : index
    %c0_10 = arith.constant 0 : index
    %7 = vector.load %arg4[%c0_9, %c0_10] : memref<1x128xf32, #tpu.memory_space<vmem>>, vector<1x128xf32>
    %8 = vector.broadcast %7 : vector<1x128xf32> to vector<512x128xf32>
    %9 = arith.mulf %6, %8 : vector<512x128xf32>
    %c0_11 = arith.constant 0 : index
    %c0_12 = arith.constant 0 : index
    %10 = vector.load %arg5[%c0_11, %c0_12] : memref<1x128xf32, #tpu.memory_space<vmem>>, vector<1x128xf32>
    %11 = vector.broadcast %10 : vector<1x128xf32> to vector<512x128xf32>
    %12 = arith.addf %9, %11 : vector<512x128xf32>
    %13 = arith.addf %12, %3 : vector<512x128xf32>
    %cst_13 = arith.constant 0.000000e+00 : f32
    %14 = vector.broadcast %cst_13 : f32 to vector<512x128xf32>
    %15 = arith.maximumf %13, %14 : vector<512x128xf32>
    %16 = vector.shape_cast %15 : vector<512x128xf32> to vector<2x16x16x128xf32>
    %17 = arith.truncf %16 : vector<2x16x16x128xf32> to vector<2x16x16x128xbf16>
    %c0_14 = arith.constant 0 : index
    %c0_15 = arith.constant 0 : index
    %c0_16 = arith.constant 0 : index
    %c0_17 = arith.constant 0 : index
    %18 = vector.load %arg6[%c0_14, %c0_15, %c0_16, %c0_17] : memref<2x16x16x128xbf16, #tpu.memory_space<vmem>>, vector<2x16x16x128xbf16>
    tpu.vector_store %arg6[%c0_14, %c0_15, %c0_16, %c0_17], %17 {strides = array<i32>} : memref<2x16x16x128xbf16, #tpu.memory_space<vmem>>, vector<2x16x16x128xbf16>,
    return
  }
  func.func @transform_0(%arg0: i32) -> (i32, i32, i32, i32) {
    %c0_i32 = arith.constant 0 : i32
    %c0_i32_0 = arith.constant 0 : i32
    %c0_i32_1 = arith.constant 0 : i32
    %c0_i32_2 = arith.constant 0 : i32
    return %c0_i32, %arg0, %c0_i32_0, %c0_i32_1 : i32, i32, i32, i32
  }
  func.func @transform_1(%arg0: i32) -> (i32, i32, i32, i32) {
    %c0_i32 = arith.constant 0 : i32
    %c0_i32_0 = arith.constant 0 : i32
    %c0_i32_1 = arith.constant 0 : i32
    %c0_i32_2 = arith.constant 0 : i32
    return %c0_i32, %arg0, %c0_i32_0, %c0_i32_1 : i32, i32, i32, i32
  }
  func.func @transform_2(%arg0: i32) -> (i32, i32) {
    %c0_i32 = arith.constant 0 : i32
    %c0_i32_0 = arith.constant 0 : i32
    %c0_i32_1 = arith.constant 0 : i32
    return %c0_i32, %c0_i32_0 : i32, i32
  }
  func.func @transform_3(%arg0: i32) -> (i32, i32) {
    %c0_i32 = arith.constant 0 : i32
    %c0_i32_0 = arith.constant 0 : i32
    %c0_i32_1 = arith.constant 0 : i32
    return %c0_i32, %c0_i32_0 : i32, i32
  }
  func.func @transform_4(%arg0: i32) -> (i32, i32) {
    %c0_i32 = arith.constant 0 : i32
    %c0_i32_0 = arith.constant 0 : i32
    %c0_i32_1 = arith.constant 0 : i32
    return %c0_i32, %c0_i32_0 : i32, i32
  }
  func.func @transform_5(%arg0: i32) -> (i32, i32, i32, i32) {
    %c0_i32 = arith.constant 0 : i32
    %c0_i32_0 = arith.constant 0 : i32
    %c0_i32_1 = arith.constant 0 : i32
    %c0_i32_2 = arith.constant 0 : i32
    return %c0_i32, %arg0, %c0_i32_0, %c0_i32_1 : i32, i32, i32, i32
  }
}

</mosaic_0001>

<llo_original>
// kernel: rer_basic_block_v2.7
$region0: #{rer_basic_block_v2.7}
  #allocation0 [shape = 'u32[]', space=smem, size = 0x4, offset = 0x4, fixed_abs, tag = 'smem constant byte address 0x4 - core index']
  #allocation1 [shape = 'u32[144,128]{1,0:T(1,128)}', space=vmem, size = 0x12000, scoped, tag = 'internal scratch']
  %s0 = inlined_call_operand.vmem [shape: bf16[2,16,16,128], index: 0, kind: input, shape index: {}]
  %s1 = inlined_call_operand.vmem [shape: bf16[2,16,16,128], index: 1, kind: input, shape index: {}]
  %s2 = inlined_call_operand.vmem [shape: bf16[128,128], index: 2, kind: input, shape index: {}]
  %s3 = inlined_call_operand.vmem [shape: f32[1,128], index: 3, kind: input, shape index: {}]
  %s4 = inlined_call_operand.vmem [shape: f32[1,128], index: 4, kind: input, shape index: {}]
  %s5 = inlined_call_operand.vmem [shape: f32[2,16,16,128], index: 5, kind: output, shape index: {}]
  %s6 = sld [smem:[#allocation0]]
  $region30: #{rer_basic_block_v2.7} parent=0
    _
  %s8 = ssub.s32 1, %s6
  %s9 = scalar_select 0, %s8, %s6
  // Predicated region
  $region2: #{rer_basic_block_v2.7} parent=0 // pred_check
    _
  $region3: #{rer_basic_block_v2.7} parent=0 // pred_check_branch
    %11 = sbr.rel (0) target = $region5
  $region4: #{rer_basic_block_v2.7} parent=0 // pred_region
    _
  $region5: #{rer_basic_block_v2.7} parent=0 // pred_fallthru
    _
  // Predicated region
  $region6: #{rer_basic_block_v2.7} parent=0 // pred_check
    _
  $region7: #{rer_basic_block_v2.7} parent=0 // pred_check_branch
    %13 = sbr.rel (0) target = $region9
  $region8: #{rer_basic_block_v2.7} parent=0 // pred_region
    _
  $region9: #{rer_basic_block_v2.7} parent=0 // pred_fallthru
    _
  // Predicated region
  $region10: #{rer_basic_block_v2.7} parent=0 // pred_check
    _
  $region11: #{rer_basic_block_v2.7} parent=0 // pred_check_branch
    %15 = sbr.rel (0) target = $region13
  $region12: #{rer_basic_block_v2.7} parent=0 // pred_region
    _
  $region13: #{rer_basic_block_v2.7} parent=0 // pred_fallthru
    _
  // Predicated region
  $region14: #{rer_basic_block_v2.7} parent=0 // pred_check
    _
  $region15: #{rer_basic_block_v2.7} parent=0 // pred_check_branch
    %17 = sbr.rel (0) target = $region17
  $region16: #{rer_basic_block_v2.7} parent=0 // pred_region
    _
  $region17: #{rer_basic_block_v2.7} parent=0 // pred_fallthru
    _
  // Predicated region
  $region18: #{rer_basic_block_v2.7} parent=0 // pred_check
    _
  $region19: #{rer_basic_block_v2.7} parent=0 // pred_check_branch
    %19 = sbr.rel (0) target = $region21
  $region20: #{rer_basic_block_v2.7} parent=0 // pred_region
    _
  $region21: #{rer_basic_block_v2.7} parent=0 // pred_fallthru
    _
  %v21 = vld [vmem:[%s1] sm:$0xf]
  %v22 = vld [vmem:[%s1 + $0x4] sm:$0xf]
  %v23 = vld [vmem:[%s1 + $0x8] sm:$0xf]
  %v24 = vld [vmem:[%s1 + $0xc] sm:$0xf]
  %v25 = vld [vmem:[%s1 + $0x10] sm:$0xf]
  %v26 = vld [vmem:[%s1 + $0x14] sm:$0xf]
  %v27 = vld [vmem:[%s1 + $0x18] sm:$0xf]
  %v28 = vld [vmem:[%s1 + $0x1c] sm:$0xf]
  %v29 = vld [vmem:[%s1 + $0x20] sm:$0xf]
  %v30 = vld [vmem:[%s1 + $0x24] sm:$0xf]
  %v31 = vld [vmem:[%s1 + $0x28] sm:$0xf]
  %v32 = vld [vmem:[%s1 + $0x2c] sm:$0xf]
  %v33 = vld [vmem:[%s1 + $0x30] sm:$0xf]
  %v34 = vld [vmem:[%s1 + $0x34] sm:$0xf]
  %v35 = vld [vmem:[%s1 + $0x38] sm:$0xf]
  %v36 = vld [vmem:[%s1 + $0x3c] sm:$0xf]
  %v37 = vld [vmem:[%s1 + $0x40] sm:$0xf]
  %v38 = vld [vmem:[%s1 + $0x44] sm:$0xf]
  %v39 = vld [vmem:[%s1 + $0x48] sm:$0xf]
  %v40 = vld [vmem:[%s1 + $0x4c] sm:$0xf]
  %v41 = vld [vmem:[%s1 + $0x50] sm:$0xf]
  %v42 = vld [vmem:[%s1 + $0x54] sm:$0xf]
  %v43 = vld [vmem:[%s1 + $0x58] sm:$0xf]
  %v44 = vld [vmem:[%s1 + $0x5c] sm:$0xf]
  %v45 = vld [vmem:[%s1 + $0x60] sm:$0xf]
  %v46 = vld [vmem:[%s1 + $0x64] sm:$0xf]
  %v47 = vld [vmem:[%s1 + $0x68] sm:$0xf]
  %v48 = vld [vmem:[%s1 + $0x6c] sm:$0xf]
  %v49 = vld [vmem:[%s1 + $0x70] sm:$0xf]
  %v50 = vld [vmem:[%s1 + $0x74] sm:$0xf]
  %v51 = vld [vmem:[%s1 + $0x78] sm:$0xf]
  %v52 = vld [vmem:[%s1 + $0x7c] sm:$0xf]
  %v53 = vld [vmem:[%s1 + $0x80] sm:$0xf]
  %v54 = vld [vmem:[%s1 + $0x84] sm:$0xf]
  %v55 = vld [vmem:[%s1 + $0x88] sm:$0xf]
  %v56 = vld [vmem:[%s1 + $0x8c] sm:$0xf]
  %v57 = vld [vmem:[%s1 + $0x90] sm:$0xf]
  %v58 = vld [vmem:[%s1 + $0x94] sm:$0xf]
  %v59 = vld [vmem:[%s1 + $0x98] sm:$0xf]
  %v60 = vld [vmem:[%s1 + $0x9c] sm:$0xf]
  %v61 = vld [vmem:[%s1 + $0xa0] sm:$0xf]
  %v62 = vld [vmem:[%s1 + $0xa4] sm:$0xf]
  %v63 = vld [vmem:[%s1 + $0xa8] sm:$0xf]
  %v64 = vld [vmem:[%s1 + $0xac] sm:$0xf]
  %v65 = vld [vmem:[%s1 + $0xb0] sm:$0xf]
  %v66 = vld [vmem:[%s1 + $0xb4] sm:$0xf]
  %v67 = vld [vmem:[%s1 + $0xb8] sm:$0xf]
  %v68 = vld [vmem:[%s1 + $0xbc] sm:$0xf]
  %v69 = vld [vmem:[%s1 + $0xc0] sm:$0xf]
  %v70 = vld [vmem:[%s1 + $0xc4] sm:$0xf]
  %v71 = vld [vmem:[%s1 + $0xc8] sm:$0xf]
  %v72 = vld [vmem:[%s1 + $0xcc] sm:$0xf]
  %v73 = vld [vmem:[%s1 + $0xd0] sm:$0xf]
  %v74 = vld [vmem:[%s1 + $0xd4] sm:$0xf]
  %v75 = vld [vmem:[%s1 + $0xd8] sm:$0xf]
  %v76 = vld [vmem:[%s1 + $0xdc] sm:$0xf]
  %v77 = vld [vmem:[%s1 + $0xe0] sm:$0xf]
  %v78 = vld [vmem:[%s1 + $0xe4] sm:$0xf]
  %v79 = vld [vmem:[%s1 + $0xe8] sm:$0xf]
  %v80 = vld [vmem:[%s1 + $0xec] sm:$0xf]
  %v81 = vld [vmem:[%s1 + $0xf0] sm:$0xf]
  %v82 = vld [vmem:[%s1 + $0xf4] sm:$0xf]
  %v83 = vld [vmem:[%s1 + $0xf8] sm:$0xf]
  %v84 = vld [vmem:[%s1 + $0xfc] sm:$0xf]
  %v85 = vld [vmem:[%s2] sm:$0xf]
  %v86 = vld [vmem:[%s2 + $0x4] sm:$0xf]
  %v87 = vld [vmem:[%s2 + $0x8] sm:$0xf]
  %v88 = vld [vmem:[%s2 + $0xc] sm:$0xf]
  %v89 = vld [vmem:[%s2 + $0x10] sm:$0xf]
  %v90 = vld [vmem:[%s2 + $0x14] sm:$0xf]
  %v91 = vld [vmem:[%s2 + $0x18] sm:$0xf]
  %v92 = vld [vmem:[%s2 + $0x1c] sm:$0xf]
  %v93 = vld [vmem:[%s2 + $0x20] sm:$0xf]
  %v94 = vld [vmem:[%s2 + $0x24] sm:$0xf]
  %v95 = vld [vmem:[%s2 + $0x28] sm:$0xf]
  %v96 = vld [vmem:[%s2 + $0x2c] sm:$0xf]
  %v97 = vld [vmem:[%s2 + $0x30] sm:$0xf]
  %v98 = vld [vmem:[%s2 + $0x34] sm:$0xf]
  %v99 = vld [vmem:[%s2 + $0x38] sm:$0xf]
  %v100 = vld [vmem:[%s2 + $0x3c] sm:$0xf]
  %v165 = vunpack.c.l.b16 %v21
  %v166 = vunpack.c.l.b16 %v22
  %v167 = vunpack.c.l.b16 %v23
  %v168 = vunpack.c.l.b16 %v24
  %v169 = vunpack.c.l.b16 %v25
  %v170 = vunpack.c.l.b16 %v26
  %v171 = vunpack.c.l.b16 %v27
  %v172 = vunpack.c.l.b16 %v28
  %v173 = vunpack.c.l.b16 %v29
  %v174 = vunpack.c.l.b16 %v30
  %v175 = vunpack.c.l.b16 %v31
  %v176 = vunpack.c.l.b16 %v32
  %v177 = vunpack.c.l.b16 %v33
  %v178 = vunpack.c.l.b16 %v34
  %v179 = vunpack.c.l.b16 %v35
  %v180 = vunpack.c.l.b16 %v36
  %v181 = vunpack.c.l.b16 %v37
  %v182 = vunpack.c.l.b16 %v38
  %v183 = vunpack.c.l.b16 %v39
  %v184 = vunpack.c.l.b16 %v40
  %v185 = vunpack.c.l.b16 %v41
  %v186 = vunpack.c.l.b16 %v42
  %v187 = vunpack.c.l.b16 %v43
  %v188 = vunpack.c.l.b16 %v44
  %v189 = vunpack.c.l.b16 %v45
  %v190 = vunpack.c.l.b16 %v46
  %v191 = vunpack.c.l.b16 %v47
  %v192 = vunpack.c.l.b16 %v48
  %v193 = vunpack.c.l.b16 %v49
  %v194 = vunpack.c.l.b16 %v50
  %v195 = vunpack.c.l.b16 %v51
  %v196 = vunpack.c.l.b16 %v52
  %v197 = vunpack.c.l.b16 %v53
  %v198 = vunpack.c.l.b16 %v54
  %v199 = vunpack.c.l.b16 %v55
  %v200 = vunpack.c.l.b16 %v56
  %v201 = vunpack.c.l.b16 %v57
  %v202 = vunpack.c.l.b16 %v58
  %v203 = vunpack.c.l.b16 %v59
  %v204 = vunpack.c.l.b16 %v60
  %v205 = vunpack.c.l.b16 %v61
  %v206 = vunpack.c.l.b16 %v62
  %v207 = vunpack.c.l.b16 %v63
  %v208 = vunpack.c.l.b16 %v64
  %v209 = vunpack.c.l.b16 %v65
  %v210 = vunpack.c.l.b16 %v66
  %v211 = vunpack.c.l.b16 %v67
  %v212 = vunpack.c.l.b16 %v68
  %v213 = vunpack.c.l.b16 %v69
  %v214 = vunpack.c.l.b16 %v70
  %v215 = vunpack.c.l.b16 %v71
  %v216 = vunpack.c.l.b16 %v72
  %v217 = vunpack.c.l.b16 %v73
  %v218 = vunpack.c.l.b16 %v74
  %v219 = vunpack.c.l.b16 %v75
  %v220 = vunpack.c.l.b16 %v76
  %v221 = vunpack.c.l.b16 %v77
  %v222 = vunpack.c.l.b16 %v78
  %v223 = vunpack.c.l.b16 %v79
  %v224 = vunpack.c.l.b16 %v80
  %v225 = vunpack.c.l.b16 %v81
  %v226 = vunpack.c.l.b16 %v82
  %v227 = vunpack.c.l.b16 %v83
  %v228 = vunpack.c.l.b16 %v84
  %v229 = vpack.c.b16 %v166, %v165
  %v230 = vpack.c.b16 %v168, %v167
  %v231 = vpack.c.b16 %v170, %v169
  %v232 = vpack.c.b16 %v172, %v171
  %v233 = vpack.c.b16 %v174, %v173
  %v234 = vpack.c.b16 %v176, %v175
  %v235 = vpack.c.b16 %v178, %v177
  %v236 = vpack.c.b16 %v180, %v179
  %v237 = vpack.c.b16 %v182, %v181
  %v238 = vpack.c.b16 %v184, %v183
  %v239 = vpack.c.b16 %v186, %v185
  %v240 = vpack.c.b16 %v188, %v187
  %v241 = vpack.c.b16 %v190, %v189
  %v242 = vpack.c.b16 %v192, %v191
  %v243 = vpack.c.b16 %v194, %v193
  %v244 = vpack.c.b16 %v196, %v195
  %v245 = vpack.c.b16 %v198, %v197
  %v246 = vpack.c.b16 %v200, %v199
  %v247 = vpack.c.b16 %v202, %v201
  %v248 = vpack.c.b16 %v204, %v203
  %v249 = vpack.c.b16 %v206, %v205
  %v250 = vpack.c.b16 %v208, %v207
  %v251 = vpack.c.b16 %v210, %v209
  %v252 = vpack.c.b16 %v212, %v211
  %v253 = vpack.c.b16 %v214, %v213
  %v254 = vpack.c.b16 %v216, %v215
  %v255 = vpack.c.b16 %v218, %v217
  %v256 = vpack.c.b16 %v220, %v219
  %v257 = vpack.c.b16 %v222, %v221
  %v258 = vpack.c.b16 %v224, %v223
  %v259 = vpack.c.b16 %v226, %v225
  %v260 = vpack.c.b16 %v228, %v227
  %v309 = vunpack.c.l.b16 %v85
  %v310 = vunpack.c.l.b16 %v86
  %v311 = vunpack.c.l.b16 %v87
  %v312 = vunpack.c.l.b16 %v88
  %v313 = vunpack.c.l.b16 %v89
  %v314 = vunpack.c.l.b16 %v90
  %v315 = vunpack.c.l.b16 %v91
  %v316 = vunpack.c.l.b16 %v92
  %v317 = vunpack.c.l.b16 %v93
  %v318 = vunpack.c.l.b16 %v94
  %v319 = vunpack.c.l.b16 %v95
  %v320 = vunpack.c.l.b16 %v96
  %v321 = vunpack.c.l.b16 %v97
  %v322 = vunpack.c.l.b16 %v98
  %v323 = vunpack.c.l.b16 %v99
  %v324 = vunpack.c.l.b16 %v100
  %v325 = vpack.c.b16 %v310, %v309
  %v326 = vpack.c.b16 %v312, %v311
  %v327 = vpack.c.b16 %v314, %v313
  %v328 = vpack.c.b16 %v316, %v315
  %v329 = vpack.c.b16 %v318, %v317
  %v330 = vpack.c.b16 %v320, %v319
  %v331 = vpack.c.b16 %v322, %v321
  %v332 = vpack.c.b16 %v324, %v323
  %341 = vmatprep.subr.bf16.mxu0 0
  %342 = vmatpush1.bf16.msra.mxu0 %v332
  %343 = vmatprep.subr.bf16.mxu0 0
  %344 = vmatpush1.bf16.msra.mxu0 %v331
  %345 = vmatprep.subr.bf16.mxu0 0
  %346 = vmatpush1.bf16.msra.mxu0 %v330
  %347 = vmatprep.subr.bf16.mxu0 0
  %348 = vmatpush1.bf16.msra.mxu0 %v329
  %349 = vmatprep.subr.bf16.mxu0 0
  %350 = vmatpush1.bf16.msra.mxu0 %v328
  %351 = vmatprep.subr.bf16.mxu0 0
  %352 = vmatpush1.bf16.msra.mxu0 %v327
  %353 = vmatprep.subr.bf16.mxu0 0
  %354 = vmatpush1.bf16.msra.mxu0 %v326
  %355 = vmatprep.subr.bf16.mxu0 0
  %356 = vmatpush1.bf16.msra.mxu0 %v325
  %357 = vmatprep.subr.bf16.mxu0 0
  %358 = vmatpush2.bf16.msra.mxu0 0
  %359 = vmatprep.subr.bf16.mxu0 0
  %360 = vmatpush2.bf16.msra.mxu0 0
  %361 = vmatprep.subr.bf16.mxu0 0
  %362 = vmatpush2.bf16.msra.mxu0 0
  %363 = vmatprep.subr.bf16.mxu0 0
  %364 = vmatpush2.bf16.msra.mxu0 0
  %365 = vmatprep.subr.bf16.mxu0 0
  %366 = vmatpush2.bf16.msra.mxu0 0
  %367 = vmatprep.subr.bf16.mxu0 0
  %368 = vmatpush2.bf16.msra.mxu0 0
  %369 = vmatprep.subr.bf16.mxu0 0
  %370 = vmatpush2.bf16.msra.mxu0 0
  %371 = vmatprep.subr.bf16.mxu0 0
  %372 = vmatpush2.bf16.msra.mxu0 0
  %373 = vmatprep.mubr.bf16.mxu0 0
  %374 = vmatmul.mubr.bf16.gmra.mxu0 %v229
  %v375 = vpop.f32.mrf.mxu0
  %v376 = vadd.f32 0.0, %v375
  %v377 = vpop.f32.mrf.mxu0
  %v378 = vpop.f32.mrf.mxu0
  %v379 = vadd.f32 0.0, %v378
  %v380 = vpop.f32.mrf.mxu0
  %381 = vmatprep.mubr.bf16.mxu0 0
  %382 = vmatmul.mubr.bf16.gmra.mxu0 %v230
  %v383 = vpop.f32.mrf.mxu0
  %v384 = vadd.f32 0.0, %v383
  %v385 = vpop.f32.mrf.mxu0
  %v386 = vpop.f32.mrf.mxu0
  %v387 = vadd.f32 0.0, %v386
  %v388 = vpop.f32.mrf.mxu0
  %389 = vmatprep.mubr.bf16.mxu0 0
  %390 = vmatmul.mubr.bf16.gmra.mxu0 %v231
  %v391 = vpop.f32.mrf.mxu0
  %v392 = vadd.f32 0.0, %v391
  %v393 = vpop.f32.mrf.mxu0
  %v394 = vpop.f32.mrf.mxu0
  %v395 = vadd.f32 0.0, %v394
  %v396 = vpop.f32.mrf.mxu0
  %397 = vmatprep.mubr.bf16.mxu0 0
  %398 = vmatmul.mubr.bf16.gmra.mxu0 %v232
  %v399 = vpop.f32.mrf.mxu0
  %v400 = vadd.f32 0.0, %v399
  %v401 = vpop.f32.mrf.mxu0
  %v402 = vpop.f32.mrf.mxu0
  %v403 = vadd.f32 0.0, %v402
  %v404 = vpop.f32.mrf.mxu0
  %405 = vmatprep.mubr.bf16.mxu0 0
  %406 = vmatmul.mubr.bf16.gmra.mxu0 %v233
  %v407 = vpop.f32.mrf.mxu0
  %v408 = vadd.f32 0.0, %v407
  %v409 = vpop.f32.mrf.mxu0
  %v410 = vpop.f32.mrf.mxu0
  %v411 = vadd.f32 0.0, %v410
  %v412 = vpop.f32.mrf.mxu0
  %413 = vmatprep.mubr.bf16.mxu0 0
  %414 = vmatmul.mubr.bf16.gmra.mxu0 %v234
  %v415 = vpop.f32.mrf.mxu0
  %v416 = vadd.f32 0.0, %v415
  %v417 = vpop.f32.mrf.mxu0
  %v418 = vpop.f32.mrf.mxu0
  %v419 = vadd.f32 0.0, %v418
  %v420 = vpop.f32.mrf.mxu0
  %421 = vmatprep.mubr.bf16.mxu0 0
  %422 = vmatmul.mubr.bf16.gmra.mxu0 %v235
  %v423 = vpop.f32.mrf.mxu0
  %v424 = vadd.f32 0.0, %v423
  %v425 = vpop.f32.mrf.mxu0
  %v426 = vpop.f32.mrf.mxu0
  %v427 = vadd.f32 0.0, %v426
  %v428 = vpop.f32.mrf.mxu0
  %429 = vmatprep.mubr.bf16.mxu0 0
  %430 = vmatmul.mubr.bf16.gmra.mxu0 %v236
  %v431 = vpop.f32.mrf.mxu0
  %v432 = vadd.f32 0.0, %v431
  %v433 = vpop.f32.mrf.mxu0
  %v434 = vpop.f32.mrf.mxu0
  %v435 = vadd.f32 0.0, %v434
  %v436 = vpop.f32.mrf.mxu0
  %437 = vmatprep.mubr.bf16.mxu0 0
  %438 = vmatmul.mubr.bf16.gmra.mxu0 %v237
  %v439 = vpop.f32.mrf.mxu0
  %v440 = vadd.f32 0.0, %v439
  %v441 = vpop.f32.mrf.mxu0
  %v442 = vpop.f32.mrf.mxu0
  %v443 = vadd.f32 0.0, %v442
  %v444 = vpop.f32.mrf.mxu0
  %445 = vmatprep.mubr.bf16.mxu0 0
  %446 = vmatmul.mubr.bf16.gmra.mxu0 %v238
  %v447 = vpop.f32.mrf.mxu0
  %v448 = vadd.f32 0.0, %v447
  %v449 = vpop.f32.mrf.mxu0
  %v450 = vpop.f32.mrf.mxu0
  %v451 = vadd.f32 0.0, %v450
  %v452 = vpop.f32.mrf.mxu0
  %453 = vmatprep.mubr.bf16.mxu0 0
  %454 = vmatmul.mubr.bf16.gmra.mxu0 %v239
  %v455 = vpop.f32.mrf.mxu0
  %v456 = vadd.f32 0.0, %v455
  %v457 = vpop.f32.mrf.mxu0
  %v458 = vpop.f32.mrf.mxu0
  %v459 = vadd.f32 0.0, %v458
  %v460 = vpop.f32.mrf.mxu0
  %461 = vmatprep.mubr.bf16.mxu0 0
  %462 = vmatmul.mubr.bf16.gmra.mxu0 %v240
  %v463 = vpop.f32.mrf.mxu0
  %v464 = vadd.f32 0.0, %v463
  %v465 = vpop.f32.mrf.mxu0
  %v466 = vpop.f32.mrf.mxu0
  %v467 = vadd.f32 0.0, %v466
  %v468 = vpop.f32.mrf.mxu0
  %469 = vmatprep.mubr.bf16.mxu0 0
  %470 = vmatmul.mubr.bf16.gmra.mxu0 %v241
  %v471 = vpop.f32.mrf.mxu0
  %v472 = vadd.f32 0.0, %v471
  %v473 = vpop.f32.mrf.mxu0
  %v474 = vpop.f32.mrf.mxu0
  %v475 = vadd.f32 0.0, %v474
  %v476 = vpop.f32.mrf.mxu0
  %477 = vmatprep.mubr.bf16.mxu0 0
  %478 = vmatmul.mubr.bf16.gmra.mxu0 %v242
  %v479 = vpop.f32.mrf.mxu0
  %v480 = vadd.f32 0.0, %v479
  %v481 = vpop.f32.mrf.mxu0
  %v482 = vpop.f32.mrf.mxu0
  %v483 = vadd.f32 0.0, %v482
  %v484 = vpop.f32.mrf.mxu0
  %485 = vmatprep.mubr.bf16.mxu0 0
  %486 = vmatmul.mubr.bf16.gmra.mxu0 %v243
  %v487 = vpop.f32.mrf.mxu0
  %v488 = vadd.f32 0.0, %v487
  %v489 = vpop.f32.mrf.mxu0
  %v490 = vpop.f32.mrf.mxu0
  %v491 = vadd.f32 0.0, %v490
  %v492 = vpop.f32.mrf.mxu0
  %493 = vmatprep.mubr.bf16.mxu0 0
  %494 = vmatmul.mubr.bf16.gmra.mxu0 %v244
  %v495 = vpop.f32.mrf.mxu0
  %v496 = vadd.f32 0.0, %v495
  %v497 = vpop.f32.mrf.mxu0
  %v498 = vpop.f32.mrf.mxu0
  %v499 = vadd.f32 0.0, %v498
  %v500 = vpop.f32.mrf.mxu0
  %501 = vmatprep.mubr.bf16.mxu0 0
  %502 = vmatmul.mubr.bf16.gmra.mxu0 %v245
  %v503 = vpop.f32.mrf.mxu0
  %v504 = vadd.f32 0.0, %v503
  %v505 = vpop.f32.mrf.mxu0
  %v506 = vpop.f32.mrf.mxu0
  %v507 = vadd.f32 0.0, %v506
  %v508 = vpop.f32.mrf.mxu0
  %509 = vmatprep.mubr.bf16.mxu0 0
  %510 = vmatmul.mubr.bf16.gmra.mxu0 %v246
  %v511 = vpop.f32.mrf.mxu0
  %v512 = vadd.f32 0.0, %v511
  %v513 = vpop.f32.mrf.mxu0
  %v514 = vpop.f32.mrf.mxu0
  %v515 = vadd.f32 0.0, %v514
  %v516 = vpop.f32.mrf.mxu0
  %517 = vmatprep.mubr.bf16.mxu0 0
  %518 = vmatmul.mubr.bf16.gmra.mxu0 %v247
  %v519 = vpop.f32.mrf.mxu0
  %v520 = vadd.f32 0.0, %v519
  %v521 = vpop.f32.mrf.mxu0
  %v522 = vpop.f32.mrf.mxu0
  %v523 = vadd.f32 0.0, %v522
  %v524 = vpop.f32.mrf.mxu0
  %525 = vmatprep.mubr.bf16.mxu0 0
  %526 = vmatmul.mubr.bf16.gmra.mxu0 %v248
  %v527 = vpop.f32.mrf.mxu0
  %v528 = vadd.f32 0.0, %v527
  %v529 = vpop.f32.mrf.mxu0
  %v530 = vpop.f32.mrf.mxu0
  %v531 = vadd.f32 0.0, %v530
  %v532 = vpop.f32.mrf.mxu0
  %533 = vmatprep.mubr.bf16.mxu0 0
  %534 = vmatmul.mubr.bf16.gmra.mxu0 %v249
  %v535 = vpop.f32.mrf.mxu0
  %v536 = vadd.f32 0.0, %v535
  %v537 = vpop.f32.mrf.mxu0
  %v538 = vpop.f32.mrf.mxu0
  %v539 = vadd.f32 0.0, %v538
  %v540 = vpop.f32.mrf.mxu0
  %541 = vmatprep.mubr.bf16.mxu0 0
  %542 = vmatmul.mubr.bf16.gmra.mxu0 %v250
  %v543 = vpop.f32.mrf.mxu0
  %v544 = vadd.f32 0.0, %v543
  %v545 = vpop.f32.mrf.mxu0
  %v546 = vpop.f32.mrf.mxu0
  %v547 = vadd.f32 0.0, %v546
  %v548 = vpop.f32.mrf.mxu0
  %549 = vmatprep.mubr.bf16.mxu0 0
  %550 = vmatmul.mubr.bf16.gmra.mxu0 %v251
  %v551 = vpop.f32.mrf.mxu0
  %v552 = vadd.f32 0.0, %v551
  %v553 = vpop.f32.mrf.mxu0
  %v554 = vpop.f32.mrf.mxu0
  %v555 = vadd.f32 0.0, %v554
  %v556 = vpop.f32.mrf.mxu0
  %557 = vmatprep.mubr.bf16.mxu0 0
  %558 = vmatmul.mubr.bf16.gmra.mxu0 %v252
  %v559 = vpop.f32.mrf.mxu0
  %v560 = vadd.f32 0.0, %v559
  %v561 = vpop.f32.mrf.mxu0
  %v562 = vpop.f32.mrf.mxu0
  %v563 = vadd.f32 0.0, %v562
  %v564 = vpop.f32.mrf.mxu0
  %565 = vmatprep.mubr.bf16.mxu0 0
  %566 = vmatmul.mubr.bf16.gmra.mxu0 %v253
  %v567 = vpop.f32.mrf.mxu0
  %v568 = vadd.f32 0.0, %v567
  %v569 = vpop.f32.mrf.mxu0
  %v570 = vpop.f32.mrf.mxu0
  %v571 = vadd.f32 0.0, %v570
  %v572 = vpop.f32.mrf.mxu0
  %573 = vmatprep.mubr.bf16.mxu0 0
  %574 = vmatmul.mubr.bf16.gmra.mxu0 %v254
  %v575 = vpop.f32.mrf.mxu0
  %v576 = vadd.f32 0.0, %v575
  %v577 = vpop.f32.mrf.mxu0
  %v578 = vpop.f32.mrf.mxu0
  %v579 = vadd.f32 0.0, %v578
  %v580 = vpop.f32.mrf.mxu0
  %581 = vmatprep.mubr.bf16.mxu0 0
  %582 = vmatmul.mubr.bf16.gmra.mxu0 %v255
  %v583 = vpop.f32.mrf.mxu0
  %v584 = vadd.f32 0.0, %v583
  %v585 = vpop.f32.mrf.mxu0
  %v586 = vpop.f32.mrf.mxu0
  %v587 = vadd.f32 0.0, %v586
  %v588 = vpop.f32.mrf.mxu0
  %589 = vmatprep.mubr.bf16.mxu0 0
  %590 = vmatmul.mubr.bf16.gmra.mxu0 %v256
  %v591 = vpop.f32.mrf.mxu0
  %v592 = vadd.f32 0.0, %v591
  %v593 = vpop.f32.mrf.mxu0
  %v594 = vpop.f32.mrf.mxu0
  %v595 = vadd.f32 0.0, %v594
  %v596 = vpop.f32.mrf.mxu0
  %597 = vmatprep.mubr.bf16.mxu0 0
  %598 = vmatmul.mubr.bf16.gmra.mxu0 %v257
  %v599 = vpop.f32.mrf.mxu0
  %v600 = vadd.f32 0.0, %v599
  %v601 = vpop.f32.mrf.mxu0
  %v602 = vpop.f32.mrf.mxu0
  %v603 = vadd.f32 0.0, %v602
  %v604 = vpop.f32.mrf.mxu0
  %605 = vmatprep.mubr.bf16.mxu0 0
  %606 = vmatmul.mubr.bf16.gmra.mxu0 %v258
  %v607 = vpop.f32.mrf.mxu0
  %v608 = vadd.f32 0.0, %v607
  %v609 = vpop.f32.mrf.mxu0
  %v610 = vpop.f32.mrf.mxu0
  %v611 = vadd.f32 0.0, %v610
  %v612 = vpop.f32.mrf.mxu0
  %613 = vmatprep.mubr.bf16.mxu0 0
  %614 = vmatmul.mubr.bf16.gmra.mxu0 %v259
  %v615 = vpop.f32.mrf.mxu0
  %v616 = vadd.f32 0.0, %v615
  %v617 = vpop.f32.mrf.mxu0
  %v618 = vpop.f32.mrf.mxu0
  %v619 = vadd.f32 0.0, %v618
  %v620 = vpop.f32.mrf.mxu0
  %621 = vmatprep.mubr.bf16.mxu0 0
  %622 = vmatmul.mubr.bf16.gmra.mxu0 %v260
  %v623 = vpop.f32.mrf.mxu0
  %v624 = vadd.f32 0.0, %v623
  %v625 = vpop.f32.mrf.mxu0
  %v626 = vpop.f32.mrf.mxu0
  %v627 = vadd.f32 0.0, %v626
  %v628 = vpop.f32.mrf.mxu0
  %629 = vdwg.mxu0
  %v630 = vld [vmem:[%s0] sm:$0xf]
  %v631 = vld [vmem:[%s0 + $0x4] sm:$0xf]
  %v632 = vld [vmem:[%s0 + $0x8] sm:$0xf]
  %v633 = vld [vmem:[%s0 + $0xc] sm:$0xf]
  %v634 = vld [vmem:[%s0 + $0x10] sm:$0xf]
  %v635 = vld [vmem:[%s0 + $0x14] sm:$0xf]
  %v636 = vld [vmem:[%s0 + $0x18] sm:$0xf]
  %v637 = vld [vmem:[%s0 + $0x1c] sm:$0xf]
  %v638 = vld [vmem:[%s0 + $0x20] sm:$0xf]
  %v639 = vld [vmem:[%s0 + $0x24] sm:$0xf]
  %v640 = vld [vmem:[%s0 + $0x28] sm:$0xf]
  %v641 = vld [vmem:[%s0 + $0x2c] sm:$0xf]
  %v642 = vld [vmem:[%s0 + $0x30] sm:$0xf]
  %v643 = vld [vmem:[%s0 + $0x34] sm:$0xf]
  %v644 = vld [vmem:[%s0 + $0x38] sm:$0xf]
  %v645 = vld [vmem:[%s0 + $0x3c] sm:$0xf]
  %v646 = vld [vmem:[%s0 + $0x40] sm:$0xf]
  %v647 = vld [vmem:[%s0 + $0x44] sm:$0xf]
  %v648 = vld [vmem:[%s0 + $0x48] sm:$0xf]
  %v649 = vld [vmem:[%s0 + $0x4c] sm:$0xf]
  %v650 = vld [vmem:[%s0 + $0x50] sm:$0xf]
  %v651 = vld [vmem:[%s0 + $0x54] sm:$0xf]
  %v652 = vld [vmem:[%s0 + $0x58] sm:$0xf]
  %v653 = vld [vmem:[%s0 + $0x5c] sm:$0xf]
  %v654 = vld [vmem:[%s0 + $0x60] sm:$0xf]
  %v655 = vld [vmem:[%s0 + $0x64] sm:$0xf]
  %v656 = vld [vmem:[%s0 + $0x68] sm:$0xf]
  %v657 = vld [vmem:[%s0 + $0x6c] sm:$0xf]
  %v658 = vld [vmem:[%s0 + $0x70] sm:$0xf]
  %v659 = vld [vmem:[%s0 + $0x74] sm:$0xf]
  %v660 = vld [vmem:[%s0 + $0x78] sm:$0xf]
  %v661 = vld [vmem:[%s0 + $0x7c] sm:$0xf]
  %v662 = vld [vmem:[%s0 + $0x80] sm:$0xf]
  %v663 = vld [vmem:[%s0 + $0x84] sm:$0xf]
  %v664 = vld [vmem:[%s0 + $0x88] sm:$0xf]
  %v665 = vld [vmem:[%s0 + $0x8c] sm:$0xf]
  %v666 = vld [vmem:[%s0 + $0x90] sm:$0xf]
  %v667 = vld [vmem:[%s0 + $0x94] sm:$0xf]
  %v668 = vld [vmem:[%s0 + $0x98] sm:$0xf]
  %v669 = vld [vmem:[%s0 + $0x9c] sm:$0xf]
  %v670 = vld [vmem:[%s0 + $0xa0] sm:$0xf]
  %v671 = vld [vmem:[%s0 + $0xa4] sm:$0xf]
  %v672 = vld [vmem:[%s0 + $0xa8] sm:$0xf]
  %v673 = vld [vmem:[%s0 + $0xac] sm:$0xf]
  %v674 = vld [vmem:[%s0 + $0xb0] sm:$0xf]
  %v675 = vld [vmem:[%s0 + $0xb4] sm:$0xf]
  %v676 = vld [vmem:[%s0 + $0xb8] sm:$0xf]
  %v677 = vld [vmem:[%s0 + $0xbc] sm:$0xf]
  %v678 = vld [vmem:[%s0 + $0xc0] sm:$0xf]
  %v679 = vld [vmem:[%s0 + $0xc4] sm:$0xf]
  %v680 = vld [vmem:[%s0 + $0xc8] sm:$0xf]
  %v681 = vld [vmem:[%s0 + $0xcc] sm:$0xf]
  %v682 = vld [vmem:[%s0 + $0xd0] sm:$0xf]
  %v683 = vld [vmem:[%s0 + $0xd4] sm:$0xf]
  %v684 = vld [vmem:[%s0 + $0xd8] sm:$0xf]
  %v685 = vld [vmem:[%s0 + $0xdc] sm:$0xf]
  %v686 = vld [vmem:[%s0 + $0xe0] sm:$0xf]
  %v687 = vld [vmem:[%s0 + $0xe4] sm:$0xf]
  %v688 = vld [vmem:[%s0 + $0xe8] sm:$0xf]
  %v689 = vld [vmem:[%s0 + $0xec] sm:$0xf]
  %v690 = vld [vmem:[%s0 + $0xf0] sm:$0xf]
  %v691 = vld [vmem:[%s0 + $0xf4] sm:$0xf]
  %v692 = vld [vmem:[%s0 + $0xf8] sm:$0xf]
  %v693 = vld [vmem:[%s0 + $0xfc] sm:$0xf]
  %v694 = vunpack.c.l.bf16 %v630
  %v695 = vunpack.c.l.bf16 %v631
  %v696 = vunpack.c.l.bf16 %v632
  %v697 = vunpack.c.l.bf16 %v633
  %v698 = vunpack.c.l.bf16 %v634
  %v699 = vunpack.c.l.bf16 %v635
  %v700 = vunpack.c.l.bf16 %v636
  %v701 = vunpack.c.l.bf16 %v637
  %v702 = vunpack.c.l.bf16 %v638
  %v703 = vunpack.c.l.bf16 %v639
  %v704 = vunpack.c.l.bf16 %v640
  %v705 = vunpack.c.l.bf16 %v641
  %v706 = vunpack.c.l.bf16 %v642
  %v707 = vunpack.c.l.bf16 %v643
  %v708 = vunpack.c.l.bf16 %v644
  %v709 = vunpack.c.l.bf16 %v645
  %v710 = vunpack.c.l.bf16 %v646
  %v711 = vunpack.c.l.bf16 %v647
  %v712 = vunpack.c.l.bf16 %v648
  %v713 = vunpack.c.l.bf16 %v649
  %v714 = vunpack.c.l.bf16 %v650
  %v715 = vunpack.c.l.bf16 %v651
  %v716 = vunpack.c.l.bf16 %v652
  %v717 = vunpack.c.l.bf16 %v653
  %v718 = vunpack.c.l.bf16 %v654
  %v719 = vunpack.c.l.bf16 %v655
  %v720 = vunpack.c.l.bf16 %v656
  %v721 = vunpack.c.l.bf16 %v657
  %v722 = vunpack.c.l.bf16 %v658
  %v723 = vunpack.c.l.bf16 %v659
  %v724 = vunpack.c.l.bf16 %v660
  %v725 = vunpack.c.l.bf16 %v661
  %v726 = vunpack.c.l.bf16 %v662
  %v727 = vunpack.c.l.bf16 %v663
  %v728 = vunpack.c.l.bf16 %v664
  %v729 = vunpack.c.l.bf16 %v665
  %v730 = vunpack.c.l.bf16 %v666
  %v731 = vunpack.c.l.bf16 %v667
  %v732 = vunpack.c.l.bf16 %v668
  %v733 = vunpack.c.l.bf16 %v669
  %v734 = vunpack.c.l.bf16 %v670
  %v735 = vunpack.c.l.bf16 %v671
  %v736 = vunpack.c.l.bf16 %v672
  %v737 = vunpack.c.l.bf16 %v673
  %v738 = vunpack.c.l.bf16 %v674
  %v739 = vunpack.c.l.bf16 %v675
  %v740 = vunpack.c.l.bf16 %v676
  %v741 = vunpack.c.l.bf16 %v677
  %v742 = vunpack.c.l.bf16 %v678
  %v743 = vunpack.c.l.bf16 %v679
  %v744 = vunpack.c.l.bf16 %v680
  %v745 = vunpack.c.l.bf16 %v681
  %v746 = vunpack.c.l.bf16 %v682
  %v747 = vunpack.c.l.bf16 %v683
  %v748 = vunpack.c.l.bf16 %v684
  %v749 = vunpack.c.l.bf16 %v685
  %v750 = vunpack.c.l.bf16 %v686
  %v751 = vunpack.c.l.bf16 %v687
  %v752 = vunpack.c.l.bf16 %v688
  %v753 = vunpack.c.l.bf16 %v689
  %v754 = vunpack.c.l.bf16 %v690
  %v755 = vunpack.c.l.bf16 %v691
  %v756 = vunpack.c.l.bf16 %v692
  %v757 = vunpack.c.l.bf16 %v693
  %v758 = vld [vmem:[%s3] sm:$0x1]
  %v760 = vlaneseq
  %v761 = vshrl.u32 %v760, 7
  %v762 = vsub.s32 0, %v761
  %v763 = vrot.slane %v758, %v762
  %v765 = vmul.f32 %v694, %v763
  %v766 = vmul.f32 %v695, %v763
  %v767 = vmul.f32 %v696, %v763
  %v768 = vmul.f32 %v697, %v763
  %v769 = vmul.f32 %v698, %v763
  %v770 = vmul.f32 %v699, %v763
  %v771 = vmul.f32 %v700, %v763
  %v772 = vmul.f32 %v701, %v763
  %v773 = vmul.f32 %v702, %v763
  %v774 = vmul.f32 %v703, %v763
  %v775 = vmul.f32 %v704, %v763
  %v776 = vmul.f32 %v705, %v763
  %v777 = vmul.f32 %v706, %v763
  %v778 = vmul.f32 %v707, %v763
  %v779 = vmul.f32 %v708, %v763
  %v780 = vmul.f32 %v709, %v763
  %v781 = vmul.f32 %v710, %v763
  %v782 = vmul.f32 %v711, %v763
  %v783 = vmul.f32 %v712, %v763
  %v784 = vmul.f32 %v713, %v763
  %v785 = vmul.f32 %v714, %v763
  %v786 = vmul.f32 %v715, %v763
  %v787 = vmul.f32 %v716, %v763
  %v788 = vmul.f32 %v717, %v763
  %v789 = vmul.f32 %v718, %v763
  %v790 = vmul.f32 %v719, %v763
  %v791 = vmul.f32 %v720, %v763
  %v792 = vmul.f32 %v721, %v763
  %v793 = vmul.f32 %v722, %v763
  %v794 = vmul.f32 %v723, %v763
  %v795 = vmul.f32 %v724, %v763
  %v796 = vmul.f32 %v725, %v763
  %v797 = vmul.f32 %v726, %v763
  %v798 = vmul.f32 %v727, %v763
  %v799 = vmul.f32 %v728, %v763
  %v800 = vmul.f32 %v729, %v763
  %v801 = vmul.f32 %v730, %v763
  %v802 = vmul.f32 %v731, %v763
  %v803 = vmul.f32 %v732, %v763
  %v804 = vmul.f32 %v733, %v763
  %v805 = vmul.f32 %v734, %v763
  %v806 = vmul.f32 %v735, %v763
  %v807 = vmul.f32 %v736, %v763
  %v808 = vmul.f32 %v737, %v763
  %v809 = vmul.f32 %v738, %v763
  %v810 = vmul.f32 %v739, %v763
  %v811 = vmul.f32 %v740, %v763
  %v812 = vmul.f32 %v741, %v763
  %v813 = vmul.f32 %v742, %v763
  %v814 = vmul.f32 %v743, %v763
  %v815 = vmul.f32 %v744, %v763
  %v816 = vmul.f32 %v745, %v763
  %v817 = vmul.f32 %v746, %v763
  %v818 = vmul.f32 %v747, %v763
  %v819 = vmul.f32 %v748, %v763
  %v820 = vmul.f32 %v749, %v763
  %v821 = vmul.f32 %v750, %v763
  %v822 = vmul.f32 %v751, %v763
  %v823 = vmul.f32 %v752, %v763
  %v824 = vmul.f32 %v753, %v763
  %v825 = vmul.f32 %v754, %v763
  %v826 = vmul.f32 %v755, %v763
  %v827 = vmul.f32 %v756, %v763
  %v828 = vmul.f32 %v757, %v763
  %v829 = vld [vmem:[%s4] sm:$0x1]
  %v831 = vlaneseq
  %v832 = vshrl.u32 %v831, 7
  %v833 = vsub.s32 0, %v832
  %v834 = vrot.slane %v829, %v833
  %v836 = vadd.f32 %v765, %v834
  %v837 = vadd.f32 %v766, %v834
  %v838 = vadd.f32 %v767, %v834
  %v839 = vadd.f32 %v768, %v834
  %v840 = vadd.f32 %v769, %v834
  %v841 = vadd.f32 %v770, %v834
  %v842 = vadd.f32 %v771, %v834
  %v843 = vadd.f32 %v772, %v834
  %v844 = vadd.f32 %v773, %v834
  %v845 = vadd.f32 %v774, %v834
  %v846 = vadd.f32 %v775, %v834
  %v847 = vadd.f32 %v776, %v834
  %v848 = vadd.f32 %v777, %v834
  %v849 = vadd.f32 %v778, %v834
  %v850 = vadd.f32 %v779, %v834
  %v851 = vadd.f32 %v780, %v834
  %v852 = vadd.f32 %v781, %v834
  %v853 = vadd.f32 %v782, %v834
  %v854 = vadd.f32 %v783, %v834
  %v855 = vadd.f32 %v784, %v834
  %v856 = vadd.f32 %v785, %v834
  %v857 = vadd.f32 %v786, %v834
  %v858 = vadd.f32 %v787, %v834
  %v859 = vadd.f32 %v788, %v834
  %v860 = vadd.f32 %v789, %v834
  %v861 = vadd.f32 %v790, %v834
  %v862 = vadd.f32 %v791, %v834
  %v863 = vadd.f32 %v792, %v834
  %v864 = vadd.f32 %v793, %v834
  %v865 = vadd.f32 %v794, %v834
  %v866 = vadd.f32 %v795, %v834
  %v867 = vadd.f32 %v796, %v834
  %v868 = vadd.f32 %v797, %v834
  %v869 = vadd.f32 %v798, %v834
  %v870 = vadd.f32 %v799, %v834
  %v871 = vadd.f32 %v800, %v834
  %v872 = vadd.f32 %v801, %v834
  %v873 = vadd.f32 %v802, %v834
  %v874 = vadd.f32 %v803, %v834
  %v875 = vadd.f32 %v804, %v834
  %v876 = vadd.f32 %v805, %v834
  %v877 = vadd.f32 %v806, %v834
  %v878 = vadd.f32 %v807, %v834
  %v879 = vadd.f32 %v808, %v834
  %v880 = vadd.f32 %v809, %v834
  %v881 = vadd.f32 %v810, %v834
  %v882 = vadd.f32 %v811, %v834
  %v883 = vadd.f32 %v812, %v834
  %v884 = vadd.f32 %v813, %v834
  %v885 = vadd.f32 %v814, %v834
  %v886 = vadd.f32 %v815, %v834
  %v887 = vadd.f32 %v816, %v834
  %v888 = vadd.f32 %v817, %v834
  %v889 = vadd.f32 %v818, %v834
  %v890 = vadd.f32 %v819, %v834
  %v891 = vadd.f32 %v820, %v834
  %v892 = vadd.f32 %v821, %v834
  %v893 = vadd.f32 %v822, %v834
  %v894 = vadd.f32 %v823, %v834
  %v895 = vadd.f32 %v824, %v834
  %v896 = vadd.f32 %v825, %v834
  %v897 = vadd.f32 %v826, %v834
  %v898 = vadd.f32 %v827, %v834
  %v899 = vadd.f32 %v828, %v834
  %v900 = vadd.f32 %v836, %v376
  %v901 = vadd.f32 %v837, %v379
  %v902 = vadd.f32 %v838, %v384
  %v903 = vadd.f32 %v839, %v387
  %v904 = vadd.f32 %v840, %v392
  %v905 = vadd.f32 %v841, %v395
  %v906 = vadd.f32 %v842, %v400
  %v907 = vadd.f32 %v843, %v403
  %v908 = vadd.f32 %v844, %v408
  %v909 = vadd.f32 %v845, %v411
  %v910 = vadd.f32 %v846, %v416
  %v911 = vadd.f32 %v847, %v419
  %v912 = vadd.f32 %v848, %v424
  %v913 = vadd.f32 %v849, %v427
  %v914 = vadd.f32 %v850, %v432
  %v915 = vadd.f32 %v851, %v435
  %v916 = vadd.f32 %v852, %v440
  %v917 = vadd.f32 %v853, %v443
  %v918 = vadd.f32 %v854, %v448
  %v919 = vadd.f32 %v855, %v451
  %v920 = vadd.f32 %v856, %v456
  %v921 = vadd.f32 %v857, %v459
  %v922 = vadd.f32 %v858, %v464
  %v923 = vadd.f32 %v859, %v467
  %v924 = vadd.f32 %v860, %v472
  %v925 = vadd.f32 %v861, %v475
  %v926 = vadd.f32 %v862, %v480
  %v927 = vadd.f32 %v863, %v483
  %v928 = vadd.f32 %v864, %v488
  %v929 = vadd.f32 %v865, %v491
  %v930 = vadd.f32 %v866, %v496
  %v931 = vadd.f32 %v867, %v499
  %v932 = vadd.f32 %v868, %v504
  %v933 = vadd.f32 %v869, %v507
  %v934 = vadd.f32 %v870, %v512
  %v935 = vadd.f32 %v871, %v515
  %v936 = vadd.f32 %v872, %v520
  %v937 = vadd.f32 %v873, %v523
  %v938 = vadd.f32 %v874, %v528
  %v939 = vadd.f32 %v875, %v531
  %v940 = vadd.f32 %v876, %v536
  %v941 = vadd.f32 %v877, %v539
  %v942 = vadd.f32 %v878, %v544
  %v943 = vadd.f32 %v879, %v547
  %v944 = vadd.f32 %v880, %v552
  %v945 = vadd.f32 %v881, %v555
  %v946 = vadd.f32 %v882, %v560
  %v947 = vadd.f32 %v883, %v563
  %v948 = vadd.f32 %v884, %v568
  %v949 = vadd.f32 %v885, %v571
  %v950 = vadd.f32 %v886, %v576
  %v951 = vadd.f32 %v887, %v579
  %v952 = vadd.f32 %v888, %v584
  %v953 = vadd.f32 %v889, %v587
  %v954 = vadd.f32 %v890, %v592
  %v955 = vadd.f32 %v891, %v595
  %v956 = vadd.f32 %v892, %v600
  %v957 = vadd.f32 %v893, %v603
  %v958 = vadd.f32 %v894, %v608
  %v959 = vadd.f32 %v895, %v611
  %v960 = vadd.f32 %v896, %v616
  %v961 = vadd.f32 %v897, %v619
  %v962 = vadd.f32 %v898, %v624
  %v963 = vadd.f32 %v899, %v627
  %v964 = vmax.f32 %v900, 0.0
  %v965 = vmax.f32 %v901, 0.0
  %v966 = vmax.f32 %v902, 0.0
  %v967 = vmax.f32 %v903, 0.0
  %v968 = vmax.f32 %v904, 0.0
  %v969 = vmax.f32 %v905, 0.0
  %v970 = vmax.f32 %v906, 0.0
  %v971 = vmax.f32 %v907, 0.0
  %v972 = vmax.f32 %v908, 0.0
  %v973 = vmax.f32 %v909, 0.0
  %v974 = vmax.f32 %v910, 0.0
  %v975 = vmax.f32 %v911, 0.0
  %v976 = vmax.f32 %v912, 0.0
  %v977 = vmax.f32 %v913, 0.0
  %v978 = vmax.f32 %v914, 0.0
  %v979 = vmax.f32 %v915, 0.0
  %v980 = vmax.f32 %v916, 0.0
  %v981 = vmax.f32 %v917, 0.0
  %v982 = vmax.f32 %v918, 0.0
  %v983 = vmax.f32 %v919, 0.0
  %v984 = vmax.f32 %v920, 0.0
  %v985 = vmax.f32 %v921, 0.0
  %v986 = vmax.f32 %v922, 0.0
  %v987 = vmax.f32 %v923, 0.0
  %v988 = vmax.f32 %v924, 0.0
  %v989 = vmax.f32 %v925, 0.0
  %v990 = vmax.f32 %v926, 0.0
  %v991 = vmax.f32 %v927, 0.0
  %v992 = vmax.f32 %v928, 0.0
  %v993 = vmax.f32 %v929, 0.0
  %v994 = vmax.f32 %v930, 0.0
  %v995 = vmax.f32 %v931, 0.0
  %v996 = vmax.f32 %v932, 0.0
  %v997 = vmax.f32 %v933, 0.0
  %v998 = vmax.f32 %v934, 0.0
  %v999 = vmax.f32 %v935, 0.0
  %v1000 = vmax.f32 %v936, 0.0
  %v1001 = vmax.f32 %v937, 0.0
  %v1002 = vmax.f32 %v938, 0.0
  %v1003 = vmax.f32 %v939, 0.0
  %v1004 = vmax.f32 %v940, 0.0
  %v1005 = vmax.f32 %v941, 0.0
  %v1006 = vmax.f32 %v942, 0.0
  %v1007 = vmax.f32 %v943, 0.0
  %v1008 = vmax.f32 %v944, 0.0
  %v1009 = vmax.f32 %v945, 0.0
  %v1010 = vmax.f32 %v946, 0.0
  %v1011 = vmax.f32 %v947, 0.0
  %v1012 = vmax.f32 %v948, 0.0
  %v1013 = vmax.f32 %v949, 0.0
  %v1014 = vmax.f32 %v950, 0.0
  %v1015 = vmax.f32 %v951, 0.0
  %v1016 = vmax.f32 %v952, 0.0
  %v1017 = vmax.f32 %v953, 0.0
  %v1018 = vmax.f32 %v954, 0.0
  %v1019 = vmax.f32 %v955, 0.0
  %v1020 = vmax.f32 %v956, 0.0
  %v1021 = vmax.f32 %v957, 0.0
  %v1022 = vmax.f32 %v958, 0.0
  %v1023 = vmax.f32 %v959, 0.0
  %v1024 = vmax.f32 %v960, 0.0
  %v1025 = vmax.f32 %v961, 0.0
  %v1026 = vmax.f32 %v962, 0.0
  %v1027 = vmax.f32 %v963, 0.0
  %1028 = vst [vmem:[%s5] sm:$0xff] %v964
  %1029 = vst [vmem:[%s5 + $0x8] sm:$0xff] %v965
  %1030 = vst [vmem:[%s5 + $0x10] sm:$0xff] %v966
  %1031 = vst [vmem:[%s5 + $0x18] sm:$0xff] %v967
  %1032 = vst [vmem:[%s5 + $0x20] sm:$0xff] %v968
  %1033 = vst [vmem:[%s5 + $0x28] sm:$0xff] %v969
  %1034 = vst [vmem:[%s5 + $0x30] sm:$0xff] %v970
  %1035 = vst [vmem:[%s5 + $0x38] sm:$0xff] %v971
  %1036 = vst [vmem:[%s5 + $0x40] sm:$0xff] %v972
  %1037 = vst [vmem:[%s5 + $0x48] sm:$0xff] %v973
  %1038 = vst [vmem:[%s5 + $0x50] sm:$0xff] %v974
  %1039 = vst [vmem:[%s5 + $0x58] sm:$0xff] %v975
  %1040 = vst [vmem:[%s5 + $0x60] sm:$0xff] %v976
  %1041 = vst [vmem:[%s5 + $0x68] sm:$0xff] %v977
  %1042 = vst [vmem:[%s5 + $0x70] sm:$0xff] %v978
  %1043 = vst [vmem:[%s5 + $0x78] sm:$0xff] %v979
  %1044 = vst [vmem:[%s5 + $0x80] sm:$0xff] %v980
  %1045 = vst [vmem:[%s5 + $0x88] sm:$0xff] %v981
  %1046 = vst [vmem:[%s5 + $0x90] sm:$0xff] %v982
  %1047 = vst [vmem:[%s5 + $0x98] sm:$0xff] %v983
  %1048 = vst [vmem:[%s5 + $0xa0] sm:$0xff] %v984
  %1049 = vst [vmem:[%s5 + $0xa8] sm:$0xff] %v985
  %1050 = vst [vmem:[%s5 + $0xb0] sm:$0xff] %v986
  %1051 = vst [vmem:[%s5 + $0xb8] sm:$0xff] %v987
  %1052 = vst [vmem:[%s5 + $0xc0] sm:$0xff] %v988
  %1053 = vst [vmem:[%s5 + $0xc8] sm:$0xff] %v989
  %1054 = vst [vmem:[%s5 + $0xd0] sm:$0xff] %v990
  %1055 = vst [vmem:[%s5 + $0xd8] sm:$0xff] %v991
  %1056 = vst [vmem:[%s5 + $0xe0] sm:$0xff] %v992
  %1057 = vst [vmem:[%s5 + $0xe8] sm:$0xff] %v993
  %1058 = vst [vmem:[%s5 + $0xf0] sm:$0xff] %v994
  %1059 = vst [vmem:[%s5 + $0xf8] sm:$0xff] %v995
  %1060 = vst [vmem:[%s5 + $0x100] sm:$0xff] %v996
  %1061 = vst [vmem:[%s5 + $0x108] sm:$0xff] %v997
  %1062 = vst [vmem:[%s5 + $0x110] sm:$0xff] %v998
  %1063 = vst [vmem:[%s5 + $0x118] sm:$0xff] %v999
  %1064 = vst [vmem:[%s5 + $0x120] sm:$0xff] %v1000
  %1065 = vst [vmem:[%s5 + $0x128] sm:$0xff] %v1001
  %1066 = vst [vmem:[%s5 + $0x130] sm:$0xff] %v1002
  %1067 = vst [vmem:[%s5 + $0x138] sm:$0xff] %v1003
  %1068 = vst [vmem:[%s5 + $0x140] sm:$0xff] %v1004
  %1069 = vst [vmem:[%s5 + $0x148] sm:$0xff] %v1005
  %1070 = vst [vmem:[%s5 + $0x150] sm:$0xff] %v1006
  %1071 = vst [vmem:[%s5 + $0x158] sm:$0xff] %v1007
  %1072 = vst [vmem:[%s5 + $0x160] sm:$0xff] %v1008
  %1073 = vst [vmem:[%s5 + $0x168] sm:$0xff] %v1009
  %1074 = vst [vmem:[%s5 + $0x170] sm:$0xff] %v1010
  %1075 = vst [vmem:[%s5 + $0x178] sm:$0xff] %v1011
  %1076 = vst [vmem:[%s5 + $0x180] sm:$0xff] %v1012
  %1077 = vst [vmem:[%s5 + $0x188] sm:$0xff] %v1013
  %1078 = vst [vmem:[%s5 + $0x190] sm:$0xff] %v1014
  %1079 = vst [vmem:[%s5 + $0x198] sm:$0xff] %v1015
  %1080 = vst [vmem:[%s5 + $0x1a0] sm:$0xff] %v1016
  %1081 = vst [vmem:[%s5 + $0x1a8] sm:$0xff] %v1017
  %1082 = vst [vmem:[%s5 + $0x1b0] sm:$0xff] %v1018
  %1083 = vst [vmem:[%s5 + $0x1b8] sm:$0xff] %v1019
  %1084 = vst [vmem:[%s5 + $0x1c0] sm:$0xff] %v1020
  %1085 = vst [vmem:[%s5 + $0x1c8] sm:$0xff] %v1021
  %1086 = vst [vmem:[%s5 + $0x1d0] sm:$0xff] %v1022
  %1087 = vst [vmem:[%s5 + $0x1d8] sm:$0xff] %v1023
  %1088 = vst [vmem:[%s5 + $0x1e0] sm:$0xff] %v1024
  %1089 = vst [vmem:[%s5 + $0x1e8] sm:$0xff] %v1025
  %1090 = vst [vmem:[%s5 + $0x1f0] sm:$0xff] %v1026
  %1091 = vst [vmem:[%s5 + $0x1f8] sm:$0xff] %v1027
  // Predicated region
  $region22: #{rer_basic_block_v2.7} parent=0 // pred_check
    _
  $region23: #{rer_basic_block_v2.7} parent=0 // pred_check_branch
    %1093 = sbr.rel (0) target = $region25
  $region24: #{rer_basic_block_v2.7} parent=0 // pred_region
    _
  $region25: #{rer_basic_block_v2.7} parent=0 // pred_fallthru
    _
  // Predicated region
  $region26: #{rer_basic_block_v2.7} parent=0 // pred_check
    _
  $region27: #{rer_basic_block_v2.7} parent=0 // pred_check_branch
    %1095 = sbr.rel (0) target = $region29
  $region28: #{rer_basic_block_v2.7} parent=0 // pred_region
    _
  $region29: #{rer_basic_block_v2.7} parent=0 // pred_fallthru
    _

// kernel: rer_basic_block_v2.5
$region0: #{rer_basic_block_v2.5}
  #allocation0 [shape = 'u32[]', space=smem, size = 0x4, offset = 0x4, fixed_abs, tag = 'smem constant byte address 0x4 - core index']
  #allocation1 [shape = 'u32[144,128]{1,0:T(1,128)}', space=vmem, size = 0x12000, scoped, tag = 'internal scratch']
  %s0 = inlined_call_operand.vmem [shape: bf16[2,16,16,128], index: 0, kind: input, shape index: {}]
  %s1 = inlined_call_operand.vmem [shape: bf16[2,16,16,128], index: 1, kind: input, shape index: {}]
  %s2 = inlined_call_operand.vmem [shape: bf16[128,128], index: 2, kind: input, shape index: {}]
  %s3 = inlined_call_operand.vmem [shape: f32[1,128], index: 3, kind: input, shape index: {}]
  %s4 = inlined_call_operand.vmem [shape: f32[1,128], index: 4, kind: input, shape index: {}]
  %s5 = inlined_call_operand.vmem [shape: bf16[2,16,16,128], index: 5, kind: output, shape index: {}]
  %s6 = sld [smem:[#allocation0]]
  $region30: #{rer_basic_block_v2.5} parent=0
    _
  %s8 = ssub.s32 1, %s6
  %s9 = scalar_select 0, %s8, %s6
  // Predicated region
  $region2: #{rer_basic_block_v2.5} parent=0 // pred_check
    _
  $region3: #{rer_basic_block_v2.5} parent=0 // pred_check_branch
    %11 = sbr.rel (0) target = $region5
  $region4: #{rer_basic_block_v2.5} parent=0 // pred_region
    _
  $region5: #{rer_basic_block_v2.5} parent=0 // pred_fallthru
    _
  // Predicated region
  $region6: #{rer_basic_block_v2.5} parent=0 // pred_check
    _
  $region7: #{rer_basic_block_v2.5} parent=0 // pred_check_branch
    %13 = sbr.rel (0) target = $region9
  $region8: #{rer_basic_block_v2.5} parent=0 // pred_region
    _
  $region9: #{rer_basic_block_v2.5} parent=0 // pred_fallthru
    _
  // Predicated region
  $region10: #{rer_basic_block_v2.5} parent=0 // pred_check
    _
  $region11: #{rer_basic_block_v2.5} parent=0 // pred_check_branch
    %15 = sbr.rel (0) target = $region13
  $region12: #{rer_basic_block_v2.5} parent=0 // pred_region
    _
  $region13: #{rer_basic_block_v2.5} parent=0 // pred_fallthru
    _
  // Predicated region
  $region14: #{rer_basic_block_v2.5} parent=0 // pred_check
    _
  $region15: #{rer_basic_block_v2.5} parent=0 // pred_check_branch
    %17 = sbr.rel (0) target = $region17
  $region16: #{rer_basic_block_v2.5} parent=0 // pred_region
    _
  $region17: #{rer_basic_block_v2.5} parent=0 // pred_fallthru
    _
  // Predicated region
  $region18: #{rer_basic_block_v2.5} parent=0 // pred_check
    _
  $region19: #{rer_basic_block_v2.5} parent=0 // pred_check_branch
    %19 = sbr.rel (0) target = $region21
  $region20: #{rer_basic_block_v2.5} parent=0 // pred_region
    _
  $region21: #{rer_basic_block_v2.5} parent=0 // pred_fallthru
    _
  %v21 = vld [vmem:[%s1] sm:$0xf]
  %v22 = vld [vmem:[%s1 + $0x4] sm:$0xf]
  %v23 = vld [vmem:[%s1 + $0x8] sm:$0xf]
  %v24 = vld [vmem:[%s1 + $0xc] sm:$0xf]
  %v25 = vld [vmem:[%s1 + $0x10] sm:$0xf]
  %v26 = vld [vmem:[%s1 + $0x14] sm:$0xf]
  %v27 = vld [vmem:[%s1 + $0x18] sm:$0xf]
  %v28 = vld [vmem:[%s1 + $0x1c] sm:$0xf]
  %v29 = vld [vmem:[%s1 + $0x20] sm:$0xf]
  %v30 = vld [vmem:[%s1 + $0x24] sm:$0xf]
  %v31 = vld [vmem:[%s1 + $0x28] sm:$0xf]
  %v32 = vld [vmem:[%s1 + $0x2c] sm:$0xf]
  %v33 = vld [vmem:[%s1 + $0x30] sm:$0xf]
  %v34 = vld [vmem:[%s1 + $0x34] sm:$0xf]
  %v35 = vld [vmem:[%s1 + $0x38] sm:$0xf]
  %v36 = vld [vmem:[%s1 + $0x3c] sm:$0xf]
  %v37 = vld [vmem:[%s1 + $0x40] sm:$0xf]
  %v38 = vld [vmem:[%s1 + $0x44] sm:$0xf]
  %v39 = vld [vmem:[%s1 + $0x48] sm:$0xf]
  %v40 = vld [vmem:[%s1 + $0x4c] sm:$0xf]
  %v41 = vld [vmem:[%s1 + $0x50] sm:$0xf]
  %v42 = vld [vmem:[%s1 + $0x54] sm:$0xf]
  %v43 = vld [vmem:[%s1 + $0x58] sm:$0xf]
  %v44 = vld [vmem:[%s1 + $0x5c] sm:$0xf]
  %v45 = vld [vmem:[%s1 + $0x60] sm:$0xf]
  %v46 = vld [vmem:[%s1 + $0x64] sm:$0xf]
  %v47 = vld [vmem:[%s1 + $0x68] sm:$0xf]
  %v48 = vld [vmem:[%s1 + $0x6c] sm:$0xf]
  %v49 = vld [vmem:[%s1 + $0x70] sm:$0xf]
  %v50 = vld [vmem:[%s1 + $0x74] sm:$0xf]
  %v51 = vld [vmem:[%s1 + $0x78] sm:$0xf]
  %v52 = vld [vmem:[%s1 + $0x7c] sm:$0xf]
  %v53 = vld [vmem:[%s1 + $0x80] sm:$0xf]
  %v54 = vld [vmem:[%s1 + $0x84] sm:$0xf]
  %v55 = vld [vmem:[%s1 + $0x88] sm:$0xf]
  %v56 = vld [vmem:[%s1 + $0x8c] sm:$0xf]
  %v57 = vld [vmem:[%s1 + $0x90] sm:$0xf]
  %v58 = vld [vmem:[%s1 + $0x94] sm:$0xf]
  %v59 = vld [vmem:[%s1 + $0x98] sm:$0xf]
  %v60 = vld [vmem:[%s1 + $0x9c] sm:$0xf]
  %v61 = vld [vmem:[%s1 + $0xa0] sm:$0xf]
  %v62 = vld [vmem:[%s1 + $0xa4] sm:$0xf]
  %v63 = vld [vmem:[%s1 + $0xa8] sm:$0xf]
  %v64 = vld [vmem:[%s1 + $0xac] sm:$0xf]
  %v65 = vld [vmem:[%s1 + $0xb0] sm:$0xf]
  %v66 = vld [vmem:[%s1 + $0xb4] sm:$0xf]
  %v67 = vld [vmem:[%s1 + $0xb8] sm:$0xf]
  %v68 = vld [vmem:[%s1 + $0xbc] sm:$0xf]
  %v69 = vld [vmem:[%s1 + $0xc0] sm:$0xf]
  %v70 = vld [vmem:[%s1 + $0xc4] sm:$0xf]
  %v71 = vld [vmem:[%s1 + $0xc8] sm:$0xf]
  %v72 = vld [vmem:[%s1 + $0xcc] sm:$0xf]
  %v73 = vld [vmem:[%s1 + $0xd0] sm:$0xf]
  %v74 = vld [vmem:[%s1 + $0xd4] sm:$0xf]
  %v75 = vld [vmem:[%s1 + $0xd8] sm:$0xf]
  %v76 = vld [vmem:[%s1 + $0xdc] sm:$0xf]
  %v77 = vld [vmem:[%s1 + $0xe0] sm:$0xf]
  %v78 = vld [vmem:[%s1 + $0xe4] sm:$0xf]
  %v79 = vld [vmem:[%s1 + $0xe8] sm:$0xf]
  %v80 = vld [vmem:[%s1 + $0xec] sm:$0xf]
  %v81 = vld [vmem:[%s1 + $0xf0] sm:$0xf]
  %v82 = vld [vmem:[%s1 + $0xf4] sm:$0xf]
  %v83 = vld [vmem:[%s1 + $0xf8] sm:$0xf]
  %v84 = vld [vmem:[%s1 + $0xfc] sm:$0xf]
  %v85 = vld [vmem:[%s2] sm:$0xf]
  %v86 = vld [vmem:[%s2 + $0x4] sm:$0xf]
  %v87 = vld [vmem:[%s2 + $0x8] sm:$0xf]
  %v88 = vld [vmem:[%s2 + $0xc] sm:$0xf]
  %v89 = vld [vmem:[%s2 + $0x10] sm:$0xf]
  %v90 = vld [vmem:[%s2 + $0x14] sm:$0xf]
  %v91 = vld [vmem:[%s2 + $0x18] sm:$0xf]
  %v92 = vld [vmem:[%s2 + $0x1c] sm:$0xf]
  %v93 = vld [vmem:[%s2 + $0x20] sm:$0xf]
  %v94 = vld [vmem:[%s2 + $0x24] sm:$0xf]
  %v95 = vld [vmem:[%s2 + $0x28] sm:$0xf]
  %v96 = vld [vmem:[%s2 + $0x2c] sm:$0xf]
  %v97 = vld [vmem:[%s2 + $0x30] sm:$0xf]
  %v98 = vld [vmem:[%s2 + $0x34] sm:$0xf]
  %v99 = vld [vmem:[%s2 + $0x38] sm:$0xf]
  %v100 = vld [vmem:[%s2 + $0x3c] sm:$0xf]
  %v165 = vunpack.c.l.b16 %v21
  %v166 = vunpack.c.l.b16 %v22
  %v167 = vunpack.c.l.b16 %v23
  %v168 = vunpack.c.l.b16 %v24
  %v169 = vunpack.c.l.b16 %v25
  %v170 = vunpack.c.l.b16 %v26
  %v171 = vunpack.c.l.b16 %v27
  %v172 = vunpack.c.l.b16 %v28
  %v173 = vunpack.c.l.b16 %v29
  %v174 = vunpack.c.l.b16 %v30
  %v175 = vunpack.c.l.b16 %v31
  %v176 = vunpack.c.l.b16 %v32
  %v177 = vunpack.c.l.b16 %v33
  %v178 = vunpack.c.l.b16 %v34
  %v179 = vunpack.c.l.b16 %v35
  %v180 = vunpack.c.l.b16 %v36
  %v181 = vunpack.c.l.b16 %v37
  %v182 = vunpack.c.l.b16 %v38
  %v183 = vunpack.c.l.b16 %v39
  %v184 = vunpack.c.l.b16 %v40
  %v185 = vunpack.c.l.b16 %v41
  %v186 = vunpack.c.l.b16 %v42
  %v187 = vunpack.c.l.b16 %v43
  %v188 = vunpack.c.l.b16 %v44
  %v189 = vunpack.c.l.b16 %v45
  %v190 = vunpack.c.l.b16 %v46
  %v191 = vunpack.c.l.b16 %v47
  %v192 = vunpack.c.l.b16 %v48
  %v193 = vunpack.c.l.b16 %v49
  %v194 = vunpack.c.l.b16 %v50
  %v195 = vunpack.c.l.b16 %v51
  %v196 = vunpack.c.l.b16 %v52
  %v197 = vunpack.c.l.b16 %v53
  %v198 = vunpack.c.l.b16 %v54
  %v199 = vunpack.c.l.b16 %v55
  %v200 = vunpack.c.l.b16 %v56
  %v201 = vunpack.c.l.b16 %v57
  %v202 = vunpack.c.l.b16 %v58
  %v203 = vunpack.c.l.b16 %v59
  %v204 = vunpack.c.l.b16 %v60
  %v205 = vunpack.c.l.b16 %v61
  %v206 = vunpack.c.l.b16 %v62
  %v207 = vunpack.c.l.b16 %v63
  %v208 = vunpack.c.l.b16 %v64
  %v209 = vunpack.c.l.b16 %v65
  %v210 = vunpack.c.l.b16 %v66
  %v211 = vunpack.c.l.b16 %v67
  %v212 = vunpack.c.l.b16 %v68
  %v213 = vunpack.c.l.b16 %v69
  %v214 = vunpack.c.l.b16 %v70
  %v215 = vunpack.c.l.b16 %v71
  %v216 = vunpack.c.l.b16 %v72
  %v217 = vunpack.c.l.b16 %v73
  %v218 = vunpack.c.l.b16 %v74
  %v219 = vunpack.c.l.b16 %v75
  %v220 = vunpack.c.l.b16 %v76
  %v221 = vunpack.c.l.b16 %v77
  %v222 = vunpack.c.l.b16 %v78
  %v223 = vunpack.c.l.b16 %v79
  %v224 = vunpack.c.l.b16 %v80
  %v225 = vunpack.c.l.b16 %v81
  %v226 = vunpack.c.l.b16 %v82
  %v227 = vunpack.c.l.b16 %v83
  %v228 = vunpack.c.l.b16 %v84
  %v229 = vpack.c.b16 %v166, %v165
  %v230 = vpack.c.b16 %v168, %v167
  %v231 = vpack.c.b16 %v170, %v169
  %v232 = vpack.c.b16 %v172, %v171
  %v233 = vpack.c.b16 %v174, %v173
  %v234 = vpack.c.b16 %v176, %v175
  %v235 = vpack.c.b16 %v178, %v177
  %v236 = vpack.c.b16 %v180, %v179
  %v237 = vpack.c.b16 %v182, %v181
  %v238 = vpack.c.b16 %v184, %v183
  %v239 = vpack.c.b16 %v186, %v185
  %v240 = vpack.c.b16 %v188, %v187
  %v241 = vpack.c.b16 %v190, %v189
  %v242 = vpack.c.b16 %v192, %v191
  %v243 = vpack.c.b16 %v194, %v193
  %v244 = vpack.c.b16 %v196, %v195
  %v245 = vpack.c.b16 %v198, %v197
  %v246 = vpack.c.b16 %v200, %v199
  %v247 = vpack.c.b16 %v202, %v201
  %v248 = vpack.c.b16 %v204, %v203
  %v249 = vpack.c.b16 %v206, %v205
  %v250 = vpack.c.b16 %v208, %v207
  %v251 = vpack.c.b16 %v210, %v209
  %v252 = vpack.c.b16 %v212, %v211
  %v253 = vpack.c.b16 %v214, %v213
  %v254 = vpack.c.b16 %v216, %v215
  %v255 = vpack.c.b16 %v218, %v217
  %v256 = vpack.c.b16 %v220, %v219
  %v257 = vpack.c.b16 %v222, %v221
  %v258 = vpack.c.b16 %v224, %v223
  %v259 = vpack.c.b16 %v226, %v225
  %v260 = vpack.c.b16 %v228, %v227
  %v309 = vunpack.c.l.b16 %v85
  %v310 = vunpack.c.l.b16 %v86
  %v311 = vunpack.c.l.b16 %v87
  %v312 = vunpack.c.l.b16 %v88
  %v313 = vunpack.c.l.b16 %v89
  %v314 = vunpack.c.l.b16 %v90
  %v315 = vunpack.c.l.b16 %v91
  %v316 = vunpack.c.l.b16 %v92
  %v317 = vunpack.c.l.b16 %v93
  %v318 = vunpack.c.l.b16 %v94
  %v319 = vunpack.c.l.b16 %v95
  %v320 = vunpack.c.l.b16 %v96
  %v321 = vunpack.c.l.b16 %v97
  %v322 = vunpack.c.l.b16 %v98
  %v323 = vunpack.c.l.b16 %v99
  %v324 = vunpack.c.l.b16 %v100
  %v325 = vpack.c.b16 %v310, %v309
  %v326 = vpack.c.b16 %v312, %v311
  %v327 = vpack.c.b16 %v314, %v313
  %v328 = vpack.c.b16 %v316, %v315
  %v329 = vpack.c.b16 %v318, %v317
  %v330 = vpack.c.b16 %v320, %v319
  %v331 = vpack.c.b16 %v322, %v321
  %v332 = vpack.c.b16 %v324, %v323
  %341 = vmatprep.subr.bf16.mxu0 0
  %342 = vmatpush1.bf16.msra.mxu0 %v332
  %343 = vmatprep.subr.bf16.mxu0 0
  %344 = vmatpush1.bf16.msra.mxu0 %v331
  %345 = vmatprep.subr.bf16.mxu0 0
  %346 = vmatpush1.bf16.msra.mxu0 %v330
  %347 = vmatprep.subr.bf16.mxu0 0
  %348 = vmatpush1.bf16.msra.mxu0 %v329
  %349 = vmatprep.subr.bf16.mxu0 0
  %350 = vmatpush1.bf16.msra.mxu0 %v328
  %351 = vmatprep.subr.bf16.mxu0 0
  %352 = vmatpush1.bf16.msra.mxu0 %v327
  %353 = vmatprep.subr.bf16.mxu0 0
  %354 = vmatpush1.bf16.msra.mxu0 %v326
  %355 = vmatprep.subr.bf16.mxu0 0
  %356 = vmatpush1.bf16.msra.mxu0 %v325
  %357 = vmatprep.subr.bf16.mxu0 0
  %358 = vmatpush2.bf16.msra.mxu0 0
  %359 = vmatprep.subr.bf16.mxu0 0
  %360 = vmatpush2.bf16.msra.mxu0 0
  %361 = vmatprep.subr.bf16.mxu0 0
  %362 = vmatpush2.bf16.msra.mxu0 0
  %363 = vmatprep.subr.bf16.mxu0 0
  %364 = vmatpush2.bf16.msra.mxu0 0
  %365 = vmatprep.subr.bf16.mxu0 0
  %366 = vmatpush2.bf16.msra.mxu0 0
  %367 = vmatprep.subr.bf16.mxu0 0
  %368 = vmatpush2.bf16.msra.mxu0 0
  %369 = vmatprep.subr.bf16.mxu0 0
  %370 = vmatpush2.bf16.msra.mxu0 0
  %371 = vmatprep.subr.bf16.mxu0 0
  %372 = vmatpush2.bf16.msra.mxu0 0
  %373 = vmatprep.mubr.bf16.mxu0 0
  %374 = vmatmul.mubr.bf16.gmra.mxu0 %v229
  %v375 = vpop.f32.mrf.mxu0
  %v376 = vadd.f32 0.0, %v375
  %v377 = vpop.f32.mrf.mxu0
  %v378 = vpop.f32.mrf.mxu0
  %v379 = vadd.f32 0.0, %v378
  %v380 = vpop.f32.mrf.mxu0
  %381 = vmatprep.mubr.bf16.mxu0 0
  %382 = vmatmul.mubr.bf16.gmra.mxu0 %v230
  %v383 = vpop.f32.mrf.mxu0
  %v384 = vadd.f32 0.0, %v383
  %v385 = vpop.f32.mrf.mxu0
  %v386 = vpop.f32.mrf.mxu0
  %v387 = vadd.f32 0.0, %v386
  %v388 = vpop.f32.mrf.mxu0
  %389 = vmatprep.mubr.bf16.mxu0 0
  %390 = vmatmul.mubr.bf16.gmra.mxu0 %v231
  %v391 = vpop.f32.mrf.mxu0
  %v392 = vadd.f32 0.0, %v391
  %v393 = vpop.f32.mrf.mxu0
  %v394 = vpop.f32.mrf.mxu0
  %v395 = vadd.f32 0.0, %v394
  %v396 = vpop.f32.mrf.mxu0
  %397 = vmatprep.mubr.bf16.mxu0 0
  %398 = vmatmul.mubr.bf16.gmra.mxu0 %v232
  %v399 = vpop.f32.mrf.mxu0
  %v400 = vadd.f32 0.0, %v399
  %v401 = vpop.f32.mrf.mxu0
  %v402 = vpop.f32.mrf.mxu0
  %v403 = vadd.f32 0.0, %v402
  %v404 = vpop.f32.mrf.mxu0
  %405 = vmatprep.mubr.bf16.mxu0 0
  %406 = vmatmul.mubr.bf16.gmra.mxu0 %v233
  %v407 = vpop.f32.mrf.mxu0
  %v408 = vadd.f32 0.0, %v407
  %v409 = vpop.f32.mrf.mxu0
  %v410 = vpop.f32.mrf.mxu0
  %v411 = vadd.f32 0.0, %v410
  %v412 = vpop.f32.mrf.mxu0
  %413 = vmatprep.mubr.bf16.mxu0 0
  %414 = vmatmul.mubr.bf16.gmra.mxu0 %v234
  %v415 = vpop.f32.mrf.mxu0
  %v416 = vadd.f32 0.0, %v415
  %v417 = vpop.f32.mrf.mxu0
  %v418 = vpop.f32.mrf.mxu0
  %v419 = vadd.f32 0.0, %v418
  %v420 = vpop.f32.mrf.mxu0
  %421 = vmatprep.mubr.bf16.mxu0 0
  %422 = vmatmul.mubr.bf16.gmra.mxu0 %v235
  %v423 = vpop.f32.mrf.mxu0
  %v424 = vadd.f32 0.0, %v423
  %v425 = vpop.f32.mrf.mxu0
  %v426 = vpop.f32.mrf.mxu0
  %v427 = vadd.f32 0.0, %v426
  %v428 = vpop.f32.mrf.mxu0
  %429 = vmatprep.mubr.bf16.mxu0 0
  %430 = vmatmul.mubr.bf16.gmra.mxu0 %v236
  %v431 = vpop.f32.mrf.mxu0
  %v432 = vadd.f32 0.0, %v431
  %v433 = vpop.f32.mrf.mxu0
  %v434 = vpop.f32.mrf.mxu0
  %v435 = vadd.f32 0.0, %v434
  %v436 = vpop.f32.mrf.mxu0
  %437 = vmatprep.mubr.bf16.mxu0 0
  %438 = vmatmul.mubr.bf16.gmra.mxu0 %v237
  %v439 = vpop.f32.mrf.mxu0
  %v440 = vadd.f32 0.0, %v439
  %v441 = vpop.f32.mrf.mxu0
  %v442 = vpop.f32.mrf.mxu0
  %v443 = vadd.f32 0.0, %v442
  %v444 = vpop.f32.mrf.mxu0
  %445 = vmatprep.mubr.bf16.mxu0 0
  %446 = vmatmul.mubr.bf16.gmra.mxu0 %v238
  %v447 = vpop.f32.mrf.mxu0
  %v448 = vadd.f32 0.0, %v447
  %v449 = vpop.f32.mrf.mxu0
  %v450 = vpop.f32.mrf.mxu0
  %v451 = vadd.f32 0.0, %v450
  %v452 = vpop.f32.mrf.mxu0
  %453 = vmatprep.mubr.bf16.mxu0 0
  %454 = vmatmul.mubr.bf16.gmra.mxu0 %v239
  %v455 = vpop.f32.mrf.mxu0
  %v456 = vadd.f32 0.0, %v455
  %v457 = vpop.f32.mrf.mxu0
  %v458 = vpop.f32.mrf.mxu0
  %v459 = vadd.f32 0.0, %v458
  %v460 = vpop.f32.mrf.mxu0
  %461 = vmatprep.mubr.bf16.mxu0 0
  %462 = vmatmul.mubr.bf16.gmra.mxu0 %v240
  %v463 = vpop.f32.mrf.mxu0
  %v464 = vadd.f32 0.0, %v463
  %v465 = vpop.f32.mrf.mxu0
  %v466 = vpop.f32.mrf.mxu0
  %v467 = vadd.f32 0.0, %v466
  %v468 = vpop.f32.mrf.mxu0
  %469 = vmatprep.mubr.bf16.mxu0 0
  %470 = vmatmul.mubr.bf16.gmra.mxu0 %v241
  %v471 = vpop.f32.mrf.mxu0
  %v472 = vadd.f32 0.0, %v471
  %v473 = vpop.f32.mrf.mxu0
  %v474 = vpop.f32.mrf.mxu0
  %v475 = vadd.f32 0.0, %v474
  %v476 = vpop.f32.mrf.mxu0
  %477 = vmatprep.mubr.bf16.mxu0 0
  %478 = vmatmul.mubr.bf16.gmra.mxu0 %v242
  %v479 = vpop.f32.mrf.mxu0
  %v480 = vadd.f32 0.0, %v479
  %v481 = vpop.f32.mrf.mxu0
  %v482 = vpop.f32.mrf.mxu0
  %v483 = vadd.f32 0.0, %v482
  %v484 = vpop.f32.mrf.mxu0
  %485 = vmatprep.mubr.bf16.mxu0 0
  %486 = vmatmul.mubr.bf16.gmra.mxu0 %v243
  %v487 = vpop.f32.mrf.mxu0
  %v488 = vadd.f32 0.0, %v487
  %v489 = vpop.f32.mrf.mxu0
  %v490 = vpop.f32.mrf.mxu0
  %v491 = vadd.f32 0.0, %v490
  %v492 = vpop.f32.mrf.mxu0
  %493 = vmatprep.mubr.bf16.mxu0 0
  %494 = vmatmul.mubr.bf16.gmra.mxu0 %v244
  %v495 = vpop.f32.mrf.mxu0
  %v496 = vadd.f32 0.0, %v495
  %v497 = vpop.f32.mrf.mxu0
  %v498 = vpop.f32.mrf.mxu0
  %v499 = vadd.f32 0.0, %v498
  %v500 = vpop.f32.mrf.mxu0
  %501 = vmatprep.mubr.bf16.mxu0 0
  %502 = vmatmul.mubr.bf16.gmra.mxu0 %v245
  %v503 = vpop.f32.mrf.mxu0
  %v504 = vadd.f32 0.0, %v503
  %v505 = vpop.f32.mrf.mxu0
  %v506 = vpop.f32.mrf.mxu0
  %v507 = vadd.f32 0.0, %v506
  %v508 = vpop.f32.mrf.mxu0
  %509 = vmatprep.mubr.bf16.mxu0 0
  %510 = vmatmul.mubr.bf16.gmra.mxu0 %v246
  %v511 = vpop.f32.mrf.mxu0
  %v512 = vadd.f32 0.0, %v511
  %v513 = vpop.f32.mrf.mxu0
  %v514 = vpop.f32.mrf.mxu0
  %v515 = vadd.f32 0.0, %v514
  %v516 = vpop.f32.mrf.mxu0
  %517 = vmatprep.mubr.bf16.mxu0 0
  %518 = vmatmul.mubr.bf16.gmra.mxu0 %v247
  %v519 = vpop.f32.mrf.mxu0
  %v520 = vadd.f32 0.0, %v519
  %v521 = vpop.f32.mrf.mxu0
  %v522 = vpop.f32.mrf.mxu0
  %v523 = vadd.f32 0.0, %v522
  %v524 = vpop.f32.mrf.mxu0
  %525 = vmatprep.mubr.bf16.mxu0 0
  %526 = vmatmul.mubr.bf16.gmra.mxu0 %v248
  %v527 = vpop.f32.mrf.mxu0
  %v528 = vadd.f32 0.0, %v527
  %v529 = vpop.f32.mrf.mxu0
  %v530 = vpop.f32.mrf.mxu0
  %v531 = vadd.f32 0.0, %v530
  %v532 = vpop.f32.mrf.mxu0
  %533 = vmatprep.mubr.bf16.mxu0 0
  %534 = vmatmul.mubr.bf16.gmra.mxu0 %v249
  %v535 = vpop.f32.mrf.mxu0
  %v536 = vadd.f32 0.0, %v535
  %v537 = vpop.f32.mrf.mxu0
  %v538 = vpop.f32.mrf.mxu0
  %v539 = vadd.f32 0.0, %v538
  %v540 = vpop.f32.mrf.mxu0
  %541 = vmatprep.mubr.bf16.mxu0 0
  %542 = vmatmul.mubr.bf16.gmra.mxu0 %v250
  %v543 = vpop.f32.mrf.mxu0
  %v544 = vadd.f32 0.0, %v543
  %v545 = vpop.f32.mrf.mxu0
  %v546 = vpop.f32.mrf.mxu0
  %v547 = vadd.f32 0.0, %v546
  %v548 = vpop.f32.mrf.mxu0
  %549 = vmatprep.mubr.bf16.mxu0 0
  %550 = vmatmul.mubr.bf16.gmra.mxu0 %v251
  %v551 = vpop.f32.mrf.mxu0
  %v552 = vadd.f32 0.0, %v551
  %v553 = vpop.f32.mrf.mxu0
  %v554 = vpop.f32.mrf.mxu0
  %v555 = vadd.f32 0.0, %v554
  %v556 = vpop.f32.mrf.mxu0
  %557 = vmatprep.mubr.bf16.mxu0 0
  %558 = vmatmul.mubr.bf16.gmra.mxu0 %v252
  %v559 = vpop.f32.mrf.mxu0
  %v560 = vadd.f32 0.0, %v559
  %v561 = vpop.f32.mrf.mxu0
  %v562 = vpop.f32.mrf.mxu0
  %v563 = vadd.f32 0.0, %v562
  %v564 = vpop.f32.mrf.mxu0
  %565 = vmatprep.mubr.bf16.mxu0 0
  %566 = vmatmul.mubr.bf16.gmra.mxu0 %v253
  %v567 = vpop.f32.mrf.mxu0
  %v568 = vadd.f32 0.0, %v567
  %v569 = vpop.f32.mrf.mxu0
  %v570 = vpop.f32.mrf.mxu0
  %v571 = vadd.f32 0.0, %v570
  %v572 = vpop.f32.mrf.mxu0
  %573 = vmatprep.mubr.bf16.mxu0 0
  %574 = vmatmul.mubr.bf16.gmra.mxu0 %v254
  %v575 = vpop.f32.mrf.mxu0
  %v576 = vadd.f32 0.0, %v575
  %v577 = vpop.f32.mrf.mxu0
  %v578 = vpop.f32.mrf.mxu0
  %v579 = vadd.f32 0.0, %v578
  %v580 = vpop.f32.mrf.mxu0
  %581 = vmatprep.mubr.bf16.mxu0 0
  %582 = vmatmul.mubr.bf16.gmra.mxu0 %v255
  %v583 = vpop.f32.mrf.mxu0
  %v584 = vadd.f32 0.0, %v583
  %v585 = vpop.f32.mrf.mxu0
  %v586 = vpop.f32.mrf.mxu0
  %v587 = vadd.f32 0.0, %v586
  %v588 = vpop.f32.mrf.mxu0
  %589 = vmatprep.mubr.bf16.mxu0 0
  %590 = vmatmul.mubr.bf16.gmra.mxu0 %v256
  %v591 = vpop.f32.mrf.mxu0
  %v592 = vadd.f32 0.0, %v591
  %v593 = vpop.f32.mrf.mxu0
  %v594 = vpop.f32.mrf.mxu0
  %v595 = vadd.f32 0.0, %v594
  %v596 = vpop.f32.mrf.mxu0
  %597 = vmatprep.mubr.bf16.mxu0 0
  %598 = vmatmul.mubr.bf16.gmra.mxu0 %v257
  %v599 = vpop.f32.mrf.mxu0
  %v600 = vadd.f32 0.0, %v599
  %v601 = vpop.f32.mrf.mxu0
  %v602 = vpop.f32.mrf.mxu0
  %v603 = vadd.f32 0.0, %v602
  %v604 = vpop.f32.mrf.mxu0
  %605 = vmatprep.mubr.bf16.mxu0 0
  %606 = vmatmul.mubr.bf16.gmra.mxu0 %v258
  %v607 = vpop.f32.mrf.mxu0
  %v608 = vadd.f32 0.0, %v607
  %v609 = vpop.f32.mrf.mxu0
  %v610 = vpop.f32.mrf.mxu0
  %v611 = vadd.f32 0.0, %v610
  %v612 = vpop.f32.mrf.mxu0
  %613 = vmatprep.mubr.bf16.mxu0 0
  %614 = vmatmul.mubr.bf16.gmra.mxu0 %v259
  %v615 = vpop.f32.mrf.mxu0
  %v616 = vadd.f32 0.0, %v615
  %v617 = vpop.f32.mrf.mxu0
  %v618 = vpop.f32.mrf.mxu0
  %v619 = vadd.f32 0.0, %v618
  %v620 = vpop.f32.mrf.mxu0
  %621 = vmatprep.mubr.bf16.mxu0 0
  %622 = vmatmul.mubr.bf16.gmra.mxu0 %v260
  %v623 = vpop.f32.mrf.mxu0
  %v624 = vadd.f32 0.0, %v623
  %v625 = vpop.f32.mrf.mxu0
  %v626 = vpop.f32.mrf.mxu0
  %v627 = vadd.f32 0.0, %v626
  %v628 = vpop.f32.mrf.mxu0
  %629 = vdwg.mxu0
  %v630 = vld [vmem:[%s0] sm:$0xf]
  %v631 = vld [vmem:[%s0 + $0x4] sm:$0xf]
  %v632 = vld [vmem:[%s0 + $0x8] sm:$0xf]
  %v633 = vld [vmem:[%s0 + $0xc] sm:$0xf]
  %v634 = vld [vmem:[%s0 + $0x10] sm:$0xf]
  %v635 = vld [vmem:[%s0 + $0x14] sm:$0xf]
  %v636 = vld [vmem:[%s0 + $0x18] sm:$0xf]
  %v637 = vld [vmem:[%s0 + $0x1c] sm:$0xf]
  %v638 = vld [vmem:[%s0 + $0x20] sm:$0xf]
  %v639 = vld [vmem:[%s0 + $0x24] sm:$0xf]
  %v640 = vld [vmem:[%s0 + $0x28] sm:$0xf]
  %v641 = vld [vmem:[%s0 + $0x2c] sm:$0xf]
  %v642 = vld [vmem:[%s0 + $0x30] sm:$0xf]
  %v643 = vld [vmem:[%s0 + $0x34] sm:$0xf]
  %v644 = vld [vmem:[%s0 + $0x38] sm:$0xf]
  %v645 = vld [vmem:[%s0 + $0x3c] sm:$0xf]
  %v646 = vld [vmem:[%s0 + $0x40] sm:$0xf]
  %v647 = vld [vmem:[%s0 + $0x44] sm:$0xf]
  %v648 = vld [vmem:[%s0 + $0x48] sm:$0xf]
  %v649 = vld [vmem:[%s0 + $0x4c] sm:$0xf]
  %v650 = vld [vmem:[%s0 + $0x50] sm:$0xf]
  %v651 = vld [vmem:[%s0 + $0x54] sm:$0xf]
  %v652 = vld [vmem:[%s0 + $0x58] sm:$0xf]
  %v653 = vld [vmem:[%s0 + $0x5c] sm:$0xf]
  %v654 = vld [vmem:[%s0 + $0x60] sm:$0xf]
  %v655 = vld [vmem:[%s0 + $0x64] sm:$0xf]
  %v656 = vld [vmem:[%s0 + $0x68] sm:$0xf]
  %v657 = vld [vmem:[%s0 + $0x6c] sm:$0xf]
  %v658 = vld [vmem:[%s0 + $0x70] sm:$0xf]
  %v659 = vld [vmem:[%s0 + $0x74] sm:$0xf]
  %v660 = vld [vmem:[%s0 + $0x78] sm:$0xf]
  %v661 = vld [vmem:[%s0 + $0x7c] sm:$0xf]
  %v662 = vld [vmem:[%s0 + $0x80] sm:$0xf]
  %v663 = vld [vmem:[%s0 + $0x84] sm:$0xf]
  %v664 = vld [vmem:[%s0 + $0x88] sm:$0xf]
  %v665 = vld [vmem:[%s0 + $0x8c] sm:$0xf]
  %v666 = vld [vmem:[%s0 + $0x90] sm:$0xf]
  %v667 = vld [vmem:[%s0 + $0x94] sm:$0xf]
  %v668 = vld [vmem:[%s0 + $0x98] sm:$0xf]
  %v669 = vld [vmem:[%s0 + $0x9c] sm:$0xf]
  %v670 = vld [vmem:[%s0 + $0xa0] sm:$0xf]
  %v671 = vld [vmem:[%s0 + $0xa4] sm:$0xf]
  %v672 = vld [vmem:[%s0 + $0xa8] sm:$0xf]
  %v673 = vld [vmem:[%s0 + $0xac] sm:$0xf]
  %v674 = vld [vmem:[%s0 + $0xb0] sm:$0xf]
  %v675 = vld [vmem:[%s0 + $0xb4] sm:$0xf]
  %v676 = vld [vmem:[%s0 + $0xb8] sm:$0xf]
  %v677 = vld [vmem:[%s0 + $0xbc] sm:$0xf]
  %v678 = vld [vmem:[%s0 + $0xc0] sm:$0xf]
  %v679 = vld [vmem:[%s0 + $0xc4] sm:$0xf]
  %v680 = vld [vmem:[%s0 + $0xc8] sm:$0xf]
  %v681 = vld [vmem:[%s0 + $0xcc] sm:$0xf]
  %v682 = vld [vmem:[%s0 + $0xd0] sm:$0xf]
  %v683 = vld [vmem:[%s0 + $0xd4] sm:$0xf]
  %v684 = vld [vmem:[%s0 + $0xd8] sm:$0xf]
  %v685 = vld [vmem:[%s0 + $0xdc] sm:$0xf]
  %v686 = vld [vmem:[%s0 + $0xe0] sm:$0xf]
  %v687 = vld [vmem:[%s0 + $0xe4] sm:$0xf]
  %v688 = vld [vmem:[%s0 + $0xe8] sm:$0xf]
  %v689 = vld [vmem:[%s0 + $0xec] sm:$0xf]
  %v690 = vld [vmem:[%s0 + $0xf0] sm:$0xf]
  %v691 = vld [vmem:[%s0 + $0xf4] sm:$0xf]
  %v692 = vld [vmem:[%s0 + $0xf8] sm:$0xf]
  %v693 = vld [vmem:[%s0 + $0xfc] sm:$0xf]
  %v694 = vunpack.c.l.bf16 %v630
  %v695 = vunpack.c.l.bf16 %v631
  %v696 = vunpack.c.l.bf16 %v632
  %v697 = vunpack.c.l.bf16 %v633
  %v698 = vunpack.c.l.bf16 %v634
  %v699 = vunpack.c.l.bf16 %v635
  %v700 = vunpack.c.l.bf16 %v636
  %v701 = vunpack.c.l.bf16 %v637
  %v702 = vunpack.c.l.bf16 %v638
  %v703 = vunpack.c.l.bf16 %v639
  %v704 = vunpack.c.l.bf16 %v640
  %v705 = vunpack.c.l.bf16 %v641
  %v706 = vunpack.c.l.bf16 %v642
  %v707 = vunpack.c.l.bf16 %v643
  %v708 = vunpack.c.l.bf16 %v644
  %v709 = vunpack.c.l.bf16 %v645
  %v710 = vunpack.c.l.bf16 %v646
  %v711 = vunpack.c.l.bf16 %v647
  %v712 = vunpack.c.l.bf16 %v648
  %v713 = vunpack.c.l.bf16 %v649
  %v714 = vunpack.c.l.bf16 %v650
  %v715 = vunpack.c.l.bf16 %v651
  %v716 = vunpack.c.l.bf16 %v652
  %v717 = vunpack.c.l.bf16 %v653
  %v718 = vunpack.c.l.bf16 %v654
  %v719 = vunpack.c.l.bf16 %v655
  %v720 = vunpack.c.l.bf16 %v656
  %v721 = vunpack.c.l.bf16 %v657
  %v722 = vunpack.c.l.bf16 %v658
  %v723 = vunpack.c.l.bf16 %v659
  %v724 = vunpack.c.l.bf16 %v660
  %v725 = vunpack.c.l.bf16 %v661
  %v726 = vunpack.c.l.bf16 %v662
  %v727 = vunpack.c.l.bf16 %v663
  %v728 = vunpack.c.l.bf16 %v664
  %v729 = vunpack.c.l.bf16 %v665
  %v730 = vunpack.c.l.bf16 %v666
  %v731 = vunpack.c.l.bf16 %v667
  %v732 = vunpack.c.l.bf16 %v668
  %v733 = vunpack.c.l.bf16 %v669
  %v734 = vunpack.c.l.bf16 %v670
  %v735 = vunpack.c.l.bf16 %v671
  %v736 = vunpack.c.l.bf16 %v672
  %v737 = vunpack.c.l.bf16 %v673
  %v738 = vunpack.c.l.bf16 %v674
  %v739 = vunpack.c.l.bf16 %v675
  %v740 = vunpack.c.l.bf16 %v676
  %v741 = vunpack.c.l.bf16 %v677
  %v742 = vunpack.c.l.bf16 %v678
  %v743 = vunpack.c.l.bf16 %v679
  %v744 = vunpack.c.l.bf16 %v680
  %v745 = vunpack.c.l.bf16 %v681
  %v746 = vunpack.c.l.bf16 %v682
  %v747 = vunpack.c.l.bf16 %v683
  %v748 = vunpack.c.l.bf16 %v684
  %v749 = vunpack.c.l.bf16 %v685
  %v750 = vunpack.c.l.bf16 %v686
  %v751 = vunpack.c.l.bf16 %v687
  %v752 = vunpack.c.l.bf16 %v688
  %v753 = vunpack.c.l.bf16 %v689
  %v754 = vunpack.c.l.bf16 %v690
  %v755 = vunpack.c.l.bf16 %v691
  %v756 = vunpack.c.l.bf16 %v692
  %v757 = vunpack.c.l.bf16 %v693
  %v758 = vld [vmem:[%s3] sm:$0x1]
  %v760 = vlaneseq
  %v761 = vshrl.u32 %v760, 7
  %v762 = vsub.s32 0, %v761
  %v763 = vrot.slane %v758, %v762
  %v765 = vmul.f32 %v694, %v763
  %v766 = vmul.f32 %v695, %v763
  %v767 = vmul.f32 %v696, %v763
  %v768 = vmul.f32 %v697, %v763
  %v769 = vmul.f32 %v698, %v763
  %v770 = vmul.f32 %v699, %v763
  %v771 = vmul.f32 %v700, %v763
  %v772 = vmul.f32 %v701, %v763
  %v773 = vmul.f32 %v702, %v763
  %v774 = vmul.f32 %v703, %v763
  %v775 = vmul.f32 %v704, %v763
  %v776 = vmul.f32 %v705, %v763
  %v777 = vmul.f32 %v706, %v763
  %v778 = vmul.f32 %v707, %v763
  %v779 = vmul.f32 %v708, %v763
  %v780 = vmul.f32 %v709, %v763
  %v781 = vmul.f32 %v710, %v763
  %v782 = vmul.f32 %v711, %v763
  %v783 = vmul.f32 %v712, %v763
  %v784 = vmul.f32 %v713, %v763
  %v785 = vmul.f32 %v714, %v763
  %v786 = vmul.f32 %v715, %v763
  %v787 = vmul.f32 %v716, %v763
  %v788 = vmul.f32 %v717, %v763
  %v789 = vmul.f32 %v718, %v763
  %v790 = vmul.f32 %v719, %v763
  %v791 = vmul.f32 %v720, %v763
  %v792 = vmul.f32 %v721, %v763
  %v793 = vmul.f32 %v722, %v763
  %v794 = vmul.f32 %v723, %v763
  %v795 = vmul.f32 %v724, %v763
  %v796 = vmul.f32 %v725, %v763
  %v797 = vmul.f32 %v726, %v763
  %v798 = vmul.f32 %v727, %v763
  %v799 = vmul.f32 %v728, %v763
  %v800 = vmul.f32 %v729, %v763
  %v801 = vmul.f32 %v730, %v763
  %v802 = vmul.f32 %v731, %v763
  %v803 = vmul.f32 %v732, %v763
  %v804 = vmul.f32 %v733, %v763
  %v805 = vmul.f32 %v734, %v763
  %v806 = vmul.f32 %v735, %v763
  %v807 = vmul.f32 %v736, %v763
  %v808 = vmul.f32 %v737, %v763
  %v809 = vmul.f32 %v738, %v763
  %v810 = vmul.f32 %v739, %v763
  %v811 = vmul.f32 %v740, %v763
  %v812 = vmul.f32 %v741, %v763
  %v813 = vmul.f32 %v742, %v763
  %v814 = vmul.f32 %v743, %v763
  %v815 = vmul.f32 %v744, %v763
  %v816 = vmul.f32 %v745, %v763
  %v817 = vmul.f32 %v746, %v763
  %v818 = vmul.f32 %v747, %v763
  %v819 = vmul.f32 %v748, %v763
  %v820 = vmul.f32 %v749, %v763
  %v821 = vmul.f32 %v750, %v763
  %v822 = vmul.f32 %v751, %v763
  %v823 = vmul.f32 %v752, %v763
  %v824 = vmul.f32 %v753, %v763
  %v825 = vmul.f32 %v754, %v763
  %v826 = vmul.f32 %v755, %v763
  %v827 = vmul.f32 %v756, %v763
  %v828 = vmul.f32 %v757, %v763
  %v829 = vld [vmem:[%s4] sm:$0x1]
  %v831 = vlaneseq
  %v832 = vshrl.u32 %v831, 7
  %v833 = vsub.s32 0, %v832
  %v834 = vrot.slane %v829, %v833
  %v836 = vadd.f32 %v765, %v834
  %v837 = vadd.f32 %v766, %v834
  %v838 = vadd.f32 %v767, %v834
  %v839 = vadd.f32 %v768, %v834
  %v840 = vadd.f32 %v769, %v834
  %v841 = vadd.f32 %v770, %v834
  %v842 = vadd.f32 %v771, %v834
  %v843 = vadd.f32 %v772, %v834
  %v844 = vadd.f32 %v773, %v834
  %v845 = vadd.f32 %v774, %v834
  %v846 = vadd.f32 %v775, %v834
  %v847 = vadd.f32 %v776, %v834
  %v848 = vadd.f32 %v777, %v834
  %v849 = vadd.f32 %v778, %v834
  %v850 = vadd.f32 %v779, %v834
  %v851 = vadd.f32 %v780, %v834
  %v852 = vadd.f32 %v781, %v834
  %v853 = vadd.f32 %v782, %v834
  %v854 = vadd.f32 %v783, %v834
  %v855 = vadd.f32 %v784, %v834
  %v856 = vadd.f32 %v785, %v834
  %v857 = vadd.f32 %v786, %v834
  %v858 = vadd.f32 %v787, %v834
  %v859 = vadd.f32 %v788, %v834
  %v860 = vadd.f32 %v789, %v834
  %v861 = vadd.f32 %v790, %v834
  %v862 = vadd.f32 %v791, %v834
  %v863 = vadd.f32 %v792, %v834
  %v864 = vadd.f32 %v793, %v834
  %v865 = vadd.f32 %v794, %v834
  %v866 = vadd.f32 %v795, %v834
  %v867 = vadd.f32 %v796, %v834
  %v868 = vadd.f32 %v797, %v834
  %v869 = vadd.f32 %v798, %v834
  %v870 = vadd.f32 %v799, %v834
  %v871 = vadd.f32 %v800, %v834
  %v872 = vadd.f32 %v801, %v834
  %v873 = vadd.f32 %v802, %v834
  %v874 = vadd.f32 %v803, %v834
  %v875 = vadd.f32 %v804, %v834
  %v876 = vadd.f32 %v805, %v834
  %v877 = vadd.f32 %v806, %v834
  %v878 = vadd.f32 %v807, %v834
  %v879 = vadd.f32 %v808, %v834
  %v880 = vadd.f32 %v809, %v834
  %v881 = vadd.f32 %v810, %v834
  %v882 = vadd.f32 %v811, %v834
  %v883 = vadd.f32 %v812, %v834
  %v884 = vadd.f32 %v813, %v834
  %v885 = vadd.f32 %v814, %v834
  %v886 = vadd.f32 %v815, %v834
  %v887 = vadd.f32 %v816, %v834
  %v888 = vadd.f32 %v817, %v834
  %v889 = vadd.f32 %v818, %v834
  %v890 = vadd.f32 %v819, %v834
  %v891 = vadd.f32 %v820, %v834
  %v892 = vadd.f32 %v821, %v834
  %v893 = vadd.f32 %v822, %v834
  %v894 = vadd.f32 %v823, %v834
  %v895 = vadd.f32 %v824, %v834
  %v896 = vadd.f32 %v825, %v834
  %v897 = vadd.f32 %v826, %v834
  %v898 = vadd.f32 %v827, %v834
  %v899 = vadd.f32 %v828, %v834
  %v900 = vadd.f32 %v836, %v376
  %v901 = vadd.f32 %v837, %v379
  %v902 = vadd.f32 %v838, %v384
  %v903 = vadd.f32 %v839, %v387
  %v904 = vadd.f32 %v840, %v392
  %v905 = vadd.f32 %v841, %v395
  %v906 = vadd.f32 %v842, %v400
  %v907 = vadd.f32 %v843, %v403
  %v908 = vadd.f32 %v844, %v408
  %v909 = vadd.f32 %v845, %v411
  %v910 = vadd.f32 %v846, %v416
  %v911 = vadd.f32 %v847, %v419
  %v912 = vadd.f32 %v848, %v424
  %v913 = vadd.f32 %v849, %v427
  %v914 = vadd.f32 %v850, %v432
  %v915 = vadd.f32 %v851, %v435
  %v916 = vadd.f32 %v852, %v440
  %v917 = vadd.f32 %v853, %v443
  %v918 = vadd.f32 %v854, %v448
  %v919 = vadd.f32 %v855, %v451
  %v920 = vadd.f32 %v856, %v456
  %v921 = vadd.f32 %v857, %v459
  %v922 = vadd.f32 %v858, %v464
  %v923 = vadd.f32 %v859, %v467
  %v924 = vadd.f32 %v860, %v472
  %v925 = vadd.f32 %v861, %v475
  %v926 = vadd.f32 %v862, %v480
  %v927 = vadd.f32 %v863, %v483
  %v928 = vadd.f32 %v864, %v488
  %v929 = vadd.f32 %v865, %v491
  %v930 = vadd.f32 %v866, %v496
  %v931 = vadd.f32 %v867, %v499
  %v932 = vadd.f32 %v868, %v504
  %v933 = vadd.f32 %v869, %v507
  %v934 = vadd.f32 %v870, %v512
  %v935 = vadd.f32 %v871, %v515
  %v936 = vadd.f32 %v872, %v520
  %v937 = vadd.f32 %v873, %v523
  %v938 = vadd.f32 %v874, %v528
  %v939 = vadd.f32 %v875, %v531
  %v940 = vadd.f32 %v876, %v536
  %v941 = vadd.f32 %v877, %v539
  %v942 = vadd.f32 %v878, %v544
  %v943 = vadd.f32 %v879, %v547
  %v944 = vadd.f32 %v880, %v552
  %v945 = vadd.f32 %v881, %v555
  %v946 = vadd.f32 %v882, %v560
  %v947 = vadd.f32 %v883, %v563
  %v948 = vadd.f32 %v884, %v568
  %v949 = vadd.f32 %v885, %v571
  %v950 = vadd.f32 %v886, %v576
  %v951 = vadd.f32 %v887, %v579
  %v952 = vadd.f32 %v888, %v584
  %v953 = vadd.f32 %v889, %v587
  %v954 = vadd.f32 %v890, %v592
  %v955 = vadd.f32 %v891, %v595
  %v956 = vadd.f32 %v892, %v600
  %v957 = vadd.f32 %v893, %v603
  %v958 = vadd.f32 %v894, %v608
  %v959 = vadd.f32 %v895, %v611
  %v960 = vadd.f32 %v896, %v616
  %v961 = vadd.f32 %v897, %v619
  %v962 = vadd.f32 %v898, %v624
  %v963 = vadd.f32 %v899, %v627
  %v964 = vmax.f32 %v900, 0.0
  %v965 = vmax.f32 %v901, 0.0
  %v966 = vmax.f32 %v902, 0.0
  %v967 = vmax.f32 %v903, 0.0
  %v968 = vmax.f32 %v904, 0.0
  %v969 = vmax.f32 %v905, 0.0
  %v970 = vmax.f32 %v906, 0.0
  %v971 = vmax.f32 %v907, 0.0
  %v972 = vmax.f32 %v908, 0.0
  %v973 = vmax.f32 %v909, 0.0
  %v974 = vmax.f32 %v910, 0.0
  %v975 = vmax.f32 %v911, 0.0
  %v976 = vmax.f32 %v912, 0.0
  %v977 = vmax.f32 %v913, 0.0
  %v978 = vmax.f32 %v914, 0.0
  %v979 = vmax.f32 %v915, 0.0
  %v980 = vmax.f32 %v916, 0.0
  %v981 = vmax.f32 %v917, 0.0
  %v982 = vmax.f32 %v918, 0.0
  %v983 = vmax.f32 %v919, 0.0
  %v984 = vmax.f32 %v920, 0.0
  %v985 = vmax.f32 %v921, 0.0
  %v986 = vmax.f32 %v922, 0.0
  %v987 = vmax.f32 %v923, 0.0
  %v988 = vmax.f32 %v924, 0.0
  %v989 = vmax.f32 %v925, 0.0
  %v990 = vmax.f32 %v926, 0.0
  %v991 = vmax.f32 %v927, 0.0
  %v992 = vmax.f32 %v928, 0.0
  %v993 = vmax.f32 %v929, 0.0
  %v994 = vmax.f32 %v930, 0.0
  %v995 = vmax.f32 %v931, 0.0
  %v996 = vmax.f32 %v932, 0.0
  %v997 = vmax.f32 %v933, 0.0
  %v998 = vmax.f32 %v934, 0.0
  %v999 = vmax.f32 %v935, 0.0
  %v1000 = vmax.f32 %v936, 0.0
  %v1001 = vmax.f32 %v937, 0.0
  %v1002 = vmax.f32 %v938, 0.0
  %v1003 = vmax.f32 %v939, 0.0
  %v1004 = vmax.f32 %v940, 0.0
  %v1005 = vmax.f32 %v941, 0.0
  %v1006 = vmax.f32 %v942, 0.0
  %v1007 = vmax.f32 %v943, 0.0
  %v1008 = vmax.f32 %v944, 0.0
  %v1009 = vmax.f32 %v945, 0.0
  %v1010 = vmax.f32 %v946, 0.0
  %v1011 = vmax.f32 %v947, 0.0
  %v1012 = vmax.f32 %v948, 0.0
  %v1013 = vmax.f32 %v949, 0.0
  %v1014 = vmax.f32 %v950, 0.0
  %v1015 = vmax.f32 %v951, 0.0
  %v1016 = vmax.f32 %v952, 0.0
  %v1017 = vmax.f32 %v953, 0.0
  %v1018 = vmax.f32 %v954, 0.0
  %v1019 = vmax.f32 %v955, 0.0
  %v1020 = vmax.f32 %v956, 0.0
  %v1021 = vmax.f32 %v957, 0.0
  %v1022 = vmax.f32 %v958, 0.0
  %v1023 = vmax.f32 %v959, 0.0
  %v1024 = vmax.f32 %v960, 0.0
  %v1025 = vmax.f32 %v961, 0.0
  %v1026 = vmax.f32 %v962, 0.0
  %v1027 = vmax.f32 %v963, 0.0
  %v1028 = vpack.c.bf16 %v965, %v964
  %v1029 = vpack.c.bf16 %v967, %v966
  %v1030 = vpack.c.bf16 %v969, %v968
  %v1031 = vpack.c.bf16 %v971, %v970
  %v1032 = vpack.c.bf16 %v973, %v972
  %v1033 = vpack.c.bf16 %v975, %v974
  %v1034 = vpack.c.bf16 %v977, %v976
  %v1035 = vpack.c.bf16 %v979, %v978
  %v1036 = vpack.c.bf16 %v981, %v980
  %v1037 = vpack.c.bf16 %v983, %v982
  %v1038 = vpack.c.bf16 %v985, %v984
  %v1039 = vpack.c.bf16 %v987, %v986
  %v1040 = vpack.c.bf16 %v989, %v988
  %v1041 = vpack.c.bf16 %v991, %v990
  %v1042 = vpack.c.bf16 %v993, %v992
  %v1043 = vpack.c.bf16 %v995, %v994
  %v1044 = vpack.c.bf16 %v997, %v996
  %v1045 = vpack.c.bf16 %v999, %v998
  %v1046 = vpack.c.bf16 %v1001, %v1000
  %v1047 = vpack.c.bf16 %v1003, %v1002
  %v1048 = vpack.c.bf16 %v1005, %v1004
  %v1049 = vpack.c.bf16 %v1007, %v1006
  %v1050 = vpack.c.bf16 %v1009, %v1008
  %v1051 = vpack.c.bf16 %v1011, %v1010
  %v1052 = vpack.c.bf16 %v1013, %v1012
  %v1053 = vpack.c.bf16 %v1015, %v1014
  %v1054 = vpack.c.bf16 %v1017, %v1016
  %v1055 = vpack.c.bf16 %v1019, %v1018
  %v1056 = vpack.c.bf16 %v1021, %v1020
  %v1057 = vpack.c.bf16 %v1023, %v1022
  %v1058 = vpack.c.bf16 %v1025, %v1024
  %v1059 = vpack.c.bf16 %v1027, %v1026
  %v1092 = vunpack.c.l.b16 %v1028
  %v1093 = vunpack.c.h.b16 %v1028
  %v1094 = vunpack.c.l.b16 %v1029
  %v1095 = vunpack.c.h.b16 %v1029
  %v1096 = vunpack.c.l.b16 %v1030
  %v1097 = vunpack.c.h.b16 %v1030
  %v1098 = vunpack.c.l.b16 %v1031
  %v1099 = vunpack.c.h.b16 %v1031
  %v1100 = vunpack.c.l.b16 %v1032
  %v1101 = vunpack.c.h.b16 %v1032
  %v1102 = vunpack.c.l.b16 %v1033
  %v1103 = vunpack.c.h.b16 %v1033
  %v1104 = vunpack.c.l.b16 %v1034
  %v1105 = vunpack.c.h.b16 %v1034
  %v1106 = vunpack.c.l.b16 %v1035
  %v1107 = vunpack.c.h.b16 %v1035
  %v1108 = vunpack.c.l.b16 %v1036
  %v1109 = vunpack.c.h.b16 %v1036
  %v1110 = vunpack.c.l.b16 %v1037
  %v1111 = vunpack.c.h.b16 %v1037
  %v1112 = vunpack.c.l.b16 %v1038
  %v1113 = vunpack.c.h.b16 %v1038
  %v1114 = vunpack.c.l.b16 %v1039
  %v1115 = vunpack.c.h.b16 %v1039
  %v1116 = vunpack.c.l.b16 %v1040
  %v1117 = vunpack.c.h.b16 %v1040
  %v1118 = vunpack.c.l.b16 %v1041
  %v1119 = vunpack.c.h.b16 %v1041
  %v1120 = vunpack.c.l.b16 %v1042
  %v1121 = vunpack.c.h.b16 %v1042
  %v1122 = vunpack.c.l.b16 %v1043
  %v1123 = vunpack.c.h.b16 %v1043
  %v1124 = vunpack.c.l.b16 %v1044
  %v1125 = vunpack.c.h.b16 %v1044
  %v1126 = vunpack.c.l.b16 %v1045
  %v1127 = vunpack.c.h.b16 %v1045
  %v1128 = vunpack.c.l.b16 %v1046
  %v1129 = vunpack.c.h.b16 %v1046
  %v1130 = vunpack.c.l.b16 %v1047
  %v1131 = vunpack.c.h.b16 %v1047
  %v1132 = vunpack.c.l.b16 %v1048
  %v1133 = vunpack.c.h.b16 %v1048
  %v1134 = vunpack.c.l.b16 %v1049
  %v1135 = vunpack.c.h.b16 %v1049
  %v1136 = vunpack.c.l.b16 %v1050
  %v1137 = vunpack.c.h.b16 %v1050
  %v1138 = vunpack.c.l.b16 %v1051
  %v1139 = vunpack.c.h.b16 %v1051
  %v1140 = vunpack.c.l.b16 %v1052
  %v1141 = vunpack.c.h.b16 %v1052
  %v1142 = vunpack.c.l.b16 %v1053
  %v1143 = vunpack.c.h.b16 %v1053
  %v1144 = vunpack.c.l.b16 %v1054
  %v1145 = vunpack.c.h.b16 %v1054
  %v1146 = vunpack.c.l.b16 %v1055
  %v1147 = vunpack.c.h.b16 %v1055
  %v1148 = vunpack.c.l.b16 %v1056
  %v1149 = vunpack.c.h.b16 %v1056
  %v1150 = vunpack.c.l.b16 %v1057
  %v1151 = vunpack.c.h.b16 %v1057
  %v1152 = vunpack.c.l.b16 %v1058
  %v1153 = vunpack.c.h.b16 %v1058
  %v1154 = vunpack.c.l.b16 %v1059
  %v1155 = vunpack.c.h.b16 %v1059
  %v1156 = vpack.c.b16 %v1092, %v1092
  %v1157 = vpack.c.b16 %v1093, %v1093
  %v1158 = vpack.c.b16 %v1094, %v1094
  %v1159 = vpack.c.b16 %v1095, %v1095
  %v1160 = vpack.c.b16 %v1096, %v1096
  %v1161 = vpack.c.b16 %v1097, %v1097
  %v1162 = vpack.c.b16 %v1098, %v1098
  %v1163 = vpack.c.b16 %v1099, %v1099
  %v1164 = vpack.c.b16 %v1100, %v1100
  %v1165 = vpack.c.b16 %v1101, %v1101
  %v1166 = vpack.c.b16 %v1102, %v1102
  %v1167 = vpack.c.b16 %v1103, %v1103
  %v1168 = vpack.c.b16 %v1104, %v1104
  %v1169 = vpack.c.b16 %v1105, %v1105
  %v1170 = vpack.c.b16 %v1106, %v1106
  %v1171 = vpack.c.b16 %v1107, %v1107
  %v1172 = vpack.c.b16 %v1108, %v1108
  %v1173 = vpack.c.b16 %v1109, %v1109
  %v1174 = vpack.c.b16 %v1110, %v1110
  %v1175 = vpack.c.b16 %v1111, %v1111
  %v1176 = vpack.c.b16 %v1112, %v1112
  %v1177 = vpack.c.b16 %v1113, %v1113
  %v1178 = vpack.c.b16 %v1114, %v1114
  %v1179 = vpack.c.b16 %v1115, %v1115
  %v1180 = vpack.c.b16 %v1116, %v1116
  %v1181 = vpack.c.b16 %v1117, %v1117
  %v1182 = vpack.c.b16 %v1118, %v1118
  %v1183 = vpack.c.b16 %v1119, %v1119
  %v1184 = vpack.c.b16 %v1120, %v1120
  %v1185 = vpack.c.b16 %v1121, %v1121
  %v1186 = vpack.c.b16 %v1122, %v1122
  %v1187 = vpack.c.b16 %v1123, %v1123
  %v1188 = vpack.c.b16 %v1124, %v1124
  %v1189 = vpack.c.b16 %v1125, %v1125
  %v1190 = vpack.c.b16 %v1126, %v1126
  %v1191 = vpack.c.b16 %v1127, %v1127
  %v1192 = vpack.c.b16 %v1128, %v1128
  %v1193 = vpack.c.b16 %v1129, %v1129
  %v1194 = vpack.c.b16 %v1130, %v1130
  %v1195 = vpack.c.b16 %v1131, %v1131
  %v1196 = vpack.c.b16 %v1132, %v1132
  %v1197 = vpack.c.b16 %v1133, %v1133
  %v1198 = vpack.c.b16 %v1134, %v1134
  %v1199 = vpack.c.b16 %v1135, %v1135
  %v1200 = vpack.c.b16 %v1136, %v1136
  %v1201 = vpack.c.b16 %v1137, %v1137
  %v1202 = vpack.c.b16 %v1138, %v1138
  %v1203 = vpack.c.b16 %v1139, %v1139
  %v1204 = vpack.c.b16 %v1140, %v1140
  %v1205 = vpack.c.b16 %v1141, %v1141
  %v1206 = vpack.c.b16 %v1142, %v1142
  %v1207 = vpack.c.b16 %v1143, %v1143
  %v1208 = vpack.c.b16 %v1144, %v1144
  %v1209 = vpack.c.b16 %v1145, %v1145
  %v1210 = vpack.c.b16 %v1146, %v1146
  %v1211 = vpack.c.b16 %v1147, %v1147
  %v1212 = vpack.c.b16 %v1148, %v1148
  %v1213 = vpack.c.b16 %v1149, %v1149
  %v1214 = vpack.c.b16 %v1150, %v1150
  %v1215 = vpack.c.b16 %v1151, %v1151
  %v1216 = vpack.c.b16 %v1152, %v1152
  %v1217 = vpack.c.b16 %v1153, %v1153
  %v1218 = vpack.c.b16 %v1154, %v1154
  %v1219 = vpack.c.b16 %v1155, %v1155
  %1284 = vst [vmem:[%s5] sm:$0xf] %v1156
  %1285 = vst [vmem:[%s5 + $0x4] sm:$0xf] %v1157
  %1286 = vst [vmem:[%s5 + $0x8] sm:$0xf] %v1158
  %1287 = vst [vmem:[%s5 + $0xc] sm:$0xf] %v1159
  %1288 = vst [vmem:[%s5 + $0x10] sm:$0xf] %v1160
  %1289 = vst [vmem:[%s5 + $0x14] sm:$0xf] %v1161
  %1290 = vst [vmem:[%s5 + $0x18] sm:$0xf] %v1162
  %1291 = vst [vmem:[%s5 + $0x1c] sm:$0xf] %v1163
  %1292 = vst [vmem:[%s5 + $0x20] sm:$0xf] %v1164
  %1293 = vst [vmem:[%s5 + $0x24] sm:$0xf] %v1165
  %1294 = vst [vmem:[%s5 + $0x28] sm:$0xf] %v1166
  %1295 = vst [vmem:[%s5 + $0x2c] sm:$0xf] %v1167
  %1296 = vst [vmem:[%s5 + $0x30] sm:$0xf] %v1168
  %1297 = vst [vmem:[%s5 + $0x34] sm:$0xf] %v1169
  %1298 = vst [vmem:[%s5 + $0x38] sm:$0xf] %v1170
  %1299 = vst [vmem:[%s5 + $0x3c] sm:$0xf] %v1171
  %1300 = vst [vmem:[%s5 + $0x40] sm:$0xf] %v1172
  %1301 = vst [vmem:[%s5 + $0x44] sm:$0xf] %v1173
  %1302 = vst [vmem:[%s5 + $0x48] sm:$0xf] %v1174
  %1303 = vst [vmem:[%s5 + $0x4c] sm:$0xf] %v1175
  %1304 = vst [vmem:[%s5 + $0x50] sm:$0xf] %v1176
  %1305 = vst [vmem:[%s5 + $0x54] sm:$0xf] %v1177
  %1306 = vst [vmem:[%s5 + $0x58] sm:$0xf] %v1178
  %1307 = vst [vmem:[%s5 + $0x5c] sm:$0xf] %v1179
  %1308 = vst [vmem:[%s5 + $0x60] sm:$0xf] %v1180
  %1309 = vst [vmem:[%s5 + $0x64] sm:$0xf] %v1181
  %1310 = vst [vmem:[%s5 + $0x68] sm:$0xf] %v1182
  %1311 = vst [vmem:[%s5 + $0x6c] sm:$0xf] %v1183
  %1312 = vst [vmem:[%s5 + $0x70] sm:$0xf] %v1184
  %1313 = vst [vmem:[%s5 + $0x74] sm:$0xf] %v1185
  %1314 = vst [vmem:[%s5 + $0x78] sm:$0xf] %v1186
  %1315 = vst [vmem:[%s5 + $0x7c] sm:$0xf] %v1187
  %1316 = vst [vmem:[%s5 + $0x80] sm:$0xf] %v1188
  %1317 = vst [vmem:[%s5 + $0x84] sm:$0xf] %v1189
  %1318 = vst [vmem:[%s5 + $0x88] sm:$0xf] %v1190
  %1319 = vst [vmem:[%s5 + $0x8c] sm:$0xf] %v1191
  %1320 = vst [vmem:[%s5 + $0x90] sm:$0xf] %v1192
  %1321 = vst [vmem:[%s5 + $0x94] sm:$0xf] %v1193
  %1322 = vst [vmem:[%s5 + $0x98] sm:$0xf] %v1194
  %1323 = vst [vmem:[%s5 + $0x9c] sm:$0xf] %v1195
  %1324 = vst [vmem:[%s5 + $0xa0] sm:$0xf] %v1196
  %1325 = vst [vmem:[%s5 + $0xa4] sm:$0xf] %v1197
  %1326 = vst [vmem:[%s5 + $0xa8] sm:$0xf] %v1198
  %1327 = vst [vmem:[%s5 + $0xac] sm:$0xf] %v1199
  %1328 = vst [vmem:[%s5 + $0xb0] sm:$0xf] %v1200
  %1329 = vst [vmem:[%s5 + $0xb4] sm:$0xf] %v1201
  %1330 = vst [vmem:[%s5 + $0xb8] sm:$0xf] %v1202
  %1331 = vst [vmem:[%s5 + $0xbc] sm:$0xf] %v1203
  %1332 = vst [vmem:[%s5 + $0xc0] sm:$0xf] %v1204
  %1333 = vst [vmem:[%s5 + $0xc4] sm:$0xf] %v1205
  %1334 = vst [vmem:[%s5 + $0xc8] sm:$0xf] %v1206
  %1335 = vst [vmem:[%s5 + $0xcc] sm:$0xf] %v1207
  %1336 = vst [vmem:[%s5 + $0xd0] sm:$0xf] %v1208
  %1337 = vst [vmem:[%s5 + $0xd4] sm:$0xf] %v1209
  %1338 = vst [vmem:[%s5 + $0xd8] sm:$0xf] %v1210
  %1339 = vst [vmem:[%s5 + $0xdc] sm:$0xf] %v1211
  %1340 = vst [vmem:[%s5 + $0xe0] sm:$0xf] %v1212
  %1341 = vst [vmem:[%s5 + $0xe4] sm:$0xf] %v1213
  %1342 = vst [vmem:[%s5 + $0xe8] sm:$0xf] %v1214
  %1343 = vst [vmem:[%s5 + $0xec] sm:$0xf] %v1215
  %1344 = vst [vmem:[%s5 + $0xf0] sm:$0xf] %v1216
  %1345 = vst [vmem:[%s5 + $0xf4] sm:$0xf] %v1217
  %1346 = vst [vmem:[%s5 + $0xf8] sm:$0xf] %v1218
  %1347 = vst [vmem:[%s5 + $0xfc] sm:$0xf] %v1219
  // Predicated region
  $region22: #{rer_basic_block_v2.5} parent=0 // pred_check
    _
  $region23: #{rer_basic_block_v2.5} parent=0 // pred_check_branch
    %1349 = sbr.rel (0) target = $region25
  $region24: #{rer_basic_block_v2.5} parent=0 // pred_region
    _
  $region25: #{rer_basic_block_v2.5} parent=0 // pred_fallthru
    _
  // Predicated region
  $region26: #{rer_basic_block_v2.5} parent=0 // pred_check
    _
  $region27: #{rer_basic_block_v2.5} parent=0 // pred_check_branch
    %1351 = sbr.rel (0) target = $region29
  $region28: #{rer_basic_block_v2.5} parent=0 // pred_region
    _
  $region29: #{rer_basic_block_v2.5} parent=0 // pred_fallthru
    _

// kernel: rer_basic_block_v2.4
$region0: #{rer_basic_block_v2.4}
  #allocation0 [shape = 'u32[]', space=smem, size = 0x4, offset = 0x4, fixed_abs, tag = 'smem constant byte address 0x4 - core index']
  #allocation1 [shape = 'u32[144,128]{1,0:T(1,128)}', space=vmem, size = 0x12000, scoped, tag = 'internal scratch']
  %s0 = inlined_call_operand.vmem [shape: bf16[2,18,18,128], index: 0, kind: input, shape index: {}, may-alias: {0,1,2}]
  %s1 = inlined_call_operand.vmem [shape: bf16[2,18,18,128], index: 1, kind: input, shape index: {}, may-alias: {0,1,2}]
  %s2 = inlined_call_operand.vmem [shape: bf16[2,18,18,128], index: 2, kind: input, shape index: {}, may-alias: {0,1,2}]
  %s3 = inlined_call_operand.vmem [shape: bf16[9,128,128], index: 3, kind: input, shape index: {}]
  %s4 = inlined_call_operand.vmem [shape: bf16[2,16,16,128], index: 4, kind: output, shape index: {0}]
  %s5 = inlined_call_operand.vmem [shape: f32[16,8,128], index: 5, kind: output, shape index: {1}]
  %s6 = inlined_call_operand.vmem [shape: f32[16,8,128], index: 6, kind: output, shape index: {2}]
  %7 = xla_tuple %s4, %s5, %s6
  %s8 = sld [smem:[#allocation0]]
  $region225: #{rer_basic_block_v2.4} parent=0
    _
  %s10 = ssub.s32 1, %s8
  %s11 = scalar_select 0, %s10, %s8
  $region1: #{rer_basic_block_v2.4} parent=0
    #allocation2 [shape = 'u8[24576]{0}', space=vmem, size = 0x6000, scoped, tag = 'input window, operand 0']
    #allocation3 [shape = 'u8[24576]{0}', space=vmem, size = 0x6000, scoped, tag = 'input window, operand 1']
    #allocation4 [shape = 'u8[24576]{0}', space=vmem, size = 0x6000, scoped, tag = 'input window, operand 2']
    #allocation5 [shape = 'u8[16384]{0}', space=vmem, size = 0x4000, scoped, tag = 'output window, operand 0']
    loop: start=0, step=1, limit=18
    $region2: #{rer_basic_block_v2.4} parent=1 // loop_pre_header
      _
    $region3: #{rer_basic_block_v2.4} parent=1 // loop_header
      %s13 = sphi 0, %s17
      %p14 = scmp.ge.s32.totalorder %s13, 18
      %s23 = sphi 0, %s25
      %s26 = sphi 0, %s23
      %s27 = sphi 0, %s26
      %s43 = sphi 0, %s27
      %s51 = sphi 0, %s53
      %s54 = sphi 0, %s51
      %s55 = sphi 0, %s54
      %s71 = sphi 0, %s55
      %s79 = sphi 0, %s81
      %s82 = sphi 0, %s79
      %s83 = sphi 0, %s82
      %s99 = sphi 0, %s83
      %s103 = sphi 0, %s103
      %s105 = sphi 0, %s103
      %s106 = sphi 0, %s105
      %s120 = sphi 0, %s106
      %s126 = sphi 0, %s128
      %s129 = sphi 0, %s126
      %s130 = sphi 0, %s129
      %s146 = sphi 0, %s130
      %s152 = sphi 0, %s154
      %s155 = sphi 0, %s152
      %s156 = sphi 0, %s155
      %s172 = sphi 0, %s156
      %s178 = sphi 0, %s180
      %s181 = sphi 0, %s178
      %s182 = sphi 0, %s181
      %s198 = sphi 0, %s182
    $region4: #{rer_basic_block_v2.4} parent=1 // loop_header_branch
      %16 = sbr.rel (%p14) target = $region8
    $region5: #{rer_basic_block_v2.4} parent=1 // loop_body
      %s18 = ssub.s32 %s13, 1
      %s19 = ssub.s32 %s13, 2
      %s20 = sadd.s32 %s13, 1
      %s21 = ssub.s32 %s13, %s20
      %p22 = scmp.eq.s32.totalorder %s21, 0
      %s24 = sadd.s32 %s23, 1
      %s25 = scalar_select %p22, %s23, %s24
      %p28 = pneg %p22
      %p29 = scmp.eq.s32.totalorder %s13, 15
      %p30 = por %p28, %p29
      %p31 = scmp.ne.s32.totalorder %s23, %s26
      %p32 = scmp.eq.s32.totalorder %s13, 0
      %p33 = por %p31, %p32
      %p34 = scmp.ne.s32.totalorder %s23, %s26
      %p35 = scmp.eq.s32.totalorder %s18, 15
      %p36 = por %p34, %p35
      %p37 = scmp.ne.s32.totalorder %s26, %s27
      %p38 = scmp.eq.s32.totalorder %s18, 0
      %p39 = por %p37, %p38
      %p40 = scmp.ne.s32.totalorder %s26, %s27
      %p41 = scmp.eq.s32.totalorder %s19, 15
      %p42 = por %p40, %p41
      %p44 = scmp.ne.s32.totalorder %s27, %s43
      %p45 = scmp.eq.s32.totalorder %s19, 0
      %p46 = por %p44, %p45
      %s47 = sadd.s32 %s13, 1
      %s48 = sadd.s32 %s20, 1
      %s49 = ssub.s32 %s47, %s48
      %p50 = scmp.eq.s32.totalorder %s49, 0
      %s52 = sadd.s32 %s51, 1
      %s53 = scalar_select %p50, %s51, %s52
      %p56 = pneg %p50
      %p57 = scmp.eq.s32.totalorder %s13, 15
      %p58 = por %p56, %p57
      %p59 = scmp.ne.s32.totalorder %s51, %s54
      %p60 = scmp.eq.s32.totalorder %s13, 0
      %p61 = por %p59, %p60
      %p62 = scmp.ne.s32.totalorder %s51, %s54
      %p63 = scmp.eq.s32.totalorder %s18, 15
      %p64 = por %p62, %p63
      %p65 = scmp.ne.s32.totalorder %s54, %s55
      %p66 = scmp.eq.s32.totalorder %s18, 0
      %p67 = por %p65, %p66
      %p68 = scmp.ne.s32.totalorder %s54, %s55
      %p69 = scmp.eq.s32.totalorder %s19, 15
      %p70 = por %p68, %p69
      %p72 = scmp.ne.s32.totalorder %s55, %s71
      %p73 = scmp.eq.s32.totalorder %s19, 0
      %p74 = por %p72, %p73
      %s75 = sadd.s32 %s13, 2
      %s76 = sadd.s32 %s20, 2
      %s77 = ssub.s32 %s75, %s76
      %p78 = scmp.eq.s32.totalorder %s77, 0
      %s80 = sadd.s32 %s79, 1
      %s81 = scalar_select %p78, %s79, %s80
      %p84 = pneg %p78
      %p85 = scmp.eq.s32.totalorder %s13, 15
      %p86 = por %p84, %p85
      %p87 = scmp.ne.s32.totalorder %s79, %s82
      %p88 = scmp.eq.s32.totalorder %s13, 0
      %p89 = por %p87, %p88
      %p90 = scmp.ne.s32.totalorder %s79, %s82
      %p91 = scmp.eq.s32.totalorder %s18, 15
      %p92 = por %p90, %p91
      %p93 = scmp.ne.s32.totalorder %s82, %s83
      %p94 = scmp.eq.s32.totalorder %s18, 0
      %p95 = por %p93, %p94
      %p96 = scmp.ne.s32.totalorder %s82, %s83
      %p97 = scmp.eq.s32.totalorder %s19, 15
      %p98 = por %p96, %p97
      %p100 = scmp.ne.s32.totalorder %s83, %s99
      %p101 = scmp.eq.s32.totalorder %s19, 0
      %p102 = por %p100, %p101
      %s104 = sadd.s32 %s103, 1
      %p107 = scmp.eq.s32.totalorder %s13, 15
      %p108 = scmp.ne.s32.totalorder %s103, %s105
      %p109 = scmp.eq.s32.totalorder %s13, 0
      %p110 = por %p108, %p109
      %p111 = scmp.ne.s32.totalorder %s103, %s105
      %p112 = scmp.eq.s32.totalorder %s18, 15
      %p113 = por %p111, %p112
      %p114 = scmp.ne.s32.totalorder %s105, %s106
      %p115 = scmp.eq.s32.totalorder %s18, 0
      %p116 = por %p114, %p115
      %p117 = scmp.ne.s32.totalorder %s105, %s106
      %p118 = scmp.eq.s32.totalorder %s19, 15
      %p119 = por %p117, %p118
      %p121 = scmp.ne.s32.totalorder %s106, %s120
      %p122 = scmp.eq.s32.totalorder %s19, 0
      %p123 = por %p121, %p122
      %s124 = ssub.s32 %s13, %s20
      %p125 = scmp.eq.s32.totalorder %s124, 0
      %s127 = sadd.s32 %s126, 1
      %s128 = scalar_select %p125, %s126, %s127
      %p131 = pneg %p125
      %p132 = scmp.eq.s32.totalorder %s13, 15
      %p133 = por %p131, %p132
      %p134 = scmp.ne.s32.totalorder %s126, %s129
      %p135 = scmp.eq.s32.totalorder %s13, 0
      %p136 = por %p134, %p135
      %p137 = scmp.ne.s32.totalorder %s126, %s129
      %p138 = scmp.eq.s32.totalorder %s18, 15
      %p139 = por %p137, %p138
      %p140 = scmp.ne.s32.totalorder %s129, %s130
      %p141 = scmp.eq.s32.totalorder %s18, 0
      %p142 = por %p140, %p141
      %p143 = scmp.ne.s32.totalorder %s129, %s130
      %p144 = scmp.eq.s32.totalorder %s19, 15
      %p145 = por %p143, %p144
      %p147 = scmp.ne.s32.totalorder %s130, %s146
      %p148 = scmp.eq.s32.totalorder %s19, 0
      %p149 = por %p147, %p148
      %s150 = ssub.s32 %s13, %s20
      %p151 = scmp.eq.s32.totalorder %s150, 0
      %s153 = sadd.s32 %s152, 1
      %s154 = scalar_select %p151, %s152, %s153
      %p157 = pneg %p151
      %p158 = scmp.eq.s32.totalorder %s13, 15
      %p159 = por %p157, %p158
      %p160 = scmp.ne.s32.totalorder %s152, %s155
      %p161 = scmp.eq.s32.totalorder %s13, 0
      %p162 = por %p160, %p161
      %p163 = scmp.ne.s32.totalorder %s152, %s155
      %p164 = scmp.eq.s32.totalorder %s18, 15
      %p165 = por %p163, %p164
      %p166 = scmp.ne.s32.totalorder %s155, %s156
      %p167 = scmp.eq.s32.totalorder %s18, 0
      %p168 = por %p166, %p167
      %p169 = scmp.ne.s32.totalorder %s155, %s156
      %p170 = scmp.eq.s32.totalorder %s19, 15
      %p171 = por %p169, %p170
      %p173 = scmp.ne.s32.totalorder %s156, %s172
      %p174 = scmp.eq.s32.totalorder %s19, 0
      %p175 = por %p173, %p174
      %s176 = ssub.s32 %s13, %s20
      %p177 = scmp.eq.s32.totalorder %s176, 0
      %s179 = sadd.s32 %s178, 1
      %s180 = scalar_select %p177, %s178, %s179
      %p183 = pneg %p177
      %p184 = scmp.eq.s32.totalorder %s13, 15
      %p185 = por %p183, %p184
      %p186 = scmp.ne.s32.totalorder %s178, %s181
      %p187 = scmp.eq.s32.totalorder %s13, 0
      %p188 = por %p186, %p187
      %p189 = scmp.ne.s32.totalorder %s178, %s181
      %p190 = scmp.eq.s32.totalorder %s18, 15
      %p191 = por %p189, %p190
      %p192 = scmp.ne.s32.totalorder %s181, %s182
      %p193 = scmp.eq.s32.totalorder %s18, 0
      %p194 = por %p192, %p193
      %p195 = scmp.ne.s32.totalorder %s181, %s182
      %p196 = scmp.eq.s32.totalorder %s19, 15
      %p197 = por %p195, %p196
      %p199 = scmp.ne.s32.totalorder %s182, %s198
      %p200 = scmp.eq.s32.totalorder %s19, 0
      %p201 = por %p199, %p200
      %p202 = scmp.le.s32.totalorder 1, %s13
      %p203 = scmp.lt.s32.totalorder %s13, 17
      %p204 = pnand %p202, %p203
      %p205 = pneg %p204
      // Predicated region
      $region9: #{rer_basic_block_v2.4} parent=5 // pred_check
        _
      $region10: #{rer_basic_block_v2.4} parent=5 // pred_check_branch
        %207 = sbr.rel (%p204) target = $region12
      $region11: #{rer_basic_block_v2.4} parent=5 // pred_region
        %s208 = ssub.s32 %s13, 1
        // Predicated region
        $region13: #{rer_basic_block_v2.4} parent=11 // pred_check
          %p209 = pneg %p116
        $region14: #{rer_basic_block_v2.4} parent=11 // pred_check_branch
          %211 = sbr.rel (%p209) target = $region16
        $region15: #{rer_basic_block_v2.4} parent=11 // pred_region
          _
        $region16: #{rer_basic_block_v2.4} parent=11 // pred_fallthru
          _
      $region12: #{rer_basic_block_v2.4} parent=5 // pred_fallthru
        _
      %p212 = scmp.lt.s32.totalorder %s13, 16
      // Predicated region
      $region17: #{rer_basic_block_v2.4} parent=5 // pred_check
        %p213 = pneg %p212
      $region18: #{rer_basic_block_v2.4} parent=5 // pred_check_branch
        %215 = sbr.rel (%p213) target = $region20
      $region19: #{rer_basic_block_v2.4} parent=5 // pred_region
        // Predicated region
        $region21: #{rer_basic_block_v2.4} parent=19 // pred_check
          %p216 = pneg %p33
        $region22: #{rer_basic_block_v2.4} parent=19 // pred_check_branch
          %218 = sbr.rel (%p216) target = $region24
        $region23: #{rer_basic_block_v2.4} parent=19 // pred_region
          %s219 = sand.u32 %s23, 1
          %s220 = sand.u32 %s23, 1
          %s221 = smul.addr %s220, 24
          %s222 = scalar_lea.vmem [#allocation2], %s221
          %s223 = smul.addr %s13, 3
          %s224 = smul.addr %s223, 4
          %s225 = scalar_lea.vmem %s0, %s224
          // Predicated region
          $region25: #{rer_basic_block_v2.4} parent=23 // pred_check
            _
          $region26: #{rer_basic_block_v2.4} parent=23 // pred_check_branch
            %227 = sbr.rel (0) target = $region28
          $region27: #{rer_basic_block_v2.4} parent=23 // pred_region
            // Predicated region
            $region29: #{rer_basic_block_v2.4} parent=27 // pred_check
              _
            $region30: #{rer_basic_block_v2.4} parent=27 // pred_check_branch
              %229 = sbr.rel target = $region32
            $region31: #{rer_basic_block_v2.4} parent=27 // pred_region
              // Predicated region
              $region44: #{rer_basic_block_v2.4} parent=31 // pred_check
                _
              $region45: #{rer_basic_block_v2.4} parent=31 // pred_check_branch
                %255 = sbr.rel (0) target = $region47
              $region46: #{rer_basic_block_v2.4} parent=31 // pred_region
                loop: start=0, step=1, limit=1
                $region48: #{rer_basic_block_v2.4} parent=46 // loop_pre_header
                  _
                $region49: #{rer_basic_block_v2.4} parent=46 // loop_header
                  %s257 = sphi 0, %s261
                  %p258 = scmp.ge.s32.totalorder %s257, 1
                  %s262 = sphi %s225, %s225
                  %s263 = sphi %s222, %s222
                $region50: #{rer_basic_block_v2.4} parent=46 // loop_header_branch
                  %260 = sbr.rel (%p258) target = $region54
                $region51: #{rer_basic_block_v2.4} parent=46 // loop_body
                  _
                $region52: #{rer_basic_block_v2.4} parent=46 // loop_footer
                  %s261 = sadd.s32 1, %s257
                $region53: #{rer_basic_block_v2.4} parent=46 // loop_footer_branch
                  %256 = sbr.rel target = $region49
                $region54: #{rer_basic_block_v2.4} parent=46 // loop_exit
                  _
                %s265 = ssub.s32 16, 1
                loop: start=0, step=1, limit=1
                $region55: #{rer_basic_block_v2.4} parent=46 // loop_pre_header
                  _
                $region56: #{rer_basic_block_v2.4} parent=46 // loop_header
                  %s267 = sphi 0, %s271
                  %p268 = scmp.ge.s32.totalorder %s267, 1
                  %s272 = sphi %s225, %s225
                  %s273 = sphi %s222, %s222
                $region57: #{rer_basic_block_v2.4} parent=46 // loop_header_branch
                  %270 = sbr.rel (%p268) target = $region61
                $region58: #{rer_basic_block_v2.4} parent=46 // loop_body
                  %v274 = vld [vmem:[%s272] sm:%s265]
                  %275 = vst [vmem:[%s273] sm:%s265] %v274
                  %v276 = vld [vmem:[%s272 + $0x4] sm:%s265]
                  %277 = vst [vmem:[%s273 + $0x4] sm:%s265] %v276
                  %v278 = vld [vmem:[%s272 + $0x8] sm:%s265]
                  %279 = vst [vmem:[%s273 + $0x8] sm:%s265] %v278
                  %v280 = vld [vmem:[%s272 + $0xd8] sm:%s265]
                  %281 = vst [vmem:[%s273 + $0xc] sm:%s265] %v280
                  %v282 = vld [vmem:[%s272 + $0xdc] sm:%s265]
                  %283 = vst [vmem:[%s273 + $0x10] sm:%s265] %v282
                  %v284 = vld [vmem:[%s272 + $0xe0] sm:%s265]
                  %285 = vst [vmem:[%s273 + $0x14] sm:%s265] %v284
                $region59: #{rer_basic_block_v2.4} parent=46 // loop_footer
                  %s271 = sadd.s32 1, %s267
                $region60: #{rer_basic_block_v2.4} parent=46 // loop_footer_branch
                  %266 = sbr.rel target = $region56
                $region61: #{rer_basic_block_v2.4} parent=46 // loop_exit
                  _
              $region47: #{rer_basic_block_v2.4} parent=31 // pred_fallthru
                _
            $region32: #{rer_basic_block_v2.4} parent=27 // pred_fallthru
              _
            // Predicated region
            $region33: #{rer_basic_block_v2.4} parent=27 // pred_check
              _
            $region34: #{rer_basic_block_v2.4} parent=27 // pred_check_branch
              %231 = sbr.rel (0) target = $region36
            $region35: #{rer_basic_block_v2.4} parent=27 // pred_region
              %s233 = ssub.s32 16, 1
              loop: start=0, step=1, limit=1
              $region37: #{rer_basic_block_v2.4} parent=35 // loop_pre_header
                _
              $region38: #{rer_basic_block_v2.4} parent=35 // loop_header
                %s235 = sphi 0, %s239
                %p236 = scmp.ge.s32.totalorder %s235, 1
                %s240 = sphi %s225, %s225
                %s241 = sphi %s222, %s222
              $region39: #{rer_basic_block_v2.4} parent=35 // loop_header_branch
                %238 = sbr.rel (%p236) target = $region43
              $region40: #{rer_basic_block_v2.4} parent=35 // loop_body
                %v242 = vld [vmem:[%s240] sm:%s233]
                %243 = vst [vmem:[%s241] sm:%s233] %v242
                %v244 = vld [vmem:[%s240 + $0x4] sm:%s233]
                %245 = vst [vmem:[%s241 + $0x4] sm:%s233] %v244
                %v246 = vld [vmem:[%s240 + $0x8] sm:%s233]
                %247 = vst [vmem:[%s241 + $0x8] sm:%s233] %v246
                %v248 = vld [vmem:[%s240 + $0xd8] sm:%s233]
                %249 = vst [vmem:[%s241 + $0xc] sm:%s233] %v248
                %v250 = vld [vmem:[%s240 + $0xdc] sm:%s233]
                %251 = vst [vmem:[%s241 + $0x10] sm:%s233] %v250
                %v252 = vld [vmem:[%s240 + $0xe0] sm:%s233]
                %253 = vst [vmem:[%s241 + $0x14] sm:%s233] %v252
              $region41: #{rer_basic_block_v2.4} parent=35 // loop_footer
                %s239 = sadd.s32 1, %s235
              $region42: #{rer_basic_block_v2.4} parent=35 // loop_footer_branch
                %234 = sbr.rel target = $region38
              $region43: #{rer_basic_block_v2.4} parent=35 // loop_exit
                _
            $region36: #{rer_basic_block_v2.4} parent=27 // pred_fallthru
              _
          $region28: #{rer_basic_block_v2.4} parent=23 // pred_fallthru
            _
          %286 = vnop
        $region24: #{rer_basic_block_v2.4} parent=19 // pred_fallthru
          _
        // Predicated region
        $region62: #{rer_basic_block_v2.4} parent=19 // pred_check
          %p287 = pneg %p61
        $region63: #{rer_basic_block_v2.4} parent=19 // pred_check_branch
          %289 = sbr.rel (%p287) target = $region65
        $region64: #{rer_basic_block_v2.4} parent=19 // pred_region
          %s290 = sand.u32 %s51, 1
          %s291 = sand.u32 %s51, 1
          %s292 = smul.addr %s291, 24
          %s293 = scalar_lea.vmem [#allocation3], %s292
          %s294 = sadd.s32 %s13, 1
          %s295 = smul.addr %s294, 3
          %s296 = smul.addr %s295, 4
          %s297 = scalar_lea.vmem %s1, %s296
          // Predicated region
          $region66: #{rer_basic_block_v2.4} parent=64 // pred_check
            _
          $region67: #{rer_basic_block_v2.4} parent=64 // pred_check_branch
            %299 = sbr.rel (0) target = $region69
          $region68: #{rer_basic_block_v2.4} parent=64 // pred_region
            // Predicated region
            $region70: #{rer_basic_block_v2.4} parent=68 // pred_check
              _
            $region71: #{rer_basic_block_v2.4} parent=68 // pred_check_branch
              %301 = sbr.rel target = $region73
            $region72: #{rer_basic_block_v2.4} parent=68 // pred_region
              // Predicated region
              $region85: #{rer_basic_block_v2.4} parent=72 // pred_check
                _
              $region86: #{rer_basic_block_v2.4} parent=72 // pred_check_branch
                %327 = sbr.rel (0) target = $region88
              $region87: #{rer_basic_block_v2.4} parent=72 // pred_region
                loop: start=0, step=1, limit=1
                $region89: #{rer_basic_block_v2.4} parent=87 // loop_pre_header
                  _
                $region90: #{rer_basic_block_v2.4} parent=87 // loop_header
                  %s329 = sphi 0, %s333
                  %p330 = scmp.ge.s32.totalorder %s329, 1
                  %s334 = sphi %s297, %s297
                  %s335 = sphi %s293, %s293
                $region91: #{rer_basic_block_v2.4} parent=87 // loop_header_branch
                  %332 = sbr.rel (%p330) target = $region95
                $region92: #{rer_basic_block_v2.4} parent=87 // loop_body
                  _
                $region93: #{rer_basic_block_v2.4} parent=87 // loop_footer
                  %s333 = sadd.s32 1, %s329
                $region94: #{rer_basic_block_v2.4} parent=87 // loop_footer_branch
                  %328 = sbr.rel target = $region90
                $region95: #{rer_basic_block_v2.4} parent=87 // loop_exit
                  _
                %s337 = ssub.s32 16, 1
                loop: start=0, step=1, limit=1
                $region96: #{rer_basic_block_v2.4} parent=87 // loop_pre_header
                  _
                $region97: #{rer_basic_block_v2.4} parent=87 // loop_header
                  %s339 = sphi 0, %s343
                  %p340 = scmp.ge.s32.totalorder %s339, 1
                  %s344 = sphi %s297, %s297
                  %s345 = sphi %s293, %s293
                $region98: #{rer_basic_block_v2.4} parent=87 // loop_header_branch
                  %342 = sbr.rel (%p340) target = $region102
                $region99: #{rer_basic_block_v2.4} parent=87 // loop_body
                  %v346 = vld [vmem:[%s344] sm:%s337]
                  %347 = vst [vmem:[%s345] sm:%s337] %v346
                  %v348 = vld [vmem:[%s344 + $0x4] sm:%s337]
                  %349 = vst [vmem:[%s345 + $0x4] sm:%s337] %v348
                  %v350 = vld [vmem:[%s344 + $0x8] sm:%s337]
                  %351 = vst [vmem:[%s345 + $0x8] sm:%s337] %v350
                  %v352 = vld [vmem:[%s344 + $0xd8] sm:%s337]
                  %353 = vst [vmem:[%s345 + $0xc] sm:%s337] %v352
                  %v354 = vld [vmem:[%s344 + $0xdc] sm:%s337]
                  %355 = vst [vmem:[%s345 + $0x10] sm:%s337] %v354
                  %v356 = vld [vmem:[%s344 + $0xe0] sm:%s337]
                  %357 = vst [vmem:[%s345 + $0x14] sm:%s337] %v356
                $region100: #{rer_basic_block_v2.4} parent=87 // loop_footer
                  %s343 = sadd.s32 1, %s339
                $region101: #{rer_basic_block_v2.4} parent=87 // loop_footer_branch
                  %338 = sbr.rel target = $region97
                $region102: #{rer_basic_block_v2.4} parent=87 // loop_exit
                  _
              $region88: #{rer_basic_block_v2.4} parent=72 // pred_fallthru
                _
            $region73: #{rer_basic_block_v2.4} parent=68 // pred_fallthru
              _
            // Predicated region
            $region74: #{rer_basic_block_v2.4} parent=68 // pred_check
              _
            $region75: #{rer_basic_block_v2.4} parent=68 // pred_check_branch
              %303 = sbr.rel (0) target = $region77
            $region76: #{rer_basic_block_v2.4} parent=68 // pred_region
              %s305 = ssub.s32 16, 1
              loop: start=0, step=1, limit=1
              $region78: #{rer_basic_block_v2.4} parent=76 // loop_pre_header
                _
              $region79: #{rer_basic_block_v2.4} parent=76 // loop_header
                %s307 = sphi 0, %s311
                %p308 = scmp.ge.s32.totalorder %s307, 1
                %s312 = sphi %s297, %s297
                %s313 = sphi %s293, %s293
              $region80: #{rer_basic_block_v2.4} parent=76 // loop_header_branch
                %310 = sbr.rel (%p308) target = $region84
              $region81: #{rer_basic_block_v2.4} parent=76 // loop_body
                %v314 = vld [vmem:[%s312] sm:%s305]
                %315 = vst [vmem:[%s313] sm:%s305] %v314
                %v316 = vld [vmem:[%s312 + $0x4] sm:%s305]
                %317 = vst [vmem:[%s313 + $0x4] sm:%s305] %v316
                %v318 = vld [vmem:[%s312 + $0x8] sm:%s305]
                %319 = vst [vmem:[%s313 + $0x8] sm:%s305] %v318
                %v320 = vld [vmem:[%s312 + $0xd8] sm:%s305]
                %321 = vst [vmem:[%s313 + $0xc] sm:%s305] %v320
                %v322 = vld [vmem:[%s312 + $0xdc] sm:%s305]
                %323 = vst [vmem:[%s313 + $0x10] sm:%s305] %v322
                %v324 = vld [vmem:[%s312 + $0xe0] sm:%s305]
                %325 = vst [vmem:[%s313 + $0x14] sm:%s305] %v324
              $region82: #{rer_basic_block_v2.4} parent=76 // loop_footer
                %s311 = sadd.s32 1, %s307
              $region83: #{rer_basic_block_v2.4} parent=76 // loop_footer_branch
                %306 = sbr.rel target = $region79
              $region84: #{rer_basic_block_v2.4} parent=76 // loop_exit
                _
            $region77: #{rer_basic_block_v2.4} parent=68 // pred_fallthru
              _
          $region69: #{rer_basic_block_v2.4} parent=64 // pred_fallthru
            _
          %358 = vnop
        $region65: #{rer_basic_block_v2.4} parent=19 // pred_fallthru
          _
        // Predicated region
        $region103: #{rer_basic_block_v2.4} parent=19 // pred_check
          %p359 = pneg %p89
        $region104: #{rer_basic_block_v2.4} parent=19 // pred_check_branch
          %361 = sbr.rel (%p359) target = $region106
        $region105: #{rer_basic_block_v2.4} parent=19 // pred_region
          %s362 = sand.u32 %s79, 1
          %s363 = sand.u32 %s79, 1
          %s364 = smul.addr %s363, 24
          %s365 = scalar_lea.vmem [#allocation4], %s364
          %s366 = sadd.s32 %s13, 2
          %s367 = smul.addr %s366, 3
          %s368 = smul.addr %s367, 4
          %s369 = scalar_lea.vmem %s2, %s368
          // Predicated region
          $region107: #{rer_basic_block_v2.4} parent=105 // pred_check
            _
          $region108: #{rer_basic_block_v2.4} parent=105 // pred_check_branch
            %371 = sbr.rel (0) target = $region110
          $region109: #{rer_basic_block_v2.4} parent=105 // pred_region
            // Predicated region
            $region111: #{rer_basic_block_v2.4} parent=109 // pred_check
              _
            $region112: #{rer_basic_block_v2.4} parent=109 // pred_check_branch
              %373 = sbr.rel target = $region114
            $region113: #{rer_basic_block_v2.4} parent=109 // pred_region
              // Predicated region
              $region126: #{rer_basic_block_v2.4} parent=113 // pred_check
                _
              $region127: #{rer_basic_block_v2.4} parent=113 // pred_check_branch
                %399 = sbr.rel (0) target = $region129
              $region128: #{rer_basic_block_v2.4} parent=113 // pred_region
                loop: start=0, step=1, limit=1
                $region130: #{rer_basic_block_v2.4} parent=128 // loop_pre_header
                  _
                $region131: #{rer_basic_block_v2.4} parent=128 // loop_header
                  %s401 = sphi 0, %s405
                  %p402 = scmp.ge.s32.totalorder %s401, 1
                  %s406 = sphi %s369, %s369
                  %s407 = sphi %s365, %s365
                $region132: #{rer_basic_block_v2.4} parent=128 // loop_header_branch
                  %404 = sbr.rel (%p402) target = $region136
                $region133: #{rer_basic_block_v2.4} parent=128 // loop_body
                  _
                $region134: #{rer_basic_block_v2.4} parent=128 // loop_footer
                  %s405 = sadd.s32 1, %s401
                $region135: #{rer_basic_block_v2.4} parent=128 // loop_footer_branch
                  %400 = sbr.rel target = $region131
                $region136: #{rer_basic_block_v2.4} parent=128 // loop_exit
                  _
                %s409 = ssub.s32 16, 1
                loop: start=0, step=1, limit=1
                $region137: #{rer_basic_block_v2.4} parent=128 // loop_pre_header
                  _
                $region138: #{rer_basic_block_v2.4} parent=128 // loop_header
                  %s411 = sphi 0, %s415
                  %p412 = scmp.ge.s32.totalorder %s411, 1
                  %s416 = sphi %s369, %s369
                  %s417 = sphi %s365, %s365
                $region139: #{rer_basic_block_v2.4} parent=128 // loop_header_branch
                  %414 = sbr.rel (%p412) target = $region143
                $region140: #{rer_basic_block_v2.4} parent=128 // loop_body
                  %v418 = vld [vmem:[%s416] sm:%s409]
                  %419 = vst [vmem:[%s417] sm:%s409] %v418
                  %v420 = vld [vmem:[%s416 + $0x4] sm:%s409]
                  %421 = vst [vmem:[%s417 + $0x4] sm:%s409] %v420
                  %v422 = vld [vmem:[%s416 + $0x8] sm:%s409]
                  %423 = vst [vmem:[%s417 + $0x8] sm:%s409] %v422
                  %v424 = vld [vmem:[%s416 + $0xd8] sm:%s409]
                  %425 = vst [vmem:[%s417 + $0xc] sm:%s409] %v424
                  %v426 = vld [vmem:[%s416 + $0xdc] sm:%s409]
                  %427 = vst [vmem:[%s417 + $0x10] sm:%s409] %v426
                  %v428 = vld [vmem:[%s416 + $0xe0] sm:%s409]
                  %429 = vst [vmem:[%s417 + $0x14] sm:%s409] %v428
                $region141: #{rer_basic_block_v2.4} parent=128 // loop_footer
                  %s415 = sadd.s32 1, %s411
                $region142: #{rer_basic_block_v2.4} parent=128 // loop_footer_branch
                  %410 = sbr.rel target = $region138
                $region143: #{rer_basic_block_v2.4} parent=128 // loop_exit
                  _
              $region129: #{rer_basic_block_v2.4} parent=113 // pred_fallthru
                _
            $region114: #{rer_basic_block_v2.4} parent=109 // pred_fallthru
              _
            // Predicated region
            $region115: #{rer_basic_block_v2.4} parent=109 // pred_check
              _
            $region116: #{rer_basic_block_v2.4} parent=109 // pred_check_branch
              %375 = sbr.rel (0) target = $region118
            $region117: #{rer_basic_block_v2.4} parent=109 // pred_region
              %s377 = ssub.s32 16, 1
              loop: start=0, step=1, limit=1
              $region119: #{rer_basic_block_v2.4} parent=117 // loop_pre_header
                _
              $region120: #{rer_basic_block_v2.4} parent=117 // loop_header
                %s379 = sphi 0, %s383
                %p380 = scmp.ge.s32.totalorder %s379, 1
                %s384 = sphi %s369, %s369
                %s385 = sphi %s365, %s365
              $region121: #{rer_basic_block_v2.4} parent=117 // loop_header_branch
                %382 = sbr.rel (%p380) target = $region125
              $region122: #{rer_basic_block_v2.4} parent=117 // loop_body
                %v386 = vld [vmem:[%s384] sm:%s377]
                %387 = vst [vmem:[%s385] sm:%s377] %v386
                %v388 = vld [vmem:[%s384 + $0x4] sm:%s377]
                %389 = vst [vmem:[%s385 + $0x4] sm:%s377] %v388
                %v390 = vld [vmem:[%s384 + $0x8] sm:%s377]
                %391 = vst [vmem:[%s385 + $0x8] sm:%s377] %v390
                %v392 = vld [vmem:[%s384 + $0xd8] sm:%s377]
                %393 = vst [vmem:[%s385 + $0xc] sm:%s377] %v392
                %v394 = vld [vmem:[%s384 + $0xdc] sm:%s377]
                %395 = vst [vmem:[%s385 + $0x10] sm:%s377] %v394
                %v396 = vld [vmem:[%s384 + $0xe0] sm:%s377]
                %397 = vst [vmem:[%s385 + $0x14] sm:%s377] %v396
              $region123: #{rer_basic_block_v2.4} parent=117 // loop_footer
                %s383 = sadd.s32 1, %s379
              $region124: #{rer_basic_block_v2.4} parent=117 // loop_footer_branch
                %378 = sbr.rel target = $region120
              $region125: #{rer_basic_block_v2.4} parent=117 // loop_exit
                _
            $region118: #{rer_basic_block_v2.4} parent=109 // pred_fallthru
              _
          $region110: #{rer_basic_block_v2.4} parent=105 // pred_fallthru
            _
          %430 = vnop
        $region106: #{rer_basic_block_v2.4} parent=19 // pred_fallthru
          _
      $region20: #{rer_basic_block_v2.4} parent=5 // pred_fallthru
        _
      %p431 = scmp.le.s32.totalorder 1, %s13
      %p432 = scmp.lt.s32.totalorder %s13, 17
      %p433 = pnand %p431, %p432
      %p434 = pneg %p433
      // Predicated region
      $region144: #{rer_basic_block_v2.4} parent=5 // pred_check
        _
      $region145: #{rer_basic_block_v2.4} parent=5 // pred_check_branch
        %436 = sbr.rel (%p433) target = $region147
      $region146: #{rer_basic_block_v2.4} parent=5 // pred_region
        %s437 = ssub.s32 %s13, 1
        %s438 = sand.u32 %s26, 1
        %s439 = sand.u32 %s26, 1
        %s440 = smul.addr %s439, 24
        %s441 = scalar_lea.vmem [#allocation2], %s440
        // Predicated region
        $region148: #{rer_basic_block_v2.4} parent=146 // pred_check
          %p442 = pneg %p39
        $region149: #{rer_basic_block_v2.4} parent=146 // pred_check_branch
          %444 = sbr.rel (%p442) target = $region151
        $region150: #{rer_basic_block_v2.4} parent=146 // pred_region
          _
        $region151: #{rer_basic_block_v2.4} parent=146 // pred_fallthru
          _
        %s445 = sand.u32 %s54, 1
        %s446 = sand.u32 %s54, 1
        %s447 = smul.addr %s446, 24
        %s448 = scalar_lea.vmem [#allocation3], %s447
        // Predicated region
        $region152: #{rer_basic_block_v2.4} parent=146 // pred_check
          %p449 = pneg %p67
        $region153: #{rer_basic_block_v2.4} parent=146 // pred_check_branch
          %451 = sbr.rel (%p449) target = $region155
        $region154: #{rer_basic_block_v2.4} parent=146 // pred_region
          _
        $region155: #{rer_basic_block_v2.4} parent=146 // pred_fallthru
          _
        %s452 = sand.u32 %s82, 1
        %s453 = sand.u32 %s82, 1
        %s454 = smul.addr %s453, 24
        %s455 = scalar_lea.vmem [#allocation4], %s454
        // Predicated region
        $region156: #{rer_basic_block_v2.4} parent=146 // pred_check
          %p456 = pneg %p95
        $region157: #{rer_basic_block_v2.4} parent=146 // pred_check_branch
          %458 = sbr.rel (%p456) target = $region159
        $region158: #{rer_basic_block_v2.4} parent=146 // pred_region
          _
        $region159: #{rer_basic_block_v2.4} parent=146 // pred_fallthru
          _
        %s459 = sand.u32 %s26, 1
        %s460 = sand.u32 %s26, 1
        %s461 = smul.addr %s460, 24
        %s462 = scalar_lea.vmem [#allocation2], %s461
        %p463 = pneg %p39
        %p464 = pneg %p36
        %s465 = sand.u32 %s54, 1
        %s466 = sand.u32 %s54, 1
        %s467 = smul.addr %s466, 24
        %s468 = scalar_lea.vmem [#allocation3], %s467
        %p469 = pneg %p67
        %p470 = pneg %p64
        %s471 = sand.u32 %s82, 1
        %s472 = sand.u32 %s82, 1
        %s473 = smul.addr %s472, 24
        %s474 = scalar_lea.vmem [#allocation4], %s473
        %p475 = pneg %p95
        %p476 = pneg %p92
        %p477 = pneg %p116
        %p478 = pneg %p113
        %p479 = pneg %p142
        %p480 = pneg %p139
        %s481 = sand.u32 %s129, 1
        %s482 = sand.u32 %s129, 1
        %s483 = smul.addr %s482, 16
        %s484 = scalar_lea.vmem [#allocation5], %s483
        %p485 = pneg %p168
        %p486 = pneg %p165
        %p487 = scmp.lt.s32.totalorder %s18, 15
        %s488 = scalar_select %p487, %s18, 15
        %s489 = smul.addr %s488, 8
        %s490 = scalar_lea.vmem %s5, %s489
        %p491 = pneg %p194
        %p492 = pneg %p191
        %p493 = scmp.lt.s32.totalorder %s18, 15
        %s494 = scalar_select %p493, %s18, 15
        %s495 = smul.addr %s494, 8
        %s496 = scalar_lea.vmem %s6, %s495
        %s497 = sadd.s32 %s18, 1
        %s498 = sadd.s32 %s18, 2
        %p499 = scmp.lt.s32.totalorder %s18, 15
        %s500 = scalar_select %p499, %s18, 15
        %s501 = smul.addr %s500, 8
        %s502 = scalar_lea.vmem %s5, %s501
        %p503 = scmp.lt.s32.totalorder %s18, 15
        %s504 = scalar_select %p503, %s18, 15
        %s505 = smul.addr %s504, 8
        %s506 = scalar_lea.vmem %s6, %s505
        %v508 = vld [vmem:[%s441] sm:$0xf]
        %v509 = vld [vmem:[%s441 + $0x4] sm:$0xf]
        %v510 = vld [vmem:[%s441 + $0x8] sm:$0x1]
        %v511 = vld [vmem:[%s441 + $0xc] sm:$0xf]
        %v512 = vld [vmem:[%s441 + $0x10] sm:$0xf]
        %v513 = vld [vmem:[%s441 + $0x14] sm:$0x1]
        %v514 = vld [vmem:[%s3] sm:$0xf]
        %v515 = vld [vmem:[%s3 + $0x4] sm:$0xf]
        %v516 = vld [vmem:[%s3 + $0x8] sm:$0xf]
        %v517 = vld [vmem:[%s3 + $0xc] sm:$0xf]
        %v518 = vld [vmem:[%s3 + $0x10] sm:$0xf]
        %v519 = vld [vmem:[%s3 + $0x14] sm:$0xf]
        %v520 = vld [vmem:[%s3 + $0x18] sm:$0xf]
        %v521 = vld [vmem:[%s3 + $0x1c] sm:$0xf]
        %v522 = vld [vmem:[%s3 + $0x20] sm:$0xf]
        %v523 = vld [vmem:[%s3 + $0x24] sm:$0xf]
        %v524 = vld [vmem:[%s3 + $0x28] sm:$0xf]
        %v525 = vld [vmem:[%s3 + $0x2c] sm:$0xf]
        %v526 = vld [vmem:[%s3 + $0x30] sm:$0xf]
        %v527 = vld [vmem:[%s3 + $0x34] sm:$0xf]
        %v528 = vld [vmem:[%s3 + $0x38] sm:$0xf]
        %v529 = vld [vmem:[%s3 + $0x3c] sm:$0xf]
        %vm530 = vsmask.f32 3328
        %vm531 = vsmask.f32 7440
        %vm532 = vmor %vm530, %vm531
        %v534 = vshrl.u32 %v508, 16
        %v536 = vrot.slane %v534, 4
        %v537 = vshll.u32 %v508, 16
        %v539 = vrot.slane %v537, 5
        %v540 = vor.u32 %v536, %v539
        %v541 = vrot.slane %v540, 4
        %v543 = vshll.u32 %v509, 16
        %v545 = vrot.slane %v543, 5
        %v546 = vsel %vm532, %v541, %v545
        %v547 = vshrl.u32 %v509, 16
        %v549 = vrot.slane %v547, 4
        %v550 = vor.u32 %v549, %v545
        %v551 = vrot.slane %v550, 4
        %v553 = vshll.u32 %v510, 16
        %v555 = vrot.slane %v553, 5
        %v556 = vsel %vm532, %v551, %v555
        %v558 = vshrl.u32 %v511, 16
        %v560 = vrot.slane %v558, 4
        %v561 = vshll.u32 %v511, 16
        %v563 = vrot.slane %v561, 5
        %v564 = vor.u32 %v560, %v563
        %v565 = vrot.slane %v564, 4
        %v567 = vshll.u32 %v512, 16
        %v569 = vrot.slane %v567, 5
        %v570 = vsel %vm532, %v565, %v569
        %v571 = vshrl.u32 %v512, 16
        %v573 = vrot.slane %v571, 4
        %v574 = vor.u32 %v573, %v569
        %v575 = vrot.slane %v574, 4
        %v577 = vshll.u32 %v513, 16
        %v579 = vrot.slane %v577, 5
        %v580 = vsel %vm532, %v575, %v579
        %s581 = scalar_lea.vmem %s3, 64
        %v582 = vld [vmem:[%s581] sm:$0xf]
        %v583 = vld [vmem:[%s581 + $0x4] sm:$0xf]
        %v584 = vld [vmem:[%s581 + $0x8] sm:$0xf]
        %v585 = vld [vmem:[%s581 + $0xc] sm:$0xf]
        %v586 = vld [vmem:[%s581 + $0x10] sm:$0xf]
        %v587 = vld [vmem:[%s581 + $0x14] sm:$0xf]
        %v588 = vld [vmem:[%s581 + $0x18] sm:$0xf]
        %v589 = vld [vmem:[%s581 + $0x1c] sm:$0xf]
        %v590 = vld [vmem:[%s581 + $0x20] sm:$0xf]
        %v591 = vld [vmem:[%s581 + $0x24] sm:$0xf]
        %v592 = vld [vmem:[%s581 + $0x28] sm:$0xf]
        %v593 = vld [vmem:[%s581 + $0x2c] sm:$0xf]
        %v594 = vld [vmem:[%s581 + $0x30] sm:$0xf]
        %v595 = vld [vmem:[%s581 + $0x34] sm:$0xf]
        %v596 = vld [vmem:[%s581 + $0x38] sm:$0xf]
        %v597 = vld [vmem:[%s581 + $0x3c] sm:$0xf]
        %v598 = vunpack.c.l.b16 %v546
        %v599 = vunpack.c.l.b16 %v556
        %v600 = vunpack.c.l.b16 %v570
        %v601 = vunpack.c.l.b16 %v580
        %v602 = vpack.c.b16 %v599, %v598
        %v603 = vpack.c.b16 %v601, %v600
        %v622 = vunpack.c.l.b16 %v582
        %v623 = vunpack.c.l.b16 %v583
        %v624 = vunpack.c.l.b16 %v584
        %v625 = vunpack.c.l.b16 %v585
        %v626 = vunpack.c.l.b16 %v586
        %v627 = vunpack.c.l.b16 %v587
        %v628 = vunpack.c.l.b16 %v588
        %v629 = vunpack.c.l.b16 %v589
        %v630 = vunpack.c.l.b16 %v590
        %v631 = vunpack.c.l.b16 %v591
        %v632 = vunpack.c.l.b16 %v592
        %v633 = vunpack.c.l.b16 %v593
        %v634 = vunpack.c.l.b16 %v594
        %v635 = vunpack.c.l.b16 %v595
        %v636 = vunpack.c.l.b16 %v596
        %v637 = vunpack.c.l.b16 %v597
        %v638 = vpack.c.b16 %v623, %v622
        %v639 = vpack.c.b16 %v625, %v624
        %v640 = vpack.c.b16 %v627, %v626
        %v641 = vpack.c.b16 %v629, %v628
        %v642 = vpack.c.b16 %v631, %v630
        %v643 = vpack.c.b16 %v633, %v632
        %v644 = vpack.c.b16 %v635, %v634
        %v645 = vpack.c.b16 %v637, %v636
        %654 = vmatprep.subr.bf16.mxu0 0
        %655 = vmatpush1.bf16.msra.mxu0 %v645
        %656 = vmatprep.subr.bf16.mxu0 0
        %657 = vmatpush1.bf16.msra.mxu0 %v644
        %658 = vmatprep.subr.bf16.mxu0 0
        %659 = vmatpush1.bf16.msra.mxu0 %v643
        %660 = vmatprep.subr.bf16.mxu0 0
        %661 = vmatpush1.bf16.msra.mxu0 %v642
        %662 = vmatprep.subr.bf16.mxu0 0
        %663 = vmatpush1.bf16.msra.mxu0 %v641
        %664 = vmatprep.subr.bf16.mxu0 0
        %665 = vmatpush1.bf16.msra.mxu0 %v640
        %666 = vmatprep.subr.bf16.mxu0 0
        %667 = vmatpush1.bf16.msra.mxu0 %v639
        %668 = vmatprep.subr.bf16.mxu0 0
        %669 = vmatpush1.bf16.msra.mxu0 %v638
        %670 = vmatprep.subr.bf16.mxu0 0
        %671 = vmatpush2.bf16.msra.mxu0 0
        %672 = vmatprep.subr.bf16.mxu0 0
        %673 = vmatpush2.bf16.msra.mxu0 0
        %674 = vmatprep.subr.bf16.mxu0 0
        %675 = vmatpush2.bf16.msra.mxu0 0
        %676 = vmatprep.subr.bf16.mxu0 0
        %677 = vmatpush2.bf16.msra.mxu0 0
        %678 = vmatprep.subr.bf16.mxu0 0
        %679 = vmatpush2.bf16.msra.mxu0 0
        %680 = vmatprep.subr.bf16.mxu0 0
        %681 = vmatpush2.bf16.msra.mxu0 0
        %682 = vmatprep.subr.bf16.mxu0 0
        %683 = vmatpush2.bf16.msra.mxu0 0
        %684 = vmatprep.subr.bf16.mxu0 0
        %685 = vmatpush2.bf16.msra.mxu0 0
        %686 = vmatprep.mubr.bf16.mxu0 0
        %687 = vmatmul.mubr.bf16.gmra.mxu0 %v602
        %v688 = vpop.f32.mrf.mxu0
        %v689 = vadd.f32 0.0, %v688
        %v690 = vpop.f32.mrf.mxu0
        %v691 = vpop.f32.mrf.mxu0
        %v692 = vadd.f32 0.0, %v691
        %v693 = vpop.f32.mrf.mxu0
        %694 = vmatprep.mubr.bf16.mxu0 0
        %695 = vmatmul.mubr.bf16.gmra.mxu0 %v603
        %v696 = vpop.f32.mrf.mxu0
        %v697 = vadd.f32 0.0, %v696
        %v698 = vpop.f32.mrf.mxu0
        %v699 = vpop.f32.mrf.mxu0
        %v700 = vadd.f32 0.0, %v699
        %v701 = vpop.f32.mrf.mxu0
        %702 = vdwg.mxu0
        %v707 = vunpack.c.l.b16 %v508
        %v708 = vunpack.c.l.b16 %v509
        %v709 = vunpack.c.l.b16 %v511
        %v710 = vunpack.c.l.b16 %v512
        %v711 = vpack.c.b16 %v708, %v707
        %v712 = vpack.c.b16 %v710, %v709
        %v731 = vunpack.c.l.b16 %v514
        %v732 = vunpack.c.l.b16 %v515
        %v733 = vunpack.c.l.b16 %v516
        %v734 = vunpack.c.l.b16 %v517
        %v735 = vunpack.c.l.b16 %v518
        %v736 = vunpack.c.l.b16 %v519
        %v737 = vunpack.c.l.b16 %v520
        %v738 = vunpack.c.l.b16 %v521
        %v739 = vunpack.c.l.b16 %v522
        %v740 = vunpack.c.l.b16 %v523
        %v741 = vunpack.c.l.b16 %v524
        %v742 = vunpack.c.l.b16 %v525
        %v743 = vunpack.c.l.b16 %v526
        %v744 = vunpack.c.l.b16 %v527
        %v745 = vunpack.c.l.b16 %v528
        %v746 = vunpack.c.l.b16 %v529
        %v747 = vpack.c.b16 %v732, %v731
        %v748 = vpack.c.b16 %v734, %v733
        %v749 = vpack.c.b16 %v736, %v735
        %v750 = vpack.c.b16 %v738, %v737
        %v751 = vpack.c.b16 %v740, %v739
        %v752 = vpack.c.b16 %v742, %v741
        %v753 = vpack.c.b16 %v744, %v743
        %v754 = vpack.c.b16 %v746, %v745
        %763 = vmatprep.subr.bf16.mxu0 0
        %764 = vmatpush1.bf16.msra.mxu0 %v754
        %765 = vmatprep.subr.bf16.mxu0 0
        %766 = vmatpush1.bf16.msra.mxu0 %v753
        %767 = vmatprep.subr.bf16.mxu0 0
        %768 = vmatpush1.bf16.msra.mxu0 %v752
        %769 = vmatprep.subr.bf16.mxu0 0
        %770 = vmatpush1.bf16.msra.mxu0 %v751
        %771 = vmatprep.subr.bf16.mxu0 0
        %772 = vmatpush1.bf16.msra.mxu0 %v750
        %773 = vmatprep.subr.bf16.mxu0 0
        %774 = vmatpush1.bf16.msra.mxu0 %v749
        %775 = vmatprep.subr.bf16.mxu0 0
        %776 = vmatpush1.bf16.msra.mxu0 %v748
        %777 = vmatprep.subr.bf16.mxu0 0
        %778 = vmatpush1.bf16.msra.mxu0 %v747
        %779 = vmatprep.subr.bf16.mxu0 0
        %780 = vmatpush2.bf16.msra.mxu0 0
        %781 = vmatprep.subr.bf16.mxu0 0
        %782 = vmatpush2.bf16.msra.mxu0 0
        %783 = vmatprep.subr.bf16.mxu0 0
        %784 = vmatpush2.bf16.msra.mxu0 0
        %785 = vmatprep.subr.bf16.mxu0 0
        %786 = vmatpush2.bf16.msra.mxu0 0
        %787 = vmatprep.subr.bf16.mxu0 0
        %788 = vmatpush2.bf16.msra.mxu0 0
        %789 = vmatprep.subr.bf16.mxu0 0
        %790 = vmatpush2.bf16.msra.mxu0 0
        %791 = vmatprep.subr.bf16.mxu0 0
        %792 = vmatpush2.bf16.msra.mxu0 0
        %793 = vmatprep.subr.bf16.mxu0 0
        %794 = vmatpush2.bf16.msra.mxu0 0
        %795 = vmatprep.mubr.bf16.mxu0 0
        %796 = vmatmul.mubr.bf16.gmra.mxu0 %v711
        %v797 = vpop.f32.mrf.mxu0
        %v798 = vadd.f32 %v689, %v797
        %v799 = vpop.f32.mrf.mxu0
        %v800 = vpop.f32.mrf.mxu0
        %v801 = vadd.f32 %v692, %v800
        %v802 = vpop.f32.mrf.mxu0
        %803 = vmatprep.mubr.bf16.mxu0 0
        %804 = vmatmul.mubr.bf16.gmra.mxu0 %v712
        %v805 = vpop.f32.mrf.mxu0
        %v806 = vadd.f32 %v697, %v805
        %v807 = vpop.f32.mrf.mxu0
        %v808 = vpop.f32.mrf.mxu0
        %v809 = vadd.f32 %v700, %v808
        %v810 = vpop.f32.mrf.mxu0
        %811 = vdwg.mxu0
        %vm814 = vcmask 1042432
        %vm815 = vcmask 1046532
        %vm816 = vmor %vm814, %vm815
        %v817 = vrot.slane %v508, 5
        %v818 = vrot.slane %v817, 4
        %v819 = vrot.slane %v509, 5
        %v820 = vsel %vm816, %v818, %v819
        %v821 = vrot.slane %v819, 4
        %v822 = vrot.slane %v510, 5
        %v823 = vsel %vm816, %v821, %v822
        %v824 = vrot.slane %v511, 5
        %v825 = vrot.slane %v824, 4
        %v826 = vrot.slane %v512, 5
        %v827 = vsel %vm816, %v825, %v826
        %v828 = vrot.slane %v826, 4
        %v829 = vrot.slane %v513, 5
        %v830 = vsel %vm816, %v828, %v829
        %s831 = scalar_lea.vmem %s3, 128
        %v832 = vld [vmem:[%s831] sm:$0xf]
        %v833 = vld [vmem:[%s831 + $0x4] sm:$0xf]
        %v834 = vld [vmem:[%s831 + $0x8] sm:$0xf]
        %v835 = vld [vmem:[%s831 + $0xc] sm:$0xf]
        %v836 = vld [vmem:[%s831 + $0x10] sm:$0xf]
        %v837 = vld [vmem:[%s831 + $0x14] sm:$0xf]
        %v838 = vld [vmem:[%s831 + $0x18] sm:$0xf]
        %v839 = vld [vmem:[%s831 + $0x1c] sm:$0xf]
        %v840 = vld [vmem:[%s831 + $0x20] sm:$0xf]
        %v841 = vld [vmem:[%s831 + $0x24] sm:$0xf]
        %v842 = vld [vmem:[%s831 + $0x28] sm:$0xf]
        %v843 = vld [vmem:[%s831 + $0x2c] sm:$0xf]
        %v844 = vld [vmem:[%s831 + $0x30] sm:$0xf]
        %v845 = vld [vmem:[%s831 + $0x34] sm:$0xf]
        %v846 = vld [vmem:[%s831 + $0x38] sm:$0xf]
        %v847 = vld [vmem:[%s831 + $0x3c] sm:$0xf]
        %v848 = vunpack.c.l.b16 %v820
        %v849 = vunpack.c.l.b16 %v823
        %v850 = vunpack.c.l.b16 %v827
        %v851 = vunpack.c.l.b16 %v830
        %v852 = vpack.c.b16 %v849, %v848
        %v853 = vpack.c.b16 %v851, %v850
        %v872 = vunpack.c.l.b16 %v832
        %v873 = vunpack.c.l.b16 %v833
        %v874 = vunpack.c.l.b16 %v834
        %v875 = vunpack.c.l.b16 %v835
        %v876 = vunpack.c.l.b16 %v836
        %v877 = vunpack.c.l.b16 %v837
        %v878 = vunpack.c.l.b16 %v838
        %v879 = vunpack.c.l.b16 %v839
        %v880 = vunpack.c.l.b16 %v840
        %v881 = vunpack.c.l.b16 %v841
        %v882 = vunpack.c.l.b16 %v842
        %v883 = vunpack.c.l.b16 %v843
        %v884 = vunpack.c.l.b16 %v844
        %v885 = vunpack.c.l.b16 %v845
        %v886 = vunpack.c.l.b16 %v846
        %v887 = vunpack.c.l.b16 %v847
        %v888 = vpack.c.b16 %v873, %v872
        %v889 = vpack.c.b16 %v875, %v874
        %v890 = vpack.c.b16 %v877, %v876
        %v891 = vpack.c.b16 %v879, %v878
        %v892 = vpack.c.b16 %v881, %v880
        %v893 = vpack.c.b16 %v883, %v882
        %v894 = vpack.c.b16 %v885, %v884
        %v895 = vpack.c.b16 %v887, %v886
        %904 = vmatprep.subr.bf16.mxu0 0
        %905 = vmatpush1.bf16.msra.mxu0 %v895
        %906 = vmatprep.subr.bf16.mxu0 0
        %907 = vmatpush1.bf16.msra.mxu0 %v894
        %908 = vmatprep.subr.bf16.mxu0 0
        %909 = vmatpush1.bf16.msra.mxu0 %v893
        %910 = vmatprep.subr.bf16.mxu0 0
        %911 = vmatpush1.bf16.msra.mxu0 %v892
        %912 = vmatprep.subr.bf16.mxu0 0
        %913 = vmatpush1.bf16.msra.mxu0 %v891
        %914 = vmatprep.subr.bf16.mxu0 0
        %915 = vmatpush1.bf16.msra.mxu0 %v890
        %916 = vmatprep.subr.bf16.mxu0 0
        %917 = vmatpush1.bf16.msra.mxu0 %v889
        %918 = vmatprep.subr.bf16.mxu0 0
        %919 = vmatpush1.bf16.msra.mxu0 %v888
        %920 = vmatprep.subr.bf16.mxu0 0
        %921 = vmatpush2.bf16.msra.mxu0 0
        %922 = vmatprep.subr.bf16.mxu0 0
        %923 = vmatpush2.bf16.msra.mxu0 0
        %924 = vmatprep.subr.bf16.mxu0 0
        %925 = vmatpush2.bf16.msra.mxu0 0
        %926 = vmatprep.subr.bf16.mxu0 0
        %927 = vmatpush2.bf16.msra.mxu0 0
        %928 = vmatprep.subr.bf16.mxu0 0
        %929 = vmatpush2.bf16.msra.mxu0 0
        %930 = vmatprep.subr.bf16.mxu0 0
        %931 = vmatpush2.bf16.msra.mxu0 0
        %932 = vmatprep.subr.bf16.mxu0 0
        %933 = vmatpush2.bf16.msra.mxu0 0
        %934 = vmatprep.subr.bf16.mxu0 0
        %935 = vmatpush2.bf16.msra.mxu0 0
        %936 = vmatprep.mubr.bf16.mxu0 0
        %937 = vmatmul.mubr.bf16.gmra.mxu0 %v852
        %v938 = vpop.f32.mrf.mxu0
        %v939 = vadd.f32 0.0, %v938
        %v940 = vpop.f32.mrf.mxu0
        %v941 = vpop.f32.mrf.mxu0
        %v942 = vadd.f32 0.0, %v941
        %v943 = vpop.f32.mrf.mxu0
        %944 = vmatprep.mubr.bf16.mxu0 0
        %945 = vmatmul.mubr.bf16.gmra.mxu0 %v853
        %v946 = vpop.f32.mrf.mxu0
        %v947 = vadd.f32 0.0, %v946
        %v948 = vpop.f32.mrf.mxu0
        %v949 = vpop.f32.mrf.mxu0
        %v950 = vadd.f32 0.0, %v949
        %v951 = vpop.f32.mrf.mxu0
        %952 = vdwg.mxu0
        %v953 = vadd.f32 %v798, %v939
        %v954 = vadd.f32 %v801, %v942
        %v955 = vadd.f32 %v806, %v947
        %v956 = vadd.f32 %v809, %v950
        %v957 = vld [vmem:[%s448] sm:$0xf]
        %v958 = vld [vmem:[%s448 + $0x4] sm:$0xf]
        %v959 = vld [vmem:[%s448 + $0x8] sm:$0x1]
        %v960 = vld [vmem:[%s448 + $0xc] sm:$0xf]
        %v961 = vld [vmem:[%s448 + $0x10] sm:$0xf]
        %v962 = vld [vmem:[%s448 + $0x14] sm:$0x1]
        %s963 = scalar_lea.vmem %s3, 192
        %v964 = vld [vmem:[%s963] sm:$0xf]
        %v965 = vld [vmem:[%s963 + $0x4] sm:$0xf]
        %v966 = vld [vmem:[%s963 + $0x8] sm:$0xf]
        %v967 = vld [vmem:[%s963 + $0xc] sm:$0xf]
        %v968 = vld [vmem:[%s963 + $0x10] sm:$0xf]
        %v969 = vld [vmem:[%s963 + $0x14] sm:$0xf]
        %v970 = vld [vmem:[%s963 + $0x18] sm:$0xf]
        %v971 = vld [vmem:[%s963 + $0x1c] sm:$0xf]
        %v972 = vld [vmem:[%s963 + $0x20] sm:$0xf]
        %v973 = vld [vmem:[%s963 + $0x24] sm:$0xf]
        %v974 = vld [vmem:[%s963 + $0x28] sm:$0xf]
        %v975 = vld [vmem:[%s963 + $0x2c] sm:$0xf]
        %v976 = vld [vmem:[%s963 + $0x30] sm:$0xf]
        %v977 = vld [vmem:[%s963 + $0x34] sm:$0xf]
        %v978 = vld [vmem:[%s963 + $0x38] sm:$0xf]
        %v979 = vld [vmem:[%s963 + $0x3c] sm:$0xf]
        %v984 = vunpack.c.l.b16 %v957
        %v985 = vunpack.c.l.b16 %v958
        %v986 = vunpack.c.l.b16 %v960
        %v987 = vunpack.c.l.b16 %v961
        %v988 = vpack.c.b16 %v985, %v984
        %v989 = vpack.c.b16 %v987, %v986
        %v1008 = vunpack.c.l.b16 %v964
        %v1009 = vunpack.c.l.b16 %v965
        %v1010 = vunpack.c.l.b16 %v966
        %v1011 = vunpack.c.l.b16 %v967
        %v1012 = vunpack.c.l.b16 %v968
        %v1013 = vunpack.c.l.b16 %v969
        %v1014 = vunpack.c.l.b16 %v970
        %v1015 = vunpack.c.l.b16 %v971
        %v1016 = vunpack.c.l.b16 %v972
        %v1017 = vunpack.c.l.b16 %v973
        %v1018 = vunpack.c.l.b16 %v974
        %v1019 = vunpack.c.l.b16 %v975
        %v1020 = vunpack.c.l.b16 %v976
        %v1021 = vunpack.c.l.b16 %v977
        %v1022 = vunpack.c.l.b16 %v978
        %v1023 = vunpack.c.l.b16 %v979
        %v1024 = vpack.c.b16 %v1009, %v1008
        %v1025 = vpack.c.b16 %v1011, %v1010
        %v1026 = vpack.c.b16 %v1013, %v1012
        %v1027 = vpack.c.b16 %v1015, %v1014
        %v1028 = vpack.c.b16 %v1017, %v1016
        %v1029 = vpack.c.b16 %v1019, %v1018
        %v1030 = vpack.c.b16 %v1021, %v1020
        %v1031 = vpack.c.b16 %v1023, %v1022
        %1040 = vmatprep.subr.bf16.mxu0 0
        %1041 = vmatpush1.bf16.msra.mxu0 %v1031
        %1042 = vmatprep.subr.bf16.mxu0 0
        %1043 = vmatpush1.bf16.msra.mxu0 %v1030
        %1044 = vmatprep.subr.bf16.mxu0 0
        %1045 = vmatpush1.bf16.msra.mxu0 %v1029
        %1046 = vmatprep.subr.bf16.mxu0 0
        %1047 = vmatpush1.bf16.msra.mxu0 %v1028
        %1048 = vmatprep.subr.bf16.mxu0 0
        %1049 = vmatpush1.bf16.msra.mxu0 %v1027
        %1050 = vmatprep.subr.bf16.mxu0 0
        %1051 = vmatpush1.bf16.msra.mxu0 %v1026
        %1052 = vmatprep.subr.bf16.mxu0 0
        %1053 = vmatpush1.bf16.msra.mxu0 %v1025
        %1054 = vmatprep.subr.bf16.mxu0 0
        %1055 = vmatpush1.bf16.msra.mxu0 %v1024
        %1056 = vmatprep.subr.bf16.mxu0 0
        %1057 = vmatpush2.bf16.msra.mxu0 0
        %1058 = vmatprep.subr.bf16.mxu0 0
        %1059 = vmatpush2.bf16.msra.mxu0 0
        %1060 = vmatprep.subr.bf16.mxu0 0
        %1061 = vmatpush2.bf16.msra.mxu0 0
        %1062 = vmatprep.subr.bf16.mxu0 0
        %1063 = vmatpush2.bf16.msra.mxu0 0
        %1064 = vmatprep.subr.bf16.mxu0 0
        %1065 = vmatpush2.bf16.msra.mxu0 0
        %1066 = vmatprep.subr.bf16.mxu0 0
        %1067 = vmatpush2.bf16.msra.mxu0 0
        %1068 = vmatprep.subr.bf16.mxu0 0
        %1069 = vmatpush2.bf16.msra.mxu0 0
        %1070 = vmatprep.subr.bf16.mxu0 0
        %1071 = vmatpush2.bf16.msra.mxu0 0
        %1072 = vmatprep.mubr.bf16.mxu0 0
        %1073 = vmatmul.mubr.bf16.gmra.mxu0 %v988
        %v1074 = vpop.f32.mrf.mxu0
        %v1075 = vadd.f32 0.0, %v1074
        %v1076 = vpop.f32.mrf.mxu0
        %v1077 = vpop.f32.mrf.mxu0
        %v1078 = vadd.f32 0.0, %v1077
        %v1079 = vpop.f32.mrf.mxu0
        %1080 = vmatprep.mubr.bf16.mxu0 0
        %1081 = vmatmul.mubr.bf16.gmra.mxu0 %v989
        %v1082 = vpop.f32.mrf.mxu0
        %v1083 = vadd.f32 0.0, %v1082
        %v1084 = vpop.f32.mrf.mxu0
        %v1085 = vpop.f32.mrf.mxu0
        %v1086 = vadd.f32 0.0, %v1085
        %v1087 = vpop.f32.mrf.mxu0
        %1088 = vdwg.mxu0
        %v1089 = vadd.f32 %v953, %v1075
        %v1090 = vadd.f32 %v954, %v1078
        %v1091 = vadd.f32 %v955, %v1083
        %v1092 = vadd.f32 %v956, %v1086
        %v1094 = vshrl.u32 %v957, 16
        %v1096 = vrot.slane %v1094, 4
        %v1097 = vshll.u32 %v957, 16
        %v1099 = vrot.slane %v1097, 5
        %v1100 = vor.u32 %v1096, %v1099
        %v1101 = vrot.slane %v1100, 4
        %v1103 = vshll.u32 %v958, 16
        %v1105 = vrot.slane %v1103, 5
        %v1106 = vsel %vm532, %v1101, %v1105
        %v1107 = vshrl.u32 %v958, 16
        %v1109 = vrot.slane %v1107, 4
        %v1110 = vor.u32 %v1109, %v1105
        %v1111 = vrot.slane %v1110, 4
        %v1113 = vshll.u32 %v959, 16
        %v1115 = vrot.slane %v1113, 5
        %v1116 = vsel %vm532, %v1111, %v1115
        %v1118 = vshrl.u32 %v960, 16
        %v1120 = vrot.slane %v1118, 4
        %v1121 = vshll.u32 %v960, 16
        %v1123 = vrot.slane %v1121, 5
        %v1124 = vor.u32 %v1120, %v1123
        %v1125 = vrot.slane %v1124, 4
        %v1127 = vshll.u32 %v961, 16
        %v1129 = vrot.slane %v1127, 5
        %v1130 = vsel %vm532, %v1125, %v1129
        %v1131 = vshrl.u32 %v961, 16
        %v1133 = vrot.slane %v1131, 4
        %v1134 = vor.u32 %v1133, %v1129
        %v1135 = vrot.slane %v1134, 4
        %v1137 = vshll.u32 %v962, 16
        %v1139 = vrot.slane %v1137, 5
        %v1140 = vsel %vm532, %v1135, %v1139
        %s1141 = scalar_lea.vmem %s3, 256
        %v1142 = vld [vmem:[%s1141] sm:$0xf]
        %v1143 = vld [vmem:[%s1141 + $0x4] sm:$0xf]
        %v1144 = vld [vmem:[%s1141 + $0x8] sm:$0xf]
        %v1145 = vld [vmem:[%s1141 + $0xc] sm:$0xf]
        %v1146 = vld [vmem:[%s1141 + $0x10] sm:$0xf]
        %v1147 = vld [vmem:[%s1141 + $0x14] sm:$0xf]
        %v1148 = vld [vmem:[%s1141 + $0x18] sm:$0xf]
        %v1149 = vld [vmem:[%s1141 + $0x1c] sm:$0xf]
        %v1150 = vld [vmem:[%s1141 + $0x20] sm:$0xf]
        %v1151 = vld [vmem:[%s1141 + $0x24] sm:$0xf]
        %v1152 = vld [vmem:[%s1141 + $0x28] sm:$0xf]
        %v1153 = vld [vmem:[%s1141 + $0x2c] sm:$0xf]
        %v1154 = vld [vmem:[%s1141 + $0x30] sm:$0xf]
        %v1155 = vld [vmem:[%s1141 + $0x34] sm:$0xf]
        %v1156 = vld [vmem:[%s1141 + $0x38] sm:$0xf]
        %v1157 = vld [vmem:[%s1141 + $0x3c] sm:$0xf]
        %v1158 = vunpack.c.l.b16 %v1106
        %v1159 = vunpack.c.l.b16 %v1116
        %v1160 = vunpack.c.l.b16 %v1130
        %v1161 = vunpack.c.l.b16 %v1140
        %v1162 = vpack.c.b16 %v1159, %v1158
        %v1163 = vpack.c.b16 %v1161, %v1160
        %v1182 = vunpack.c.l.b16 %v1142
        %v1183 = vunpack.c.l.b16 %v1143
        %v1184 = vunpack.c.l.b16 %v1144
        %v1185 = vunpack.c.l.b16 %v1145
        %v1186 = vunpack.c.l.b16 %v1146
        %v1187 = vunpack.c.l.b16 %v1147
        %v1188 = vunpack.c.l.b16 %v1148
        %v1189 = vunpack.c.l.b16 %v1149
        %v1190 = vunpack.c.l.b16 %v1150
        %v1191 = vunpack.c.l.b16 %v1151
        %v1192 = vunpack.c.l.b16 %v1152
        %v1193 = vunpack.c.l.b16 %v1153
        %v1194 = vunpack.c.l.b16 %v1154
        %v1195 = vunpack.c.l.b16 %v1155
        %v1196 = vunpack.c.l.b16 %v1156
        %v1197 = vunpack.c.l.b16 %v1157
        %v1198 = vpack.c.b16 %v1183, %v1182
        %v1199 = vpack.c.b16 %v1185, %v1184
        %v1200 = vpack.c.b16 %v1187, %v1186
        %v1201 = vpack.c.b16 %v1189, %v1188
        %v1202 = vpack.c.b16 %v1191, %v1190
        %v1203 = vpack.c.b16 %v1193, %v1192
        %v1204 = vpack.c.b16 %v1195, %v1194
        %v1205 = vpack.c.b16 %v1197, %v1196
        %1214 = vmatprep.subr.bf16.mxu0 0
        %1215 = vmatpush1.bf16.msra.mxu0 %v1205
        %1216 = vmatprep.subr.bf16.mxu0 0
        %1217 = vmatpush1.bf16.msra.mxu0 %v1204
        %1218 = vmatprep.subr.bf16.mxu0 0
        %1219 = vmatpush1.bf16.msra.mxu0 %v1203
        %1220 = vmatprep.subr.bf16.mxu0 0
        %1221 = vmatpush1.bf16.msra.mxu0 %v1202
        %1222 = vmatprep.subr.bf16.mxu0 0
        %1223 = vmatpush1.bf16.msra.mxu0 %v1201
        %1224 = vmatprep.subr.bf16.mxu0 0
        %1225 = vmatpush1.bf16.msra.mxu0 %v1200
        %1226 = vmatprep.subr.bf16.mxu0 0
        %1227 = vmatpush1.bf16.msra.mxu0 %v1199
        %1228 = vmatprep.subr.bf16.mxu0 0
        %1229 = vmatpush1.bf16.msra.mxu0 %v1198
        %1230 = vmatprep.subr.bf16.mxu0 0
        %1231 = vmatpush2.bf16.msra.mxu0 0
        %1232 = vmatprep.subr.bf16.mxu0 0
        %1233 = vmatpush2.bf16.msra.mxu0 0
        %1234 = vmatprep.subr.bf16.mxu0 0
        %1235 = vmatpush2.bf16.msra.mxu0 0
        %1236 = vmatprep.subr.bf16.mxu0 0
        %1237 = vmatpush2.bf16.msra.mxu0 0
        %1238 = vmatprep.subr.bf16.mxu0 0
        %1239 = vmatpush2.bf16.msra.mxu0 0
        %1240 = vmatprep.subr.bf16.mxu0 0
        %1241 = vmatpush2.bf16.msra.mxu0 0
        %1242 = vmatprep.subr.bf16.mxu0 0
        %1243 = vmatpush2.bf16.msra.mxu0 0
        %1244 = vmatprep.subr.bf16.mxu0 0
        %1245 = vmatpush2.bf16.msra.mxu0 0
        %1246 = vmatprep.mubr.bf16.mxu0 0
        %1247 = vmatmul.mubr.bf16.gmra.mxu0 %v1162
        %v1248 = vpop.f32.mrf.mxu0
        %v1249 = vadd.f32 0.0, %v1248
        %v1250 = vpop.f32.mrf.mxu0
        %v1251 = vpop.f32.mrf.mxu0
        %v1252 = vadd.f32 0.0, %v1251
        %v1253 = vpop.f32.mrf.mxu0
        %1254 = vmatprep.mubr.bf16.mxu0 0
        %1255 = vmatmul.mubr.bf16.gmra.mxu0 %v1163
        %v1256 = vpop.f32.mrf.mxu0
        %v1257 = vadd.f32 0.0, %v1256
        %v1258 = vpop.f32.mrf.mxu0
        %v1259 = vpop.f32.mrf.mxu0
        %v1260 = vadd.f32 0.0, %v1259
        %v1261 = vpop.f32.mrf.mxu0
        %1262 = vdwg.mxu0
        %v1263 = vadd.f32 %v1089, %v1249
        %v1264 = vadd.f32 %v1090, %v1252
        %v1265 = vadd.f32 %v1091, %v1257
        %v1266 = vadd.f32 %v1092, %v1260
        %v1269 = vrot.slane %v957, 5
        %v1270 = vrot.slane %v1269, 4
        %v1271 = vrot.slane %v958, 5
        %v1272 = vsel %vm816, %v1270, %v1271
        %v1273 = vrot.slane %v1271, 4
        %v1274 = vrot.slane %v959, 5
        %v1275 = vsel %vm816, %v1273, %v1274
        %v1276 = vrot.slane %v960, 5
        %v1277 = vrot.slane %v1276, 4
        %v1278 = vrot.slane %v961, 5
        %v1279 = vsel %vm816, %v1277, %v1278
        %v1280 = vrot.slane %v1278, 4
        %v1281 = vrot.slane %v962, 5
        %v1282 = vsel %vm816, %v1280, %v1281
        %s1283 = scalar_lea.vmem %s3, 320
        %v1284 = vld [vmem:[%s1283] sm:$0xf]
        %v1285 = vld [vmem:[%s1283 + $0x4] sm:$0xf]
        %v1286 = vld [vmem:[%s1283 + $0x8] sm:$0xf]
        %v1287 = vld [vmem:[%s1283 + $0xc] sm:$0xf]
        %v1288 = vld [vmem:[%s1283 + $0x10] sm:$0xf]
        %v1289 = vld [vmem:[%s1283 + $0x14] sm:$0xf]
        %v1290 = vld [vmem:[%s1283 + $0x18] sm:$0xf]
        %v1291 = vld [vmem:[%s1283 + $0x1c] sm:$0xf]
        %v1292 = vld [vmem:[%s1283 + $0x20] sm:$0xf]
        %v1293 = vld [vmem:[%s1283 + $0x24] sm:$0xf]
        %v1294 = vld [vmem:[%s1283 + $0x28] sm:$0xf]
        %v1295 = vld [vmem:[%s1283 + $0x2c] sm:$0xf]
        %v1296 = vld [vmem:[%s1283 + $0x30] sm:$0xf]
        %v1297 = vld [vmem:[%s1283 + $0x34] sm:$0xf]
        %v1298 = vld [vmem:[%s1283 + $0x38] sm:$0xf]
        %v1299 = vld [vmem:[%s1283 + $0x3c] sm:$0xf]
        %v1300 = vunpack.c.l.b16 %v1272
        %v1301 = vunpack.c.l.b16 %v1275
        %v1302 = vunpack.c.l.b16 %v1279
        %v1303 = vunpack.c.l.b16 %v1282
        %v1304 = vpack.c.b16 %v1301, %v1300
        %v1305 = vpack.c.b16 %v1303, %v1302
        %v1324 = vunpack.c.l.b16 %v1284
        %v1325 = vunpack.c.l.b16 %v1285
        %v1326 = vunpack.c.l.b16 %v1286
        %v1327 = vunpack.c.l.b16 %v1287
        %v1328 = vunpack.c.l.b16 %v1288
        %v1329 = vunpack.c.l.b16 %v1289
        %v1330 = vunpack.c.l.b16 %v1290
        %v1331 = vunpack.c.l.b16 %v1291
        %v1332 = vunpack.c.l.b16 %v1292
        %v1333 = vunpack.c.l.b16 %v1293
        %v1334 = vunpack.c.l.b16 %v1294
        %v1335 = vunpack.c.l.b16 %v1295
        %v1336 = vunpack.c.l.b16 %v1296
        %v1337 = vunpack.c.l.b16 %v1297
        %v1338 = vunpack.c.l.b16 %v1298
        %v1339 = vunpack.c.l.b16 %v1299
        %v1340 = vpack.c.b16 %v1325, %v1324
        %v1341 = vpack.c.b16 %v1327, %v1326
        %v1342 = vpack.c.b16 %v1329, %v1328
        %v1343 = vpack.c.b16 %v1331, %v1330
        %v1344 = vpack.c.b16 %v1333, %v1332
        %v1345 = vpack.c.b16 %v1335, %v1334
        %v1346 = vpack.c.b16 %v1337, %v1336
        %v1347 = vpack.c.b16 %v1339, %v1338
        %1356 = vmatprep.subr.bf16.mxu0 0
        %1357 = vmatpush1.bf16.msra.mxu0 %v1347
        %1358 = vmatprep.subr.bf16.mxu0 0
        %1359 = vmatpush1.bf16.msra.mxu0 %v1346
        %1360 = vmatprep.subr.bf16.mxu0 0
        %1361 = vmatpush1.bf16.msra.mxu0 %v1345
        %1362 = vmatprep.subr.bf16.mxu0 0
        %1363 = vmatpush1.bf16.msra.mxu0 %v1344
        %1364 = vmatprep.subr.bf16.mxu0 0
        %1365 = vmatpush1.bf16.msra.mxu0 %v1343
        %1366 = vmatprep.subr.bf16.mxu0 0
        %1367 = vmatpush1.bf16.msra.mxu0 %v1342
        %1368 = vmatprep.subr.bf16.mxu0 0
        %1369 = vmatpush1.bf16.msra.mxu0 %v1341
        %1370 = vmatprep.subr.bf16.mxu0 0
        %1371 = vmatpush1.bf16.msra.mxu0 %v1340
        %1372 = vmatprep.subr.bf16.mxu0 0
        %1373 = vmatpush2.bf16.msra.mxu0 0
        %1374 = vmatprep.subr.bf16.mxu0 0
        %1375 = vmatpush2.bf16.msra.mxu0 0
        %1376 = vmatprep.subr.bf16.mxu0 0
        %1377 = vmatpush2.bf16.msra.mxu0 0
        %1378 = vmatprep.subr.bf16.mxu0 0
        %1379 = vmatpush2.bf16.msra.mxu0 0
        %1380 = vmatprep.subr.bf16.mxu0 0
        %1381 = vmatpush2.bf16.msra.mxu0 0
        %1382 = vmatprep.subr.bf16.mxu0 0
        %1383 = vmatpush2.bf16.msra.mxu0 0
        %1384 = vmatprep.subr.bf16.mxu0 0
        %1385 = vmatpush2.bf16.msra.mxu0 0
        %1386 = vmatprep.subr.bf16.mxu0 0
        %1387 = vmatpush2.bf16.msra.mxu0 0
        %1388 = vmatprep.mubr.bf16.mxu0 0
        %1389 = vmatmul.mubr.bf16.gmra.mxu0 %v1304
        %v1390 = vpop.f32.mrf.mxu0
        %v1391 = vadd.f32 0.0, %v1390
        %v1392 = vpop.f32.mrf.mxu0
        %v1393 = vpop.f32.mrf.mxu0
        %v1394 = vadd.f32 0.0, %v1393
        %v1395 = vpop.f32.mrf.mxu0
        %1396 = vmatprep.mubr.bf16.mxu0 0
        %1397 = vmatmul.mubr.bf16.gmra.mxu0 %v1305
        %v1398 = vpop.f32.mrf.mxu0
        %v1399 = vadd.f32 0.0, %v1398
        %v1400 = vpop.f32.mrf.mxu0
        %v1401 = vpop.f32.mrf.mxu0
        %v1402 = vadd.f32 0.0, %v1401
        %v1403 = vpop.f32.mrf.mxu0
        %1404 = vdwg.mxu0
        %v1405 = vadd.f32 %v1263, %v1391
        %v1406 = vadd.f32 %v1264, %v1394
        %v1407 = vadd.f32 %v1265, %v1399
        %v1408 = vadd.f32 %v1266, %v1402
        %v1409 = vld [vmem:[%s455] sm:$0xf]
        %v1410 = vld [vmem:[%s455 + $0x4] sm:$0xf]
        %v1411 = vld [vmem:[%s455 + $0x8] sm:$0x1]
        %v1412 = vld [vmem:[%s455 + $0xc] sm:$0xf]
        %v1413 = vld [vmem:[%s455 + $0x10] sm:$0xf]
        %v1414 = vld [vmem:[%s455 + $0x14] sm:$0x1]
        %s1415 = scalar_lea.vmem %s3, 384
        %v1416 = vld [vmem:[%s1415] sm:$0xf]
        %v1417 = vld [vmem:[%s1415 + $0x4] sm:$0xf]
        %v1418 = vld [vmem:[%s1415 + $0x8] sm:$0xf]
        %v1419 = vld [vmem:[%s1415 + $0xc] sm:$0xf]
        %v1420 = vld [vmem:[%s1415 + $0x10] sm:$0xf]
        %v1421 = vld [vmem:[%s1415 + $0x14] sm:$0xf]
        %v1422 = vld [vmem:[%s1415 + $0x18] sm:$0xf]
        %v1423 = vld [vmem:[%s1415 + $0x1c] sm:$0xf]
        %v1424 = vld [vmem:[%s1415 + $0x20] sm:$0xf]
        %v1425 = vld [vmem:[%s1415 + $0x24] sm:$0xf]
        %v1426 = vld [vmem:[%s1415 + $0x28] sm:$0xf]
        %v1427 = vld [vmem:[%s1415 + $0x2c] sm:$0xf]
        %v1428 = vld [vmem:[%s1415 + $0x30] sm:$0xf]
        %v1429 = vld [vmem:[%s1415 + $0x34] sm:$0xf]
        %v1430 = vld [vmem:[%s1415 + $0x38] sm:$0xf]
        %v1431 = vld [vmem:[%s1415 + $0x3c] sm:$0xf]
        %v1436 = vunpack.c.l.b16 %v1409
        %v1437 = vunpack.c.l.b16 %v1410
        %v1438 = vunpack.c.l.b16 %v1412
        %v1439 = vunpack.c.l.b16 %v1413
        %v1440 = vpack.c.b16 %v1437, %v1436
        %v1441 = vpack.c.b16 %v1439, %v1438
        %v1460 = vunpack.c.l.b16 %v1416
        %v1461 = vunpack.c.l.b16 %v1417
        %v1462 = vunpack.c.l.b16 %v1418
        %v1463 = vunpack.c.l.b16 %v1419
        %v1464 = vunpack.c.l.b16 %v1420
        %v1465 = vunpack.c.l.b16 %v1421
        %v1466 = vunpack.c.l.b16 %v1422
        %v1467 = vunpack.c.l.b16 %v1423
        %v1468 = vunpack.c.l.b16 %v1424
        %v1469 = vunpack.c.l.b16 %v1425
        %v1470 = vunpack.c.l.b16 %v1426
        %v1471 = vunpack.c.l.b16 %v1427
        %v1472 = vunpack.c.l.b16 %v1428
        %v1473 = vunpack.c.l.b16 %v1429
        %v1474 = vunpack.c.l.b16 %v1430
        %v1475 = vunpack.c.l.b16 %v1431
        %v1476 = vpack.c.b16 %v1461, %v1460
        %v1477 = vpack.c.b16 %v1463, %v1462
        %v1478 = vpack.c.b16 %v1465, %v1464
        %v1479 = vpack.c.b16 %v1467, %v1466
        %v1480 = vpack.c.b16 %v1469, %v1468
        %v1481 = vpack.c.b16 %v1471, %v1470
        %v1482 = vpack.c.b16 %v1473, %v1472
        %v1483 = vpack.c.b16 %v1475, %v1474
        %1492 = vmatprep.subr.bf16.mxu0 0
        %1493 = vmatpush1.bf16.msra.mxu0 %v1483
        %1494 = vmatprep.subr.bf16.mxu0 0
        %1495 = vmatpush1.bf16.msra.mxu0 %v1482
        %1496 = vmatprep.subr.bf16.mxu0 0
        %1497 = vmatpush1.bf16.msra.mxu0 %v1481
        %1498 = vmatprep.subr.bf16.mxu0 0
        %1499 = vmatpush1.bf16.msra.mxu0 %v1480
        %1500 = vmatprep.subr.bf16.mxu0 0
        %1501 = vmatpush1.bf16.msra.mxu0 %v1479
        %1502 = vmatprep.subr.bf16.mxu0 0
        %1503 = vmatpush1.bf16.msra.mxu0 %v1478
        %1504 = vmatprep.subr.bf16.mxu0 0
        %1505 = vmatpush1.bf16.msra.mxu0 %v1477
        %1506 = vmatprep.subr.bf16.mxu0 0
        %1507 = vmatpush1.bf16.msra.mxu0 %v1476
        %1508 = vmatprep.subr.bf16.mxu0 0
        %1509 = vmatpush2.bf16.msra.mxu0 0
        %1510 = vmatprep.subr.bf16.mxu0 0
        %1511 = vmatpush2.bf16.msra.mxu0 0
        %1512 = vmatprep.subr.bf16.mxu0 0
        %1513 = vmatpush2.bf16.msra.mxu0 0
        %1514 = vmatprep.subr.bf16.mxu0 0
        %1515 = vmatpush2.bf16.msra.mxu0 0
        %1516 = vmatprep.subr.bf16.mxu0 0
        %1517 = vmatpush2.bf16.msra.mxu0 0
        %1518 = vmatprep.subr.bf16.mxu0 0
        %1519 = vmatpush2.bf16.msra.mxu0 0
        %1520 = vmatprep.subr.bf16.mxu0 0
        %1521 = vmatpush2.bf16.msra.mxu0 0
        %1522 = vmatprep.subr.bf16.mxu0 0
        %1523 = vmatpush2.bf16.msra.mxu0 0
        %1524 = vmatprep.mubr.bf16.mxu0 0
        %1525 = vmatmul.mubr.bf16.gmra.mxu0 %v1440
        %v1526 = vpop.f32.mrf.mxu0
        %v1527 = vadd.f32 0.0, %v1526
        %v1528 = vpop.f32.mrf.mxu0
        %v1529 = vpop.f32.mrf.mxu0
        %v1530 = vadd.f32 0.0, %v1529
        %v1531 = vpop.f32.mrf.mxu0
        %1532 = vmatprep.mubr.bf16.mxu0 0
        %1533 = vmatmul.mubr.bf16.gmra.mxu0 %v1441
        %v1534 = vpop.f32.mrf.mxu0
        %v1535 = vadd.f32 0.0, %v1534
        %v1536 = vpop.f32.mrf.mxu0
        %v1537 = vpop.f32.mrf.mxu0
        %v1538 = vadd.f32 0.0, %v1537
        %v1539 = vpop.f32.mrf.mxu0
        %1540 = vdwg.mxu0
        %v1541 = vadd.f32 %v1405, %v1527
        %v1542 = vadd.f32 %v1406, %v1530
        %v1543 = vadd.f32 %v1407, %v1535
        %v1544 = vadd.f32 %v1408, %v1538
        %v1546 = vshrl.u32 %v1409, 16
        %v1548 = vrot.slane %v1546, 4
        %v1549 = vshll.u32 %v1409, 16
        %v1551 = vrot.slane %v1549, 5
        %v1552 = vor.u32 %v1548, %v1551
        %v1553 = vrot.slane %v1552, 4
        %v1555 = vshll.u32 %v1410, 16
        %v1557 = vrot.slane %v1555, 5
        %v1558 = vsel %vm532, %v1553, %v1557
        %v1559 = vshrl.u32 %v1410, 16
        %v1561 = vrot.slane %v1559, 4
        %v1562 = vor.u32 %v1561, %v1557
        %v1563 = vrot.slane %v1562, 4
        %v1565 = vshll.u32 %v1411, 16
        %v1567 = vrot.slane %v1565, 5
        %v1568 = vsel %vm532, %v1563, %v1567
        %v1570 = vshrl.u32 %v1412, 16
        %v1572 = vrot.slane %v1570, 4
        %v1573 = vshll.u32 %v1412, 16
        %v1575 = vrot.slane %v1573, 5
        %v1576 = vor.u32 %v1572, %v1575
        %v1577 = vrot.slane %v1576, 4
        %v1579 = vshll.u32 %v1413, 16
        %v1581 = vrot.slane %v1579, 5
        %v1582 = vsel %vm532, %v1577, %v1581
        %v1583 = vshrl.u32 %v1413, 16
        %v1585 = vrot.slane %v1583, 4
        %v1586 = vor.u32 %v1585, %v1581
        %v1587 = vrot.slane %v1586, 4
        %v1589 = vshll.u32 %v1414, 16
        %v1591 = vrot.slane %v1589, 5
        %v1592 = vsel %vm532, %v1587, %v1591
        %s1593 = scalar_lea.vmem %s3, 448
        %v1594 = vld [vmem:[%s1593] sm:$0xf]
        %v1595 = vld [vmem:[%s1593 + $0x4] sm:$0xf]
        %v1596 = vld [vmem:[%s1593 + $0x8] sm:$0xf]
        %v1597 = vld [vmem:[%s1593 + $0xc] sm:$0xf]
        %v1598 = vld [vmem:[%s1593 + $0x10] sm:$0xf]
        %v1599 = vld [vmem:[%s1593 + $0x14] sm:$0xf]
        %v1600 = vld [vmem:[%s1593 + $0x18] sm:$0xf]
        %v1601 = vld [vmem:[%s1593 + $0x1c] sm:$0xf]
        %v1602 = vld [vmem:[%s1593 + $0x20] sm:$0xf]
        %v1603 = vld [vmem:[%s1593 + $0x24] sm:$0xf]
        %v1604 = vld [vmem:[%s1593 + $0x28] sm:$0xf]
        %v1605 = vld [vmem:[%s1593 + $0x2c] sm:$0xf]
        %v1606 = vld [vmem:[%s1593 + $0x30] sm:$0xf]
        %v1607 = vld [vmem:[%s1593 + $0x34] sm:$0xf]
        %v1608 = vld [vmem:[%s1593 + $0x38] sm:$0xf]
        %v1609 = vld [vmem:[%s1593 + $0x3c] sm:$0xf]
        %v1610 = vunpack.c.l.b16 %v1558
        %v1611 = vunpack.c.l.b16 %v1568
        %v1612 = vunpack.c.l.b16 %v1582
        %v1613 = vunpack.c.l.b16 %v1592
        %v1614 = vpack.c.b16 %v1611, %v1610
        %v1615 = vpack.c.b16 %v1613, %v1612
        %v1634 = vunpack.c.l.b16 %v1594
        %v1635 = vunpack.c.l.b16 %v1595
        %v1636 = vunpack.c.l.b16 %v1596
        %v1637 = vunpack.c.l.b16 %v1597
        %v1638 = vunpack.c.l.b16 %v1598
        %v1639 = vunpack.c.l.b16 %v1599
        %v1640 = vunpack.c.l.b16 %v1600
        %v1641 = vunpack.c.l.b16 %v1601
        %v1642 = vunpack.c.l.b16 %v1602
        %v1643 = vunpack.c.l.b16 %v1603
        %v1644 = vunpack.c.l.b16 %v1604
        %v1645 = vunpack.c.l.b16 %v1605
        %v1646 = vunpack.c.l.b16 %v1606
        %v1647 = vunpack.c.l.b16 %v1607
        %v1648 = vunpack.c.l.b16 %v1608
        %v1649 = vunpack.c.l.b16 %v1609
        %v1650 = vpack.c.b16 %v1635, %v1634
        %v1651 = vpack.c.b16 %v1637, %v1636
        %v1652 = vpack.c.b16 %v1639, %v1638
        %v1653 = vpack.c.b16 %v1641, %v1640
        %v1654 = vpack.c.b16 %v1643, %v1642
        %v1655 = vpack.c.b16 %v1645, %v1644
        %v1656 = vpack.c.b16 %v1647, %v1646
        %v1657 = vpack.c.b16 %v1649, %v1648
        %1666 = vmatprep.subr.bf16.mxu0 0
        %1667 = vmatpush1.bf16.msra.mxu0 %v1657
        %1668 = vmatprep.subr.bf16.mxu0 0
        %1669 = vmatpush1.bf16.msra.mxu0 %v1656
        %1670 = vmatprep.subr.bf16.mxu0 0
        %1671 = vmatpush1.bf16.msra.mxu0 %v1655
        %1672 = vmatprep.subr.bf16.mxu0 0
        %1673 = vmatpush1.bf16.msra.mxu0 %v1654
        %1674 = vmatprep.subr.bf16.mxu0 0
        %1675 = vmatpush1.bf16.msra.mxu0 %v1653
        %1676 = vmatprep.subr.bf16.mxu0 0
        %1677 = vmatpush1.bf16.msra.mxu0 %v1652
        %1678 = vmatprep.subr.bf16.mxu0 0
        %1679 = vmatpush1.bf16.msra.mxu0 %v1651
        %1680 = vmatprep.subr.bf16.mxu0 0
        %1681 = vmatpush1.bf16.msra.mxu0 %v1650
        %1682 = vmatprep.subr.bf16.mxu0 0
        %1683 = vmatpush2.bf16.msra.mxu0 0
        %1684 = vmatprep.subr.bf16.mxu0 0
        %1685 = vmatpush2.bf16.msra.mxu0 0
        %1686 = vmatprep.subr.bf16.mxu0 0
        %1687 = vmatpush2.bf16.msra.mxu0 0
        %1688 = vmatprep.subr.bf16.mxu0 0
        %1689 = vmatpush2.bf16.msra.mxu0 0
        %1690 = vmatprep.subr.bf16.mxu0 0
        %1691 = vmatpush2.bf16.msra.mxu0 0
        %1692 = vmatprep.subr.bf16.mxu0 0
        %1693 = vmatpush2.bf16.msra.mxu0 0
        %1694 = vmatprep.subr.bf16.mxu0 0
        %1695 = vmatpush2.bf16.msra.mxu0 0
        %1696 = vmatprep.subr.bf16.mxu0 0
        %1697 = vmatpush2.bf16.msra.mxu0 0
        %1698 = vmatprep.mubr.bf16.mxu0 0
        %1699 = vmatmul.mubr.bf16.gmra.mxu0 %v1614
        %v1700 = vpop.f32.mrf.mxu0
        %v1701 = vadd.f32 0.0, %v1700
        %v1702 = vpop.f32.mrf.mxu0
        %v1703 = vpop.f32.mrf.mxu0
        %v1704 = vadd.f32 0.0, %v1703
        %v1705 = vpop.f32.mrf.mxu0
        %1706 = vmatprep.mubr.bf16.mxu0 0
        %1707 = vmatmul.mubr.bf16.gmra.mxu0 %v1615
        %v1708 = vpop.f32.mrf.mxu0
        %v1709 = vadd.f32 0.0, %v1708
        %v1710 = vpop.f32.mrf.mxu0
        %v1711 = vpop.f32.mrf.mxu0
        %v1712 = vadd.f32 0.0, %v1711
        %v1713 = vpop.f32.mrf.mxu0
        %1714 = vdwg.mxu0
        %v1715 = vadd.f32 %v1541, %v1701
        %v1716 = vadd.f32 %v1542, %v1704
        %v1717 = vadd.f32 %v1543, %v1709
        %v1718 = vadd.f32 %v1544, %v1712
        %v1721 = vrot.slane %v1409, 5
        %v1722 = vrot.slane %v1721, 4
        %v1723 = vrot.slane %v1410, 5
        %v1724 = vsel %vm816, %v1722, %v1723
        %v1725 = vrot.slane %v1723, 4
        %v1726 = vrot.slane %v1411, 5
        %v1727 = vsel %vm816, %v1725, %v1726
        %v1728 = vrot.slane %v1412, 5
        %v1729 = vrot.slane %v1728, 4
        %v1730 = vrot.slane %v1413, 5
        %v1731 = vsel %vm816, %v1729, %v1730
        %v1732 = vrot.slane %v1730, 4
        %v1733 = vrot.slane %v1414, 5
        %v1734 = vsel %vm816, %v1732, %v1733
        %s1735 = scalar_lea.vmem %s3, 512
        %v1736 = vld [vmem:[%s1735] sm:$0xf]
        %v1737 = vld [vmem:[%s1735 + $0x4] sm:$0xf]
        %v1738 = vld [vmem:[%s1735 + $0x8] sm:$0xf]
        %v1739 = vld [vmem:[%s1735 + $0xc] sm:$0xf]
        %v1740 = vld [vmem:[%s1735 + $0x10] sm:$0xf]
        %v1741 = vld [vmem:[%s1735 + $0x14] sm:$0xf]
        %v1742 = vld [vmem:[%s1735 + $0x18] sm:$0xf]
        %v1743 = vld [vmem:[%s1735 + $0x1c] sm:$0xf]
        %v1744 = vld [vmem:[%s1735 + $0x20] sm:$0xf]
        %v1745 = vld [vmem:[%s1735 + $0x24] sm:$0xf]
        %v1746 = vld [vmem:[%s1735 + $0x28] sm:$0xf]
        %v1747 = vld [vmem:[%s1735 + $0x2c] sm:$0xf]
        %v1748 = vld [vmem:[%s1735 + $0x30] sm:$0xf]
        %v1749 = vld [vmem:[%s1735 + $0x34] sm:$0xf]
        %v1750 = vld [vmem:[%s1735 + $0x38] sm:$0xf]
        %v1751 = vld [vmem:[%s1735 + $0x3c] sm:$0xf]
        %v1752 = vunpack.c.l.b16 %v1724
        %v1753 = vunpack.c.l.b16 %v1727
        %v1754 = vunpack.c.l.b16 %v1731
        %v1755 = vunpack.c.l.b16 %v1734
        %v1756 = vpack.c.b16 %v1753, %v1752
        %v1757 = vpack.c.b16 %v1755, %v1754
        %v1776 = vunpack.c.l.b16 %v1736
        %v1777 = vunpack.c.l.b16 %v1737
        %v1778 = vunpack.c.l.b16 %v1738
        %v1779 = vunpack.c.l.b16 %v1739
        %v1780 = vunpack.c.l.b16 %v1740
        %v1781 = vunpack.c.l.b16 %v1741
        %v1782 = vunpack.c.l.b16 %v1742
        %v1783 = vunpack.c.l.b16 %v1743
        %v1784 = vunpack.c.l.b16 %v1744
        %v1785 = vunpack.c.l.b16 %v1745
        %v1786 = vunpack.c.l.b16 %v1746
        %v1787 = vunpack.c.l.b16 %v1747
        %v1788 = vunpack.c.l.b16 %v1748
        %v1789 = vunpack.c.l.b16 %v1749
        %v1790 = vunpack.c.l.b16 %v1750
        %v1791 = vunpack.c.l.b16 %v1751
        %v1792 = vpack.c.b16 %v1777, %v1776
        %v1793 = vpack.c.b16 %v1779, %v1778
        %v1794 = vpack.c.b16 %v1781, %v1780
        %v1795 = vpack.c.b16 %v1783, %v1782
        %v1796 = vpack.c.b16 %v1785, %v1784
        %v1797 = vpack.c.b16 %v1787, %v1786
        %v1798 = vpack.c.b16 %v1789, %v1788
        %v1799 = vpack.c.b16 %v1791, %v1790
        %1808 = vmatprep.subr.bf16.mxu0 0
        %1809 = vmatpush1.bf16.msra.mxu0 %v1799
        %1810 = vmatprep.subr.bf16.mxu0 0
        %1811 = vmatpush1.bf16.msra.mxu0 %v1798
        %1812 = vmatprep.subr.bf16.mxu0 0
        %1813 = vmatpush1.bf16.msra.mxu0 %v1797
        %1814 = vmatprep.subr.bf16.mxu0 0
        %1815 = vmatpush1.bf16.msra.mxu0 %v1796
        %1816 = vmatprep.subr.bf16.mxu0 0
        %1817 = vmatpush1.bf16.msra.mxu0 %v1795
        %1818 = vmatprep.subr.bf16.mxu0 0
        %1819 = vmatpush1.bf16.msra.mxu0 %v1794
        %1820 = vmatprep.subr.bf16.mxu0 0
        %1821 = vmatpush1.bf16.msra.mxu0 %v1793
        %1822 = vmatprep.subr.bf16.mxu0 0
        %1823 = vmatpush1.bf16.msra.mxu0 %v1792
        %1824 = vmatprep.subr.bf16.mxu0 0
        %1825 = vmatpush2.bf16.msra.mxu0 0
        %1826 = vmatprep.subr.bf16.mxu0 0
        %1827 = vmatpush2.bf16.msra.mxu0 0
        %1828 = vmatprep.subr.bf16.mxu0 0
        %1829 = vmatpush2.bf16.msra.mxu0 0
        %1830 = vmatprep.subr.bf16.mxu0 0
        %1831 = vmatpush2.bf16.msra.mxu0 0
        %1832 = vmatprep.subr.bf16.mxu0 0
        %1833 = vmatpush2.bf16.msra.mxu0 0
        %1834 = vmatprep.subr.bf16.mxu0 0
        %1835 = vmatpush2.bf16.msra.mxu0 0
        %1836 = vmatprep.subr.bf16.mxu0 0
        %1837 = vmatpush2.bf16.msra.mxu0 0
        %1838 = vmatprep.subr.bf16.mxu0 0
        %1839 = vmatpush2.bf16.msra.mxu0 0
        %1840 = vmatprep.mubr.bf16.mxu0 0
        %1841 = vmatmul.mubr.bf16.gmra.mxu0 %v1756
        %v1842 = vpop.f32.mrf.mxu0
        %v1843 = vadd.f32 0.0, %v1842
        %v1844 = vpop.f32.mrf.mxu0
        %v1845 = vpop.f32.mrf.mxu0
        %v1846 = vadd.f32 0.0, %v1845
        %v1847 = vpop.f32.mrf.mxu0
        %1848 = vmatprep.mubr.bf16.mxu0 0
        %1849 = vmatmul.mubr.bf16.gmra.mxu0 %v1757
        %v1850 = vpop.f32.mrf.mxu0
        %v1851 = vadd.f32 0.0, %v1850
        %v1852 = vpop.f32.mrf.mxu0
        %v1853 = vpop.f32.mrf.mxu0
        %v1854 = vadd.f32 0.0, %v1853
        %v1855 = vpop.f32.mrf.mxu0
        %1856 = vdwg.mxu0
        %v1857 = vadd.f32 %v1715, %v1843
        %v1858 = vadd.f32 %v1716, %v1846
        %v1859 = vadd.f32 %v1717, %v1851
        %v1860 = vadd.f32 %v1718, %v1854
        %v1861 = vpack.c.bf16 %v1858, %v1857
        %v1862 = vpack.c.bf16 %v1860, %v1859
        %v1865 = vunpack.c.l.b16 %v1861
        %v1866 = vunpack.c.h.b16 %v1861
        %v1867 = vunpack.c.l.b16 %v1862
        %v1868 = vunpack.c.h.b16 %v1862
        %v1869 = vpack.c.b16 %v1865, %v1865
        %v1870 = vpack.c.b16 %v1866, %v1866
        %v1871 = vpack.c.b16 %v1867, %v1867
        %v1872 = vpack.c.b16 %v1868, %v1868
        %1877 = vst [vmem:[%s484] sm:$0xf] %v1869
        %1878 = vst [vmem:[%s484 + $0x4] sm:$0xf] %v1870
        %1879 = vst [vmem:[%s484 + $0x8] sm:$0xf] %v1871
        %1880 = vst [vmem:[%s484 + $0xc] sm:$0xf] %v1872
        %v1881 = vadd.f32 %v1857, %v1858
        %v1882 = vadd.f32 %v1881, %v1859
        %v1883 = vadd.f32 %v1882, %v1860
        %v1884 = vmul.f32 %v1857, %v1857
        %v1885 = vmul.f32 %v1858, %v1858
        %v1886 = vmul.f32 %v1859, %v1859
        %v1887 = vmul.f32 %v1860, %v1860
        %v1888 = vadd.f32 %v1884, %v1885
        %v1889 = vadd.f32 %v1888, %v1886
        %v1890 = vadd.f32 %v1889, %v1887
        %1891 = vst [vmem:[%s502] sm:$0xff] %v1883
        %1892 = vst [vmem:[%s506] sm:$0xff] %v1890
        %s1893 = sand.u32 %s129, 1
        %s1894 = sand.u32 %s129, 1
        %s1895 = smul.addr %s1894, 16
        %s1896 = scalar_lea.vmem [#allocation5], %s1895
        %p1897 = scmp.lt.s32.totalorder %s18, 15
        %s1898 = scalar_select %p1897, %s18, 15
        %s1899 = smul.addr %s1898, 8
        %s1900 = scalar_lea.vmem %s5, %s1899
        %p1901 = scmp.lt.s32.totalorder %s18, 15
        %s1902 = scalar_select %p1901, %s18, 15
        %s1903 = smul.addr %s1902, 8
        %s1904 = scalar_lea.vmem %s6, %s1903
        // Predicated region
        $region160: #{rer_basic_block_v2.4} parent=146 // pred_check
          %p1905 = pneg %p139
        $region161: #{rer_basic_block_v2.4} parent=146 // pred_check_branch
          %1907 = sbr.rel (%p1905) target = $region163
        $region162: #{rer_basic_block_v2.4} parent=146 // pred_region
          %s1908 = smul.addr %s18, 2
          %s1909 = smul.addr %s1908, 4
          %s1910 = scalar_lea.vmem %s4, %s1909
          // Predicated region
          $region164: #{rer_basic_block_v2.4} parent=162 // pred_check
            _
          $region165: #{rer_basic_block_v2.4} parent=162 // pred_check_branch
            %1912 = sbr.rel (0) target = $region167
          $region166: #{rer_basic_block_v2.4} parent=162 // pred_region
            // Predicated region
            $region168: #{rer_basic_block_v2.4} parent=166 // pred_check
              _
            $region169: #{rer_basic_block_v2.4} parent=166 // pred_check_branch
              %1914 = sbr.rel target = $region171
            $region170: #{rer_basic_block_v2.4} parent=166 // pred_region
              // Predicated region
              $region183: #{rer_basic_block_v2.4} parent=170 // pred_check
                _
              $region184: #{rer_basic_block_v2.4} parent=170 // pred_check_branch
                %1936 = sbr.rel (0) target = $region186
              $region185: #{rer_basic_block_v2.4} parent=170 // pred_region
                loop: start=0, step=1, limit=1
                $region187: #{rer_basic_block_v2.4} parent=185 // loop_pre_header
                  _
                $region188: #{rer_basic_block_v2.4} parent=185 // loop_header
                  %s1938 = sphi 0, %s1942
                  %p1939 = scmp.ge.s32.totalorder %s1938, 1
                  %s1943 = sphi %s1896, %s1896
                  %s1944 = sphi %s1910, %s1910
                $region189: #{rer_basic_block_v2.4} parent=185 // loop_header_branch
                  %1941 = sbr.rel (%p1939) target = $region193
                $region190: #{rer_basic_block_v2.4} parent=185 // loop_body
                  _
                $region191: #{rer_basic_block_v2.4} parent=185 // loop_footer
                  %s1942 = sadd.s32 1, %s1938
                $region192: #{rer_basic_block_v2.4} parent=185 // loop_footer_branch
                  %1937 = sbr.rel target = $region188
                $region193: #{rer_basic_block_v2.4} parent=185 // loop_exit
                  _
                %s1946 = ssub.s32 16, 1
                loop: start=0, step=1, limit=1
                $region194: #{rer_basic_block_v2.4} parent=185 // loop_pre_header
                  _
                $region195: #{rer_basic_block_v2.4} parent=185 // loop_header
                  %s1948 = sphi 0, %s1952
                  %p1949 = scmp.ge.s32.totalorder %s1948, 1
                  %s1953 = sphi %s1896, %s1896
                  %s1954 = sphi %s1910, %s1910
                $region196: #{rer_basic_block_v2.4} parent=185 // loop_header_branch
                  %1951 = sbr.rel (%p1949) target = $region200
                $region197: #{rer_basic_block_v2.4} parent=185 // loop_body
                  %v1955 = vld [vmem:[%s1953] sm:%s1946]
                  %1956 = vst [vmem:[%s1954] sm:%s1946] %v1955
                  %v1957 = vld [vmem:[%s1953 + $0x4] sm:%s1946]
                  %1958 = vst [vmem:[%s1954 + $0x4] sm:%s1946] %v1957
                  %v1959 = vld [vmem:[%s1953 + $0x8] sm:%s1946]
                  %1960 = vst [vmem:[%s1954 + $0x80] sm:%s1946] %v1959
                  %v1961 = vld [vmem:[%s1953 + $0xc] sm:%s1946]
                  %1962 = vst [vmem:[%s1954 + $0x84] sm:%s1946] %v1961
                $region198: #{rer_basic_block_v2.4} parent=185 // loop_footer
                  %s1952 = sadd.s32 1, %s1948
                $region199: #{rer_basic_block_v2.4} parent=185 // loop_footer_branch
                  %1947 = sbr.rel target = $region195
                $region200: #{rer_basic_block_v2.4} parent=185 // loop_exit
                  _
              $region186: #{rer_basic_block_v2.4} parent=170 // pred_fallthru
                _
            $region171: #{rer_basic_block_v2.4} parent=166 // pred_fallthru
              _
            // Predicated region
            $region172: #{rer_basic_block_v2.4} parent=166 // pred_check
              _
            $region173: #{rer_basic_block_v2.4} parent=166 // pred_check_branch
              %1916 = sbr.rel (0) target = $region175
            $region174: #{rer_basic_block_v2.4} parent=166 // pred_region
              %s1918 = ssub.s32 16, 1
              loop: start=0, step=1, limit=1
              $region176: #{rer_basic_block_v2.4} parent=174 // loop_pre_header
                _
              $region177: #{rer_basic_block_v2.4} parent=174 // loop_header
                %s1920 = sphi 0, %s1924
                %p1921 = scmp.ge.s32.totalorder %s1920, 1
                %s1925 = sphi %s1896, %s1896
                %s1926 = sphi %s1910, %s1910
              $region178: #{rer_basic_block_v2.4} parent=174 // loop_header_branch
                %1923 = sbr.rel (%p1921) target = $region182
              $region179: #{rer_basic_block_v2.4} parent=174 // loop_body
                %v1927 = vld [vmem:[%s1925] sm:%s1918]
                %1928 = vst [vmem:[%s1926] sm:%s1918] %v1927
                %v1929 = vld [vmem:[%s1925 + $0x4] sm:%s1918]
                %1930 = vst [vmem:[%s1926 + $0x4] sm:%s1918] %v1929
                %v1931 = vld [vmem:[%s1925 + $0x8] sm:%s1918]
                %1932 = vst [vmem:[%s1926 + $0x80] sm:%s1918] %v1931
                %v1933 = vld [vmem:[%s1925 + $0xc] sm:%s1918]
                %1934 = vst [vmem:[%s1926 + $0x84] sm:%s1918] %v1933
              $region180: #{rer_basic_block_v2.4} parent=174 // loop_footer
                %s1924 = sadd.s32 1, %s1920
              $region181: #{rer_basic_block_v2.4} parent=174 // loop_footer_branch
                %1919 = sbr.rel target = $region177
              $region182: #{rer_basic_block_v2.4} parent=174 // loop_exit
                _
            $region175: #{rer_basic_block_v2.4} parent=166 // pred_fallthru
              _
          $region167: #{rer_basic_block_v2.4} parent=162 // pred_fallthru
            _
          %1963 = vnop
        $region163: #{rer_basic_block_v2.4} parent=146 // pred_fallthru
          _
        // Predicated region
        $region201: #{rer_basic_block_v2.4} parent=146 // pred_check
          %p1964 = pneg %p165
        $region202: #{rer_basic_block_v2.4} parent=146 // pred_check_branch
          %1966 = sbr.rel (%p1964) target = $region204
        $region203: #{rer_basic_block_v2.4} parent=146 // pred_region
          _
        $region204: #{rer_basic_block_v2.4} parent=146 // pred_fallthru
          _
        // Predicated region
        $region205: #{rer_basic_block_v2.4} parent=146 // pred_check
          %p1967 = pneg %p191
        $region206: #{rer_basic_block_v2.4} parent=146 // pred_check_branch
          %1969 = sbr.rel (%p1967) target = $region208
        $region207: #{rer_basic_block_v2.4} parent=146 // pred_region
          _
        $region208: #{rer_basic_block_v2.4} parent=146 // pred_fallthru
          _
      $region147: #{rer_basic_block_v2.4} parent=5 // pred_fallthru
        _
      %p1970 = scmp.le.s32.totalorder 2, %s13
      // Predicated region
      $region209: #{rer_basic_block_v2.4} parent=5 // pred_check
        %p1971 = pneg %p1970
      $region210: #{rer_basic_block_v2.4} parent=5 // pred_check_branch
        %1973 = sbr.rel (%p1971) target = $region212
      $region211: #{rer_basic_block_v2.4} parent=5 // pred_region
        %s1974 = ssub.s32 %s13, 2
        // Predicated region
        $region213: #{rer_basic_block_v2.4} parent=211 // pred_check
          %p1975 = pneg %p145
        $region214: #{rer_basic_block_v2.4} parent=211 // pred_check_branch
          %1977 = sbr.rel (%p1975) target = $region216
        $region215: #{rer_basic_block_v2.4} parent=211 // pred_region
          %s1978 = sand.u32 %s130, 1
          %s1979 = sand.u32 %s130, 1
          %s1980 = smul.addr %s1979, 16
          %s1981 = scalar_lea.vmem [#allocation5], %s1980
        $region216: #{rer_basic_block_v2.4} parent=211 // pred_fallthru
          _
        // Predicated region
        $region217: #{rer_basic_block_v2.4} parent=211 // pred_check
          %p1982 = pneg %p171
        $region218: #{rer_basic_block_v2.4} parent=211 // pred_check_branch
          %1984 = sbr.rel (%p1982) target = $region220
        $region219: #{rer_basic_block_v2.4} parent=211 // pred_region
          %p1985 = scmp.lt.s32.totalorder %s19, 15
          %s1986 = scalar_select %p1985, %s19, 15
          %s1987 = smul.addr %s1986, 8
          %s1988 = scalar_lea.vmem %s5, %s1987
        $region220: #{rer_basic_block_v2.4} parent=211 // pred_fallthru
          _
        // Predicated region
        $region221: #{rer_basic_block_v2.4} parent=211 // pred_check
          %p1989 = pneg %p197
        $region222: #{rer_basic_block_v2.4} parent=211 // pred_check_branch
          %1991 = sbr.rel (%p1989) target = $region224
        $region223: #{rer_basic_block_v2.4} parent=211 // pred_region
          %p1992 = scmp.lt.s32.totalorder %s19, 15
          %s1993 = scalar_select %p1992, %s19, 15
          %s1994 = smul.addr %s1993, 8
          %s1995 = scalar_lea.vmem %s6, %s1994
        $region224: #{rer_basic_block_v2.4} parent=211 // pred_fallthru
          _
      $region212: #{rer_basic_block_v2.4} parent=5 // pred_fallthru
        _
    $region6: #{rer_basic_block_v2.4} parent=1 // loop_footer
      %s17 = sadd.s32 1, %s13
    $region7: #{rer_basic_block_v2.4} parent=1 // loop_footer_branch
      %12 = sbr.rel target = $region3
    $region8: #{rer_basic_block_v2.4} parent=1 // loop_exit
      _

</llo_original>
